<compile_context>
chip_gen: v7x
topology: tpu7x:2x2x1
jax: 0.10.0
libtpu: 0.0.40
codegen_flags: <defaults>
</compile_context>

<pallas_src>
import functools

import jax
import jax.numpy as jnp
import numpy as np
from jax.experimental import pallas as pl
from jax.experimental.pallas import tpu as pltpu


def _residual_block_kernel(x_ref, w_ref, g_ref, bt_ref, mask_ref, alpha_ref,
                           out_ref, *, B, H, W, eps):
    """Fused conv3x3 -> BN -> PReLU -> conv3x3 -> BN -> residual add.

    x_ref    : (C, Np) zero-halo padded lane-dense input, compute dtype
    w_ref    : (9, C, C) conv taps, tap t = ky*3 + kx, compute dtype
    g_ref    : (C, 1) BN gamma (f32)
    bt_ref   : (C, 1) BN beta  (f32)
    mask_ref : (1, Np) f32, 1.0 on interior (non-halo, non-pad) lanes
    alpha_ref: (1, 1) shared PReLU slope (SMEM)
    out_ref  : (C, Np) f32; halo/pad lanes hold don't-care values (discarded
               by the wrapper slice).
    """
    cdt = x_ref.dtype
    Wp = W + 2
    Np = x_ref.shape[1]
    mask = mask_ref[...]                          # (1, Np) f32
    inv_n = 1.0 / float(B * H * W)

    def conv3x3(src):
        # src: (C, Np) compute dtype with zero halo lanes -> (C, Np) f32.
        # Shift of (dy*Wp + dx) stays inside the padded image, so a halo read
        # is the zero pad; no per-tap masks needed.
        acc = None
        for ky in range(3):
            for kx in range(3):
                off = (ky - 1) * Wp + (kx - 1)
                tap = src if off == 0 else pltpu.roll(src, (-off) % Np, 1)
                d = jnp.dot(w_ref[ky * 3 + kx], tap,
                            preferred_element_type=jnp.float32)
                acc = d if acc is None else acc + d
        return acc

    def bn_fold(acc):
        # Mask halo/pad lanes once, then single-pass biased batch statistics.
        ym = acc * mask                                        # (C, Np)
        mean = jnp.sum(ym, axis=1, keepdims=True) * inv_n      # (C, 1)
        ex2 = jnp.sum(ym * ym, axis=1, keepdims=True) * inv_n  # (C, 1)
        var = ex2 - mean * mean
        s = jax.lax.rsqrt(var + eps) * g_ref[...]              # (C, 1)
        t = bt_ref[...] - mean * s                             # (C, 1)
        return ym, s, t

    # ---- stage 1: conv -> BN -> PReLU (halo lanes forced back to zero) ----
    ym, s, t = bn_fold(conv3x3(x_ref[...]))
    y1 = ym * s + t * mask                         # interior: y*s+t ; else 0
    alpha = alpha_ref[0, 0]
    y1 = jnp.where(y1 >= 0.0, y1, alpha * y1)      # prelu(0)==0, halos stay 0
    y1 = y1.astype(cdt)

    # ---- stage 2: conv -> BN -> residual add (halo lanes are discarded) ----
    ym2, s2, t2 = bn_fold(conv3x3(y1))
    y2 = ym2 * s2 + t2
    out_ref[...] = (x_ref[...].astype(jnp.float32) + y2).astype(out_ref.dtype)


def residual_block(x, w, b, gamma, beta, alpha, eps=0.8, *,
                   compute_dtype=jnp.float32):
    """SRGAN ResidualBlock forward (train-mode BN).

    x: (B, C, H, W); w: (C, C, 3, 3); b: (C,) conv bias -- accepted for API
    parity with nn.Conv2d but unused: train-mode BN's mean subtraction cancels
    a constant per-channel bias exactly. gamma/beta: (C,); alpha: (1,).
    compute_dtype: MXU operand dtype (jnp.bfloat16 recommended on v6e/v7x;
    keep float32 on v5e). Accumulation / BN / PReLU math is always float32.
    """
    del b  # cancelled exactly by train-mode BatchNorm
    B, C, H, W = x.shape
    Hp, Wp = H + 2, W + 2
    S = Hp * Wp
    n_raw = B * S
    Np = ((n_raw + 127) // 128) * 128        # lane-dense (multiple-of-128) stores

    # Zero-halo padded, lane-dense activations (C, Np), cast wrapper-side.
    xp = jnp.pad(x, ((0, 0), (0, 0), (1, 1), (1, 1)))           # (B, C, Hp, Wp)
    xf = jnp.transpose(xp, (1, 0, 2, 3)).reshape(C, n_raw)
    xf = jnp.pad(xf, ((0, 0), (0, Np - n_raw))).astype(compute_dtype)
    # TODO(synk): when chaining several residual blocks, keep activations in
    #   this lane-dense layout between blocks instead of NCHW round-trips.

    # Conv taps: w_taps[ky*3+kx, o, i] = w[o, i, ky, kx].
    w_taps = jnp.transpose(w, (2, 3, 0, 1)).reshape(9, C, C).astype(compute_dtype)
    g_c = gamma.astype(jnp.float32).reshape(C, 1)
    bt_c = beta.astype(jnp.float32).reshape(C, 1)
    a_s = alpha.astype(jnp.float32).reshape(1, 1)

    # Interior-lane mask (excludes per-image halo lanes and the lane padding).
    lane = np.arange(Np)
    row = (lane % S) // Wp
    col = lane % Wp
    interior = (lane < n_raw) & (row >= 1) & (row <= H) & (col >= 1) & (col <= W)
    mask = jnp.asarray(interior.astype(np.float32)).reshape(1, Np)

    vmem_spec = pl.BlockSpec(memory_space=pltpu.MemorySpace.VMEM)
    smem_spec = pl.BlockSpec(memory_space=pltpu.MemorySpace.SMEM)

    # Generation-appropriate scoped-VMEM limit (~96 MiB on v5e/v6e, ~48 on v7x).
    try:
        vmem_cap = pltpu.get_tpu_info().vmem_capacity_bytes
    except Exception:
        vmem_cap = 64 * 1024 * 1024
    cparams = pltpu.CompilerParams(vmem_limit_bytes=int(vmem_cap * 3 // 4))

    itemsize = jnp.dtype(compute_dtype).itemsize
    cost = pl.CostEstimate(
        flops=2 * 9 * 2 * C * C * Np + 16 * C * Np,
        transcendentals=2 * C,
        bytes_accessed=C * Np * (itemsize + 4) + 9 * C * C * itemsize + Np * 4)

    out_flat = pl.pallas_call(
        functools.partial(_residual_block_kernel, B=B, H=H, W=W, eps=float(eps)),
        out_shape=jax.ShapeDtypeStruct((C, Np), jnp.float32),
        in_specs=[vmem_spec, vmem_spec, vmem_spec, vmem_spec, vmem_spec,
                  smem_spec],
        out_specs=vmem_spec,
        compiler_params=cparams,
        cost_estimate=cost,
    )(xf, w_taps, g_c, bt_c, mask, a_s)

    out = out_flat[:, :n_raw].reshape(C, B, Hp, Wp)[:, :, 1:H + 1, 1:W + 1]
    return jnp.transpose(out, (1, 0, 2, 3)).astype(x.dtype)


def _reference(x, w, b, gamma, beta, alpha, eps):
    """Pure-JAX reference matching PyTorch ResidualBlock.forward (train-mode BN)."""
    C = x.shape[1]

    def conv(z):
        y = jax.lax.conv_general_dilated(
            z, w, window_strides=(1, 1), padding=((1, 1), (1, 1)),
            dimension_numbers=("NCHW", "OIHW", "NCHW"))
        return y + b.reshape(1, C, 1, 1)

    def bn(z):
        mean = z.mean(axis=(0, 2, 3), keepdims=True)
        var = ((z - mean) ** 2).mean(axis=(0, 2, 3), keepdims=True)
        return ((z - mean) * jax.lax.rsqrt(var + eps)
                * gamma.reshape(1, C, 1, 1) + beta.reshape(1, C, 1, 1))

    y = conv(x)
    y = bn(y)
    y = jnp.where(y >= 0.0, y, alpha[0] * y)
    y = conv(y)
    y = bn(y)
    return x + y


if __name__ == "__main__":
    B, C, H, W = 2, 4, 16, 16
    key = jax.random.PRNGKey(0)
    kx, kw, kb = jax.random.split(key, 3)

    x = jax.random.normal(kx, (B, C, H, W), jnp.float32)

    # Deterministic synthetic parameters (shapes per nn.Conv2d / BatchNorm2d / PReLU)
    fan_in = C * 3 * 3
    bound = 1.0 / np.sqrt(fan_in)
    w = jax.random.uniform(kw, (C, C, 3, 3), jnp.float32, -bound, bound)
    b = jax.random.uniform(kb, (C,), jnp.float32, -bound, bound)
    gamma = jnp.ones((C,), jnp.float32)        # BatchNorm2d weight init
    beta = jnp.zeros((C,), jnp.float32)        # BatchNorm2d bias init
    alpha = jnp.full((1,), 0.25, jnp.float32)  # PReLU default init
    eps = 0.8                                  # nn.BatchNorm2d(in_features, 0.8) -> eps=0.8

    ref = _reference(x, w, b, gamma, beta, alpha, eps)

    # f32 MXU operands (v5e default): tight correctness check.
    out_f32 = jax.block_until_ready(
        residual_block(x, w, b, gamma, beta, alpha, eps=eps,
                       compute_dtype=jnp.float32))
    np.testing.assert_allclose(np.asarray(out_f32), np.asarray(ref),
                               rtol=2e-3, atol=2e-3)

    # bf16 MXU operands (v6e/v7x recommended): loose sanity check vs f32 ref.
    out_bf16 = jax.block_until_ready(
        residual_block(x, w, b, gamma, beta, alpha, eps=eps,
                       compute_dtype=jnp.bfloat16))
    np.testing.assert_allclose(np.asarray(out_bf16), np.asarray(ref),
                               rtol=1e-1, atol=1e-1)

    print("KERNEL_OK")
</pallas_src>

<mosaic_0001>
module attributes {stable_mosaic.version = 11 : i64} {
  func.func @_residual_block_kernel(%arg0: memref<4x768xf32, #tpu.memory_space<vmem>>, %arg1: memref<9x4x4xf32, #tpu.memory_space<vmem>>, %arg2: memref<4x1xf32, #tpu.memory_space<vmem>>, %arg3: memref<4x1xf32, #tpu.memory_space<vmem>>, %arg4: memref<1x768xf32, #tpu.memory_space<vmem>>, %arg5: memref<1x1xf32, #tpu.memory_space<smem>>, %arg6: memref<4x768xf32, #tpu.memory_space<vmem>>) attributes {dimension_semantics = [], scalar_prefetch = 0 : i64, scratch_operands = 0 : i64, tpu.core_type = #tpu.core_type<tc>} {
    %c0 = arith.constant 0 : index
    %c0_0 = arith.constant 0 : index
    %0 = vector.load %arg4[%c0, %c0_0] : memref<1x768xf32, #tpu.memory_space<vmem>>, vector<1x768xf32>
    %c0_1 = arith.constant 0 : index
    %c0_2 = arith.constant 0 : index
    %1 = vector.load %arg0[%c0_1, %c0_2] : memref<4x768xf32, #tpu.memory_space<vmem>>, vector<4x768xf32>
    %c19_i32 = arith.constant 19 : i32
    %2 = tpu.dynamic_rotate %1 by %c19_i32 dim 1 : vector<4x768xf32>, i32 -> vector<4x768xf32>
    %c0_3 = arith.constant 0 : index
    %c0_4 = arith.constant 0 : index
    %c0_5 = arith.constant 0 : index
    %3 = vector.load %arg1[%c0_3, %c0_4, %c0_5] : memref<9x4x4xf32, #tpu.memory_space<vmem>>, vector<1x4x4xf32>
    %4 = vector.shape_cast %3 : vector<1x4x4xf32> to vector<4x4xf32>
    %cst = arith.constant dense<0.000000e+00> : vector<4x768xf32>
    %5 = tpu.matmul %4, %2, %cst {dimension_numbers = #tpu.dot_dimension_numbers<[1], [0], [0], [1], [0, 0, 1, 1], [], []>} : vector<4x4xf32>, vector<4x768xf32>, vector<4x768xf32> -> vector<4x768xf32>
    %c18_i32 = arith.constant 18 : i32
    %6 = tpu.dynamic_rotate %1 by %c18_i32 dim 1 : vector<4x768xf32>, i32 -> vector<4x768xf32>
    %c1 = arith.constant 1 : index
    %c0_6 = arith.constant 0 : index
    %c0_7 = arith.constant 0 : index
    %7 = vector.load %arg1[%c1, %c0_6, %c0_7] : memref<9x4x4xf32, #tpu.memory_space<vmem>>, vector<1x4x4xf32>
    %8 = vector.shape_cast %7 : vector<1x4x4xf32> to vector<4x4xf32>
    %cst_8 = arith.constant dense<0.000000e+00> : vector<4x768xf32>
    %9 = tpu.matmul %8, %6, %cst_8 {dimension_numbers = #tpu.dot_dimension_numbers<[1], [0], [0], [1], [0, 0, 1, 1], [], []>} : vector<4x4xf32>, vector<4x768xf32>, vector<4x768xf32> -> vector<4x768xf32>
    %10 = arith.addf %5, %9 : vector<4x768xf32>
    %c17_i32 = arith.constant 17 : i32
    %11 = tpu.dynamic_rotate %1 by %c17_i32 dim 1 : vector<4x768xf32>, i32 -> vector<4x768xf32>
    %c2 = arith.constant 2 : index
    %c0_9 = arith.constant 0 : index
    %c0_10 = arith.constant 0 : index
    %12 = vector.load %arg1[%c2, %c0_9, %c0_10] : memref<9x4x4xf32, #tpu.memory_space<vmem>>, vector<1x4x4xf32>
    %13 = vector.shape_cast %12 : vector<1x4x4xf32> to vector<4x4xf32>
    %cst_11 = arith.constant dense<0.000000e+00> : vector<4x768xf32>
    %14 = tpu.matmul %13, %11, %cst_11 {dimension_numbers = #tpu.dot_dimension_numbers<[1], [0], [0], [1], [0, 0, 1, 1], [], []>} : vector<4x4xf32>, vector<4x768xf32>, vector<4x768xf32> -> vector<4x768xf32>
    %15 = arith.addf %10, %14 : vector<4x768xf32>
    %c1_i32 = arith.constant 1 : i32
    %16 = tpu.dynamic_rotate %1 by %c1_i32 dim 1 : vector<4x768xf32>, i32 -> vector<4x768xf32>
    %c3 = arith.constant 3 : index
    %c0_12 = arith.constant 0 : index
    %c0_13 = arith.constant 0 : index
    %17 = vector.load %arg1[%c3, %c0_12, %c0_13] : memref<9x4x4xf32, #tpu.memory_space<vmem>>, vector<1x4x4xf32>
    %18 = vector.shape_cast %17 : vector<1x4x4xf32> to vector<4x4xf32>
    %cst_14 = arith.constant dense<0.000000e+00> : vector<4x768xf32>
    %19 = tpu.matmul %18, %16, %cst_14 {dimension_numbers = #tpu.dot_dimension_numbers<[1], [0], [0], [1], [0, 0, 1, 1], [], []>} : vector<4x4xf32>, vector<4x768xf32>, vector<4x768xf32> -> vector<4x768xf32>
    %20 = arith.addf %15, %19 : vector<4x768xf32>
    %c4 = arith.constant 4 : index
    %c0_15 = arith.constant 0 : index
    %c0_16 = arith.constant 0 : index
    %21 = vector.load %arg1[%c4, %c0_15, %c0_16] : memref<9x4x4xf32, #tpu.memory_space<vmem>>, vector<1x4x4xf32>
    %22 = vector.shape_cast %21 : vector<1x4x4xf32> to vector<4x4xf32>
    %cst_17 = arith.constant dense<0.000000e+00> : vector<4x768xf32>
    %23 = tpu.matmul %22, %1, %cst_17 {dimension_numbers = #tpu.dot_dimension_numbers<[1], [0], [0], [1], [0, 0, 1, 1], [], []>} : vector<4x4xf32>, vector<4x768xf32>, vector<4x768xf32> -> vector<4x768xf32>
    %24 = arith.addf %20, %23 : vector<4x768xf32>
    %c767_i32 = arith.constant 767 : i32
    %25 = tpu.dynamic_rotate %1 by %c767_i32 dim 1 : vector<4x768xf32>, i32 -> vector<4x768xf32>
    %c5 = arith.constant 5 : index
    %c0_18 = arith.constant 0 : index
    %c0_19 = arith.constant 0 : index
    %26 = vector.load %arg1[%c5, %c0_18, %c0_19] : memref<9x4x4xf32, #tpu.memory_space<vmem>>, vector<1x4x4xf32>
    %27 = vector.shape_cast %26 : vector<1x4x4xf32> to vector<4x4xf32>
    %cst_20 = arith.constant dense<0.000000e+00> : vector<4x768xf32>
    %28 = tpu.matmul %27, %25, %cst_20 {dimension_numbers = #tpu.dot_dimension_numbers<[1], [0], [0], [1], [0, 0, 1, 1], [], []>} : vector<4x4xf32>, vector<4x768xf32>, vector<4x768xf32> -> vector<4x768xf32>
    %29 = arith.addf %24, %28 : vector<4x768xf32>
    %c751_i32 = arith.constant 751 : i32
    %30 = tpu.dynamic_rotate %1 by %c751_i32 dim 1 : vector<4x768xf32>, i32 -> vector<4x768xf32>
    %c6 = arith.constant 6 : index
    %c0_21 = arith.constant 0 : index
    %c0_22 = arith.constant 0 : index
    %31 = vector.load %arg1[%c6, %c0_21, %c0_22] : memref<9x4x4xf32, #tpu.memory_space<vmem>>, vector<1x4x4xf32>
    %32 = vector.shape_cast %31 : vector<1x4x4xf32> to vector<4x4xf32>
    %cst_23 = arith.constant dense<0.000000e+00> : vector<4x768xf32>
    %33 = tpu.matmul %32, %30, %cst_23 {dimension_numbers = #tpu.dot_dimension_numbers<[1], [0], [0], [1], [0, 0, 1, 1], [], []>} : vector<4x4xf32>, vector<4x768xf32>, vector<4x768xf32> -> vector<4x768xf32>
    %34 = arith.addf %29, %33 : vector<4x768xf32>
    %c750_i32 = arith.constant 750 : i32
    %35 = tpu.dynamic_rotate %1 by %c750_i32 dim 1 : vector<4x768xf32>, i32 -> vector<4x768xf32>
    %c7 = arith.constant 7 : index
    %c0_24 = arith.constant 0 : index
    %c0_25 = arith.constant 0 : index
    %36 = vector.load %arg1[%c7, %c0_24, %c0_25] : memref<9x4x4xf32, #tpu.memory_space<vmem>>, vector<1x4x4xf32>
    %37 = vector.shape_cast %36 : vector<1x4x4xf32> to vector<4x4xf32>
    %cst_26 = arith.constant dense<0.000000e+00> : vector<4x768xf32>
    %38 = tpu.matmul %37, %35, %cst_26 {dimension_numbers = #tpu.dot_dimension_numbers<[1], [0], [0], [1], [0, 0, 1, 1], [], []>} : vector<4x4xf32>, vector<4x768xf32>, vector<4x768xf32> -> vector<4x768xf32>
    %39 = arith.addf %34, %38 : vector<4x768xf32>
    %c749_i32 = arith.constant 749 : i32
    %40 = tpu.dynamic_rotate %1 by %c749_i32 dim 1 : vector<4x768xf32>, i32 -> vector<4x768xf32>
    %c8 = arith.constant 8 : index
    %c0_27 = arith.constant 0 : index
    %c0_28 = arith.constant 0 : index
    %41 = vector.load %arg1[%c8, %c0_27, %c0_28] : memref<9x4x4xf32, #tpu.memory_space<vmem>>, vector<1x4x4xf32>
    %42 = vector.shape_cast %41 : vector<1x4x4xf32> to vector<4x4xf32>
    %cst_29 = arith.constant dense<0.000000e+00> : vector<4x768xf32>
    %43 = tpu.matmul %42, %40, %cst_29 {dimension_numbers = #tpu.dot_dimension_numbers<[1], [0], [0], [1], [0, 0, 1, 1], [], []>} : vector<4x4xf32>, vector<4x768xf32>, vector<4x768xf32> -> vector<4x768xf32>
    %44 = arith.addf %39, %43 : vector<4x768xf32>
    %45 = vector.broadcast %0 : vector<1x768xf32> to vector<4x768xf32>
    %46 = arith.mulf %44, %45 : vector<4x768xf32>
    %cst_30 = arith.constant dense<0.000000e+00> : vector<4xf32>
    %47 = vector.multi_reduction <add>, %46, %cst_30 [1] : vector<4x768xf32> to vector<4xf32>
    %48 = vector.shape_cast %47 : vector<4xf32> to vector<4x1xf32>
    %cst_31 = arith.constant 0.001953125 : f32
    %49 = vector.broadcast %cst_31 : f32 to vector<4x1xf32>
    %50 = arith.mulf %48, %49 : vector<4x1xf32>
    %51 = arith.mulf %46, %46 : vector<4x768xf32>
    %cst_32 = arith.constant dense<0.000000e+00> : vector<4xf32>
    %52 = vector.multi_reduction <add>, %51, %cst_32 [1] : vector<4x768xf32> to vector<4xf32>
    %53 = vector.shape_cast %52 : vector<4xf32> to vector<4x1xf32>
    %cst_33 = arith.constant 0.001953125 : f32
    %54 = vector.broadcast %cst_33 : f32 to vector<4x1xf32>
    %55 = arith.mulf %53, %54 : vector<4x1xf32>
    %56 = arith.mulf %50, %50 : vector<4x1xf32>
    %57 = arith.subf %55, %56 : vector<4x1xf32>
    %cst_34 = arith.constant 8.000000e-01 : f32
    %58 = vector.broadcast %cst_34 : f32 to vector<4x1xf32>
    %59 = arith.addf %57, %58 : vector<4x1xf32>
    %60 = math.rsqrt %59 : vector<4x1xf32>
    %c0_35 = arith.constant 0 : index
    %c0_36 = arith.constant 0 : index
    %61 = vector.load %arg2[%c0_35, %c0_36] : memref<4x1xf32, #tpu.memory_space<vmem>>, vector<4x1xf32>
    %62 = arith.mulf %60, %61 : vector<4x1xf32>
    %c0_37 = arith.constant 0 : index
    %c0_38 = arith.constant 0 : index
    %63 = vector.load %arg3[%c0_37, %c0_38] : memref<4x1xf32, #tpu.memory_space<vmem>>, vector<4x1xf32>
    %64 = arith.mulf %50, %62 : vector<4x1xf32>
    %65 = arith.subf %63, %64 : vector<4x1xf32>
    %66 = vector.broadcast %62 : vector<4x1xf32> to vector<4x768xf32>
    %67 = arith.mulf %46, %66 : vector<4x768xf32>
    %68 = vector.broadcast %65 : vector<4x1xf32> to vector<4x768xf32>
    %69 = vector.broadcast %0 : vector<1x768xf32> to vector<4x768xf32>
    %70 = arith.mulf %68, %69 : vector<4x768xf32>
    %71 = arith.addf %67, %70 : vector<4x768xf32>
    %c0_39 = arith.constant 0 : index
    %c0_40 = arith.constant 0 : index
    %72 = memref.load %arg5[%c0_39, %c0_40] : memref<1x1xf32, #tpu.memory_space<smem>>
    %cst_41 = arith.constant 0.000000e+00 : f32
    %73 = vector.broadcast %cst_41 : f32 to vector<4x768xf32>
    %74 = arith.cmpf oge, %71, %73 : vector<4x768xf32>
    %75 = vector.broadcast %72 : f32 to vector<4x768xf32>
    %76 = arith.mulf %75, %71 : vector<4x768xf32>
    %77 = arith.select %74, %71, %76 : vector<4x768xi1>, vector<4x768xf32>
    %c19_i32_42 = arith.constant 19 : i32
    %78 = tpu.dynamic_rotate %77 by %c19_i32_42 dim 1 : vector<4x768xf32>, i32 -> vector<4x768xf32>
    %c0_43 = arith.constant 0 : index
    %c0_44 = arith.constant 0 : index
    %c0_45 = arith.constant 0 : index
    %79 = vector.load %arg1[%c0_43, %c0_44, %c0_45] : memref<9x4x4xf32, #tpu.memory_space<vmem>>, vector<1x4x4xf32>
    %80 = vector.shape_cast %79 : vector<1x4x4xf32> to vector<4x4xf32>
    %cst_46 = arith.constant dense<0.000000e+00> : vector<4x768xf32>
    %81 = tpu.matmul %80, %78, %cst_46 {dimension_numbers = #tpu.dot_dimension_numbers<[1], [0], [0], [1], [0, 0, 1, 1], [], []>} : vector<4x4xf32>, vector<4x768xf32>, vector<4x768xf32> -> vector<4x768xf32>
    %c18_i32_47 = arith.constant 18 : i32
    %82 = tpu.dynamic_rotate %77 by %c18_i32_47 dim 1 : vector<4x768xf32>, i32 -> vector<4x768xf32>
    %c1_48 = arith.constant 1 : index
    %c0_49 = arith.constant 0 : index
    %c0_50 = arith.constant 0 : index
    %83 = vector.load %arg1[%c1_48, %c0_49, %c0_50] : memref<9x4x4xf32, #tpu.memory_space<vmem>>, vector<1x4x4xf32>
    %84 = vector.shape_cast %83 : vector<1x4x4xf32> to vector<4x4xf32>
    %cst_51 = arith.constant dense<0.000000e+00> : vector<4x768xf32>
    %85 = tpu.matmul %84, %82, %cst_51 {dimension_numbers = #tpu.dot_dimension_numbers<[1], [0], [0], [1], [0, 0, 1, 1], [], []>} : vector<4x4xf32>, vector<4x768xf32>, vector<4x768xf32> -> vector<4x768xf32>
    %86 = arith.addf %81, %85 : vector<4x768xf32>
    %c17_i32_52 = arith.constant 17 : i32
    %87 = tpu.dynamic_rotate %77 by %c17_i32_52 dim 1 : vector<4x768xf32>, i32 -> vector<4x768xf32>
    %c2_53 = arith.constant 2 : index
    %c0_54 = arith.constant 0 : index
    %c0_55 = arith.constant 0 : index
    %88 = vector.load %arg1[%c2_53, %c0_54, %c0_55] : memref<9x4x4xf32, #tpu.memory_space<vmem>>, vector<1x4x4xf32>
    %89 = vector.shape_cast %88 : vector<1x4x4xf32> to vector<4x4xf32>
    %cst_56 = arith.constant dense<0.000000e+00> : vector<4x768xf32>
    %90 = tpu.matmul %89, %87, %cst_56 {dimension_numbers = #tpu.dot_dimension_numbers<[1], [0], [0], [1], [0, 0, 1, 1], [], []>} : vector<4x4xf32>, vector<4x768xf32>, vector<4x768xf32> -> vector<4x768xf32>
    %91 = arith.addf %86, %90 : vector<4x768xf32>
    %c1_i32_57 = arith.constant 1 : i32
    %92 = tpu.dynamic_rotate %77 by %c1_i32_57 dim 1 : vector<4x768xf32>, i32 -> vector<4x768xf32>
    %c3_58 = arith.constant 3 : index
    %c0_59 = arith.constant 0 : index
    %c0_60 = arith.constant 0 : index
    %93 = vector.load %arg1[%c3_58, %c0_59, %c0_60] : memref<9x4x4xf32, #tpu.memory_space<vmem>>, vector<1x4x4xf32>
    %94 = vector.shape_cast %93 : vector<1x4x4xf32> to vector<4x4xf32>
    %cst_61 = arith.constant dense<0.000000e+00> : vector<4x768xf32>
    %95 = tpu.matmul %94, %92, %cst_61 {dimension_numbers = #tpu.dot_dimension_numbers<[1], [0], [0], [1], [0, 0, 1, 1], [], []>} : vector<4x4xf32>, vector<4x768xf32>, vector<4x768xf32> -> vector<4x768xf32>
    %96 = arith.addf %91, %95 : vector<4x768xf32>
    %c4_62 = arith.constant 4 : index
    %c0_63 = arith.constant 0 : index
    %c0_64 = arith.constant 0 : index
    %97 = vector.load %arg1[%c4_62, %c0_63, %c0_64] : memref<9x4x4xf32, #tpu.memory_space<vmem>>, vector<1x4x4xf32>
    %98 = vector.shape_cast %97 : vector<1x4x4xf32> to vector<4x4xf32>
    %cst_65 = arith.constant dense<0.000000e+00> : vector<4x768xf32>
    %99 = tpu.matmul %98, %77, %cst_65 {dimension_numbers = #tpu.dot_dimension_numbers<[1], [0], [0], [1], [0, 0, 1, 1], [], []>} : vector<4x4xf32>, vector<4x768xf32>, vector<4x768xf32> -> vector<4x768xf32>
    %100 = arith.addf %96, %99 : vector<4x768xf32>
    %c767_i32_66 = arith.constant 767 : i32
    %101 = tpu.dynamic_rotate %77 by %c767_i32_66 dim 1 : vector<4x768xf32>, i32 -> vector<4x768xf32>
    %c5_67 = arith.constant 5 : index
    %c0_68 = arith.constant 0 : index
    %c0_69 = arith.constant 0 : index
    %102 = vector.load %arg1[%c5_67, %c0_68, %c0_69] : memref<9x4x4xf32, #tpu.memory_space<vmem>>, vector<1x4x4xf32>
    %103 = vector.shape_cast %102 : vector<1x4x4xf32> to vector<4x4xf32>
    %cst_70 = arith.constant dense<0.000000e+00> : vector<4x768xf32>
    %104 = tpu.matmul %103, %101, %cst_70 {dimension_numbers = #tpu.dot_dimension_numbers<[1], [0], [0], [1], [0, 0, 1, 1], [], []>} : vector<4x4xf32>, vector<4x768xf32>, vector<4x768xf32> -> vector<4x768xf32>
    %105 = arith.addf %100, %104 : vector<4x768xf32>
    %c751_i32_71 = arith.constant 751 : i32
    %106 = tpu.dynamic_rotate %77 by %c751_i32_71 dim 1 : vector<4x768xf32>, i32 -> vector<4x768xf32>
    %c6_72 = arith.constant 6 : index
    %c0_73 = arith.constant 0 : index
    %c0_74 = arith.constant 0 : index
    %107 = vector.load %arg1[%c6_72, %c0_73, %c0_74] : memref<9x4x4xf32, #tpu.memory_space<vmem>>, vector<1x4x4xf32>
    %108 = vector.shape_cast %107 : vector<1x4x4xf32> to vector<4x4xf32>
    %cst_75 = arith.constant dense<0.000000e+00> : vector<4x768xf32>
    %109 = tpu.matmul %108, %106, %cst_75 {dimension_numbers = #tpu.dot_dimension_numbers<[1], [0], [0], [1], [0, 0, 1, 1], [], []>} : vector<4x4xf32>, vector<4x768xf32>, vector<4x768xf32> -> vector<4x768xf32>
    %110 = arith.addf %105, %109 : vector<4x768xf32>
    %c750_i32_76 = arith.constant 750 : i32
    %111 = tpu.dynamic_rotate %77 by %c750_i32_76 dim 1 : vector<4x768xf32>, i32 -> vector<4x768xf32>
    %c7_77 = arith.constant 7 : index
    %c0_78 = arith.constant 0 : index
    %c0_79 = arith.constant 0 : index
    %112 = vector.load %arg1[%c7_77, %c0_78, %c0_79] : memref<9x4x4xf32, #tpu.memory_space<vmem>>, vector<1x4x4xf32>
    %113 = vector.shape_cast %112 : vector<1x4x4xf32> to vector<4x4xf32>
    %cst_80 = arith.constant dense<0.000000e+00> : vector<4x768xf32>
    %114 = tpu.matmul %113, %111, %cst_80 {dimension_numbers = #tpu.dot_dimension_numbers<[1], [0], [0], [1], [0, 0, 1, 1], [], []>} : vector<4x4xf32>, vector<4x768xf32>, vector<4x768xf32> -> vector<4x768xf32>
    %115 = arith.addf %110, %114 : vector<4x768xf32>
    %c749_i32_81 = arith.constant 749 : i32
    %116 = tpu.dynamic_rotate %77 by %c749_i32_81 dim 1 : vector<4x768xf32>, i32 -> vector<4x768xf32>
    %c8_82 = arith.constant 8 : index
    %c0_83 = arith.constant 0 : index
    %c0_84 = arith.constant 0 : index
    %117 = vector.load %arg1[%c8_82, %c0_83, %c0_84] : memref<9x4x4xf32, #tpu.memory_space<vmem>>, vector<1x4x4xf32>
    %118 = vector.shape_cast %117 : vector<1x4x4xf32> to vector<4x4xf32>
    %cst_85 = arith.constant dense<0.000000e+00> : vector<4x768xf32>
    %119 = tpu.matmul %118, %116, %cst_85 {dimension_numbers = #tpu.dot_dimension_numbers<[1], [0], [0], [1], [0, 0, 1, 1], [], []>} : vector<4x4xf32>, vector<4x768xf32>, vector<4x768xf32> -> vector<4x768xf32>
    %120 = arith.addf %115, %119 : vector<4x768xf32>
    %121 = vector.broadcast %0 : vector<1x768xf32> to vector<4x768xf32>
    %122 = arith.mulf %120, %121 : vector<4x768xf32>
    %cst_86 = arith.constant dense<0.000000e+00> : vector<4xf32>
    %123 = vector.multi_reduction <add>, %122, %cst_86 [1] : vector<4x768xf32> to vector<4xf32>
    %124 = vector.shape_cast %123 : vector<4xf32> to vector<4x1xf32>
    %cst_87 = arith.constant 0.001953125 : f32
    %125 = vector.broadcast %cst_87 : f32 to vector<4x1xf32>
    %126 = arith.mulf %124, %125 : vector<4x1xf32>
    %127 = arith.mulf %122, %122 : vector<4x768xf32>
    %cst_88 = arith.constant dense<0.000000e+00> : vector<4xf32>
    %128 = vector.multi_reduction <add>, %127, %cst_88 [1] : vector<4x768xf32> to vector<4xf32>
    %129 = vector.shape_cast %128 : vector<4xf32> to vector<4x1xf32>
    %cst_89 = arith.constant 0.001953125 : f32
    %130 = vector.broadcast %cst_89 : f32 to vector<4x1xf32>
    %131 = arith.mulf %129, %130 : vector<4x1xf32>
    %132 = arith.mulf %126, %126 : vector<4x1xf32>
    %133 = arith.subf %131, %132 : vector<4x1xf32>
    %cst_90 = arith.constant 8.000000e-01 : f32
    %134 = vector.broadcast %cst_90 : f32 to vector<4x1xf32>
    %135 = arith.addf %133, %134 : vector<4x1xf32>
    %136 = math.rsqrt %135 : vector<4x1xf32>
    %c0_91 = arith.constant 0 : index
    %c0_92 = arith.constant 0 : index
    %137 = vector.load %arg2[%c0_91, %c0_92] : memref<4x1xf32, #tpu.memory_space<vmem>>, vector<4x1xf32>
    %138 = arith.mulf %136, %137 : vector<4x1xf32>
    %c0_93 = arith.constant 0 : index
    %c0_94 = arith.constant 0 : index
    %139 = vector.load %arg3[%c0_93, %c0_94] : memref<4x1xf32, #tpu.memory_space<vmem>>, vector<4x1xf32>
    %140 = arith.mulf %126, %138 : vector<4x1xf32>
    %141 = arith.subf %139, %140 : vector<4x1xf32>
    %142 = vector.broadcast %138 : vector<4x1xf32> to vector<4x768xf32>
    %143 = arith.mulf %122, %142 : vector<4x768xf32>
    %144 = vector.broadcast %141 : vector<4x1xf32> to vector<4x768xf32>
    %145 = arith.addf %143, %144 : vector<4x768xf32>
    %c0_95 = arith.constant 0 : index
    %c0_96 = arith.constant 0 : index
    %146 = vector.load %arg0[%c0_95, %c0_96] : memref<4x768xf32, #tpu.memory_space<vmem>>, vector<4x768xf32>
    %147 = arith.addf %146, %145 : vector<4x768xf32>
    %c0_97 = arith.constant 0 : index
    %c0_98 = arith.constant 0 : index
    %148 = vector.load %arg6[%c0_97, %c0_98] : memref<4x768xf32, #tpu.memory_space<vmem>>, vector<4x768xf32>
    tpu.vector_store %arg6[%c0_97, %c0_98], %147 {strides = array<i32>} : memref<4x768xf32, #tpu.memory_space<vmem>>, vector<4x768xf32>,
    return
  }
}

</mosaic_0001>

<llo_original>
// kernel: tpu_custom_call.1
$region0: #{tpu_custom_call.1}
  #allocation0 [shape = 'u32[]', space=smem, size = 0x4, offset = 0x4, fixed_abs, tag = 'smem constant byte address 0x4 - core index']
  #allocation1 [shape = 'u32[144,128]{1,0:T(1,128)}', space=vmem, size = 0x12000, scoped, tag = 'internal scratch']
  #allocation2 [shape = 'f32[1,1]{1,0:T(1,128)S(6)}', space=smem, size = 0x200, scoped, tag = 'scoped memory for tpu_custom_call.1']
  %s0 = inlined_call_operand.vmem [shape: f32[4,768], index: 0, kind: input, shape index: {}]
  %s1 = inlined_call_operand.vmem [shape: f32[9,4,4], index: 1, kind: input, shape index: {}]
  %s2 = inlined_call_operand.vmem [shape: f32[4,1], index: 2, kind: input, shape index: {}]
  %s3 = inlined_call_operand.vmem [shape: f32[4,1], index: 3, kind: input, shape index: {}]
  %s4 = inlined_call_operand.vmem [shape: f32[1,768], index: 4, kind: input, shape index: {}]
  %s5 = inlined_call_operand.<no memory space> [shape: f32[1,1], index: 5, kind: input, shape index: {}]
  %s6 = inlined_call_operand.hbm [shape: f32[4,768], index: 6, kind: output, shape index: {}]
  %s7 = sld [smem:[#allocation0]]
  $region34: #{tpu_custom_call.1} parent=0
    _
  %s9 = ssub.s32 1, %s7
  %s10 = scalar_select 0, %s9, %s7
  %11 = sst [smem:[#allocation2]] %s5
  $region1: #{tpu_custom_call.1} parent=0
    #allocation3 [shape = 'u8[12288]{0}', space=vmem, size = 0x3000, scoped, tag = 'output window, operand 0, single buffered']
    #allocation4 [shape = 's32[1]{0}', space=sflag, size = 0x4, scoped, tag = 'scoped memory for tpu_custom_call.1']
    %12 = vsyncpa [#allocation4], 0
    // Predicated region
    $region2: #{tpu_custom_call.1} parent=1 // pred_check
      _
    $region3: #{tpu_custom_call.1} parent=1 // pred_check_branch
      %14 = sbr.rel (0) target = $region5
    $region4: #{tpu_custom_call.1} parent=1 // pred_region
      _
    $region5: #{tpu_custom_call.1} parent=1 // pred_fallthru
      _
    // Predicated region
    $region6: #{tpu_custom_call.1} parent=1 // pred_check
      _
    $region7: #{tpu_custom_call.1} parent=1 // pred_check_branch
      %16 = sbr.rel (0) target = $region9
    $region8: #{tpu_custom_call.1} parent=1 // pred_region
      _
    $region9: #{tpu_custom_call.1} parent=1 // pred_fallthru
      _
    // Predicated region
    $region10: #{tpu_custom_call.1} parent=1 // pred_check
      _
    $region11: #{tpu_custom_call.1} parent=1 // pred_check_branch
      %18 = sbr.rel (0) target = $region13
    $region12: #{tpu_custom_call.1} parent=1 // pred_region
      _
    $region13: #{tpu_custom_call.1} parent=1 // pred_fallthru
      _
    // Predicated region
    $region14: #{tpu_custom_call.1} parent=1 // pred_check
      _
    $region15: #{tpu_custom_call.1} parent=1 // pred_check_branch
      %20 = sbr.rel (0) target = $region17
    $region16: #{tpu_custom_call.1} parent=1 // pred_region
      _
    $region17: #{tpu_custom_call.1} parent=1 // pred_fallthru
      _
    // Predicated region
    $region18: #{tpu_custom_call.1} parent=1 // pred_check
      _
    $region19: #{tpu_custom_call.1} parent=1 // pred_check_branch
      %22 = sbr.rel (0) target = $region21
    $region20: #{tpu_custom_call.1} parent=1 // pred_region
      _
    $region21: #{tpu_custom_call.1} parent=1 // pred_fallthru
      _
    // Predicated region
    $region22: #{tpu_custom_call.1} parent=1 // pred_check
      _
    $region23: #{tpu_custom_call.1} parent=1 // pred_check_branch
      %24 = sbr.rel (0) target = $region25
    $region24: #{tpu_custom_call.1} parent=1 // pred_region
      _
    $region25: #{tpu_custom_call.1} parent=1 // pred_fallthru
      _
    %v25 = vld [vmem:[%s4] sm:$0x3f]
    %v26 = vld [vmem:[%s0] sm:$0xff]
    %v27 = vld [vmem:[%s0 + $0x8] sm:$0xff]
    %v28 = vld [vmem:[%s0 + $0x10] sm:$0xff]
    %v32 = vcombine.high %v26, %v26
    %v33 = vcombine.high %v27, %v27
    %v34 = vcombine.high %v28, %v28
    %38 = vrot.lane.b32.xlu0 %v26, 19
    %v39 = vpop.permute.xlu0 %38
    %40 = vrot.lane.b32.xlu0 %v32, 19
    %v41 = vpop.permute.xlu0 %40
    %42 = vrot.lane.b32.xlu0 %v27, 19
    %v43 = vpop.permute.xlu0 %42
    %44 = vrot.lane.b32.xlu0 %v33, 19
    %v45 = vpop.permute.xlu0 %44
    %46 = vrot.lane.b32.xlu0 %v28, 19
    %v47 = vpop.permute.xlu0 %46
    %48 = vrot.lane.b32.xlu0 %v34, 19
    %v49 = vpop.permute.xlu0 %48
    %v50 = vlaneseq
    %v51 = vand.u32 %v50, 127
    %vm52 = vcmp.lt.s32.totalorder %v51, 19
    %v53 = vsel %vm52, %v47, %v49
    %v54 = vsel %vm52, %v45, %v47
    %v55 = vsel %vm52, %v43, %v45
    %v56 = vsel %vm52, %v41, %v43
    %v57 = vsel %vm52, %v39, %v41
    %v58 = vsel %vm52, %v49, %v39
    %v59 = vld [vmem:[%s1] sm:$0xf]
    %60 = vrot.lane.b32.xlu0 %v26, 18
    %v61 = vpop.permute.xlu0 %60
    %62 = vrot.lane.b32.xlu0 %v32, 18
    %v63 = vpop.permute.xlu0 %62
    %64 = vrot.lane.b32.xlu0 %v27, 18
    %v65 = vpop.permute.xlu0 %64
    %66 = vrot.lane.b32.xlu0 %v33, 18
    %v67 = vpop.permute.xlu0 %66
    %68 = vrot.lane.b32.xlu0 %v28, 18
    %v69 = vpop.permute.xlu0 %68
    %70 = vrot.lane.b32.xlu0 %v34, 18
    %v71 = vpop.permute.xlu0 %70
    %vm72 = vcmp.lt.s32.totalorder %v51, 18
    %v73 = vsel %vm72, %v69, %v71
    %v74 = vsel %vm72, %v67, %v69
    %v75 = vsel %vm72, %v65, %v67
    %v76 = vsel %vm72, %v63, %v65
    %v77 = vsel %vm72, %v61, %v63
    %v78 = vsel %vm72, %v71, %v61
    %s79 = scalar_lea.vmem %s1, 4
    %v80 = vld [vmem:[%s79] sm:$0xf]
    %vm81 = vcmask 31744
    %v83 = vsel %vm81, %v80, 0
    %vm85 = vcmask 1043456
    %v87 = vsel %vm85, %v78, 0
    %v90 = vsel %vm85, %v77, 0
    %v93 = vsel %vm85, %v76, 0
    %v96 = vsel %vm85, %v75, 0
    %v99 = vsel %vm85, %v74, 0
    %v102 = vsel %vm85, %v73, 0
    %104 = vmatprep.subr.mxu0 %v90
    %105 = vmatpush1.msra.mxu0 %v87
    %106 = vmatprep.subr.mxu0 0.0
    %107 = vmatpush1.msra.mxu0 0.0
    %108 = vmatprep.subr.mxu0 0.0
    %109 = vmatpush1.msra.mxu0 0.0
    %110 = vmatprep.subr.mxu0 0.0
    %111 = vmatpush1.msra.mxu0 0.0
    %112 = vmatprep.subr.mxu0 0.0
    %113 = vmatpush1.msra.mxu0 0.0
    %114 = vmatprep.subr.mxu0 0.0
    %115 = vmatpush1.msra.mxu0 0.0
    %116 = vmatprep.subr.mxu0 0.0
    %117 = vmatpush1.msra.mxu0 0.0
    %118 = vmatprep.subr.mxu0 0.0
    %119 = vmatpush1.msra.mxu0 0.0
    %120 = vmatprep.subr.mxu0 0.0
    %121 = vmatpush1.msra.mxu0 0.0
    %122 = vmatprep.subr.mxu0 0.0
    %123 = vmatpush1.msra.mxu0 0.0
    %124 = vmatprep.subr.mxu0 0.0
    %125 = vmatpush1.msra.mxu0 0.0
    %126 = vmatprep.subr.mxu0 0.0
    %127 = vmatpush1.msra.mxu0 0.0
    %128 = vmatprep.subr.mxu0 0.0
    %129 = vmatpush1.msra.mxu0 0.0
    %130 = vmatprep.subr.mxu0 0.0
    %131 = vmatpush1.msra.mxu0 0.0
    %132 = vmatprep.subr.mxu0 0.0
    %133 = vmatpush1.msra.mxu0 0.0
    %134 = vmatprep.subr.mxu0 0.0
    %135 = vmatpush1.msra.mxu0 0.0
    %136 = vmatprep.subr.mxu0 0.0
    %137 = vmatpush1.msra.mxu0 0.0
    %138 = vmatprep.subr.mxu0 0.0
    %139 = vmatpush1.msra.mxu0 0.0
    %140 = vmatprep.subr.mxu0 0.0
    %141 = vmatpush1.msra.mxu0 0.0
    %142 = vmatprep.subr.mxu0 0.0
    %143 = vmatpush1.msra.mxu0 0.0
    %144 = vmatprep.subr.mxu0 0.0
    %145 = vmatpush1.msra.mxu0 0.0
    %146 = vmatprep.subr.mxu0 0.0
    %147 = vmatpush1.msra.mxu0 0.0
    %148 = vmatprep.subr.mxu0 0.0
    %149 = vmatpush1.msra.mxu0 0.0
    %150 = vmatprep.subr.mxu0 0.0
    %151 = vmatpush1.msra.mxu0 0.0
    %152 = vmatprep.subr.mxu0 0.0
    %153 = vmatpush1.msra.mxu0 0.0
    %154 = vmatprep.subr.mxu0 0.0
    %155 = vmatpush1.msra.mxu0 0.0
    %156 = vmatprep.subr.mxu0 0.0
    %157 = vmatpush1.msra.mxu0 0.0
    %158 = vmatprep.subr.mxu0 0.0
    %159 = vmatpush1.msra.mxu0 0.0
    %160 = vmatprep.subr.mxu0 0.0
    %161 = vmatpush1.msra.mxu0 0.0
    %162 = vmatprep.subr.mxu0 0.0
    %163 = vmatpush1.msra.mxu0 0.0
    %164 = vmatprep.subr.mxu0 0.0
    %165 = vmatpush1.msra.mxu0 0.0
    %166 = vmatprep.subr.mxu0 0.0
    %167 = vmatpush1.msra.mxu0 0.0
    %168 = vmatprep.mubr.f32.mxu0 0.0
    %169 = vmatmul.mubr.f32.gmra.mrb[0].mxu0 %v83
    %v170 = vpop.f32.mrb[0].mxu0
    %v171 = vadd.f32 0.0, %v170
    %v172 = vpop.f32.mrb[0].mxu0
    %v173 = vadd.f32 0.0, %v172
    %174 = vdwg.mxu0
    %175 = vmatprep.subr.mxu0 %v96
    %176 = vmatpush1.msra.mxu0 %v93
    %177 = vmatprep.subr.mxu0 0.0
    %178 = vmatpush1.msra.mxu0 0.0
    %179 = vmatprep.subr.mxu0 0.0
    %180 = vmatpush1.msra.mxu0 0.0
    %181 = vmatprep.subr.mxu0 0.0
    %182 = vmatpush1.msra.mxu0 0.0
    %183 = vmatprep.subr.mxu0 0.0
    %184 = vmatpush1.msra.mxu0 0.0
    %185 = vmatprep.subr.mxu0 0.0
    %186 = vmatpush1.msra.mxu0 0.0
    %187 = vmatprep.subr.mxu0 0.0
    %188 = vmatpush1.msra.mxu0 0.0
    %189 = vmatprep.subr.mxu0 0.0
    %190 = vmatpush1.msra.mxu0 0.0
    %191 = vmatprep.subr.mxu0 0.0
    %192 = vmatpush1.msra.mxu0 0.0
    %193 = vmatprep.subr.mxu0 0.0
    %194 = vmatpush1.msra.mxu0 0.0
    %195 = vmatprep.subr.mxu0 0.0
    %196 = vmatpush1.msra.mxu0 0.0
    %197 = vmatprep.subr.mxu0 0.0
    %198 = vmatpush1.msra.mxu0 0.0
    %199 = vmatprep.subr.mxu0 0.0
    %200 = vmatpush1.msra.mxu0 0.0
    %201 = vmatprep.subr.mxu0 0.0
    %202 = vmatpush1.msra.mxu0 0.0
    %203 = vmatprep.subr.mxu0 0.0
    %204 = vmatpush1.msra.mxu0 0.0
    %205 = vmatprep.subr.mxu0 0.0
    %206 = vmatpush1.msra.mxu0 0.0
    %207 = vmatprep.subr.mxu0 0.0
    %208 = vmatpush1.msra.mxu0 0.0
    %209 = vmatprep.subr.mxu0 0.0
    %210 = vmatpush1.msra.mxu0 0.0
    %211 = vmatprep.subr.mxu0 0.0
    %212 = vmatpush1.msra.mxu0 0.0
    %213 = vmatprep.subr.mxu0 0.0
    %214 = vmatpush1.msra.mxu0 0.0
    %215 = vmatprep.subr.mxu0 0.0
    %216 = vmatpush1.msra.mxu0 0.0
    %217 = vmatprep.subr.mxu0 0.0
    %218 = vmatpush1.msra.mxu0 0.0
    %219 = vmatprep.subr.mxu0 0.0
    %220 = vmatpush1.msra.mxu0 0.0
    %221 = vmatprep.subr.mxu0 0.0
    %222 = vmatpush1.msra.mxu0 0.0
    %223 = vmatprep.subr.mxu0 0.0
    %224 = vmatpush1.msra.mxu0 0.0
    %225 = vmatprep.subr.mxu0 0.0
    %226 = vmatpush1.msra.mxu0 0.0
    %227 = vmatprep.subr.mxu0 0.0
    %228 = vmatpush1.msra.mxu0 0.0
    %229 = vmatprep.subr.mxu0 0.0
    %230 = vmatpush1.msra.mxu0 0.0
    %231 = vmatprep.subr.mxu0 0.0
    %232 = vmatpush1.msra.mxu0 0.0
    %233 = vmatprep.subr.mxu0 0.0
    %234 = vmatpush1.msra.mxu0 0.0
    %235 = vmatprep.subr.mxu0 0.0
    %236 = vmatpush1.msra.mxu0 0.0
    %237 = vmatprep.subr.mxu0 0.0
    %238 = vmatpush1.msra.mxu0 0.0
    %239 = vmatprep.mubr.f32.mxu0 0.0
    %240 = vmatmul.mubr.f32.gmra.mrb[0].mxu0 %v83
    %v241 = vpop.f32.mrb[0].mxu0
    %v242 = vadd.f32 0.0, %v241
    %v243 = vpop.f32.mrb[0].mxu0
    %v244 = vadd.f32 0.0, %v243
    %245 = vdwg.mxu0
    %246 = vmatprep.subr.mxu0 %v102
    %247 = vmatpush1.msra.mxu0 %v99
    %248 = vmatprep.subr.mxu0 0.0
    %249 = vmatpush1.msra.mxu0 0.0
    %250 = vmatprep.subr.mxu0 0.0
    %251 = vmatpush1.msra.mxu0 0.0
    %252 = vmatprep.subr.mxu0 0.0
    %253 = vmatpush1.msra.mxu0 0.0
    %254 = vmatprep.subr.mxu0 0.0
    %255 = vmatpush1.msra.mxu0 0.0
    %256 = vmatprep.subr.mxu0 0.0
    %257 = vmatpush1.msra.mxu0 0.0
    %258 = vmatprep.subr.mxu0 0.0
    %259 = vmatpush1.msra.mxu0 0.0
    %260 = vmatprep.subr.mxu0 0.0
    %261 = vmatpush1.msra.mxu0 0.0
    %262 = vmatprep.subr.mxu0 0.0
    %263 = vmatpush1.msra.mxu0 0.0
    %264 = vmatprep.subr.mxu0 0.0
    %265 = vmatpush1.msra.mxu0 0.0
    %266 = vmatprep.subr.mxu0 0.0
    %267 = vmatpush1.msra.mxu0 0.0
    %268 = vmatprep.subr.mxu0 0.0
    %269 = vmatpush1.msra.mxu0 0.0
    %270 = vmatprep.subr.mxu0 0.0
    %271 = vmatpush1.msra.mxu0 0.0
    %272 = vmatprep.subr.mxu0 0.0
    %273 = vmatpush1.msra.mxu0 0.0
    %274 = vmatprep.subr.mxu0 0.0
    %275 = vmatpush1.msra.mxu0 0.0
    %276 = vmatprep.subr.mxu0 0.0
    %277 = vmatpush1.msra.mxu0 0.0
    %278 = vmatprep.subr.mxu0 0.0
    %279 = vmatpush1.msra.mxu0 0.0
    %280 = vmatprep.subr.mxu0 0.0
    %281 = vmatpush1.msra.mxu0 0.0
    %282 = vmatprep.subr.mxu0 0.0
    %283 = vmatpush1.msra.mxu0 0.0
    %284 = vmatprep.subr.mxu0 0.0
    %285 = vmatpush1.msra.mxu0 0.0
    %286 = vmatprep.subr.mxu0 0.0
    %287 = vmatpush1.msra.mxu0 0.0
    %288 = vmatprep.subr.mxu0 0.0
    %289 = vmatpush1.msra.mxu0 0.0
    %290 = vmatprep.subr.mxu0 0.0
    %291 = vmatpush1.msra.mxu0 0.0
    %292 = vmatprep.subr.mxu0 0.0
    %293 = vmatpush1.msra.mxu0 0.0
    %294 = vmatprep.subr.mxu0 0.0
    %295 = vmatpush1.msra.mxu0 0.0
    %296 = vmatprep.subr.mxu0 0.0
    %297 = vmatpush1.msra.mxu0 0.0
    %298 = vmatprep.subr.mxu0 0.0
    %299 = vmatpush1.msra.mxu0 0.0
    %300 = vmatprep.subr.mxu0 0.0
    %301 = vmatpush1.msra.mxu0 0.0
    %302 = vmatprep.subr.mxu0 0.0
    %303 = vmatpush1.msra.mxu0 0.0
    %304 = vmatprep.subr.mxu0 0.0
    %305 = vmatpush1.msra.mxu0 0.0
    %306 = vmatprep.subr.mxu0 0.0
    %307 = vmatpush1.msra.mxu0 0.0
    %308 = vmatprep.subr.mxu0 0.0
    %309 = vmatpush1.msra.mxu0 0.0
    %310 = vmatprep.mubr.f32.mxu0 0.0
    %311 = vmatmul.mubr.f32.gmra.mrb[0].mxu0 %v83
    %v312 = vpop.f32.mrb[0].mxu0
    %v313 = vadd.f32 0.0, %v312
    %v314 = vpop.f32.mrb[0].mxu0
    %v315 = vadd.f32 0.0, %v314
    %316 = vdwg.mxu0
    %v318 = vsel %vm81, %v59, 0
    %v321 = vsel %vm85, %v58, 0
    %v324 = vsel %vm85, %v57, 0
    %v327 = vsel %vm85, %v56, 0
    %v330 = vsel %vm85, %v55, 0
    %v333 = vsel %vm85, %v54, 0
    %v336 = vsel %vm85, %v53, 0
    %338 = vmatprep.subr.mxu0 %v324
    %339 = vmatpush1.msra.mxu0 %v321
    %340 = vmatprep.subr.mxu0 0.0
    %341 = vmatpush1.msra.mxu0 0.0
    %342 = vmatprep.subr.mxu0 0.0
    %343 = vmatpush1.msra.mxu0 0.0
    %344 = vmatprep.subr.mxu0 0.0
    %345 = vmatpush1.msra.mxu0 0.0
    %346 = vmatprep.subr.mxu0 0.0
    %347 = vmatpush1.msra.mxu0 0.0
    %348 = vmatprep.subr.mxu0 0.0
    %349 = vmatpush1.msra.mxu0 0.0
    %350 = vmatprep.subr.mxu0 0.0
    %351 = vmatpush1.msra.mxu0 0.0
    %352 = vmatprep.subr.mxu0 0.0
    %353 = vmatpush1.msra.mxu0 0.0
    %354 = vmatprep.subr.mxu0 0.0
    %355 = vmatpush1.msra.mxu0 0.0
    %356 = vmatprep.subr.mxu0 0.0
    %357 = vmatpush1.msra.mxu0 0.0
    %358 = vmatprep.subr.mxu0 0.0
    %359 = vmatpush1.msra.mxu0 0.0
    %360 = vmatprep.subr.mxu0 0.0
    %361 = vmatpush1.msra.mxu0 0.0
    %362 = vmatprep.subr.mxu0 0.0
    %363 = vmatpush1.msra.mxu0 0.0
    %364 = vmatprep.subr.mxu0 0.0
    %365 = vmatpush1.msra.mxu0 0.0
    %366 = vmatprep.subr.mxu0 0.0
    %367 = vmatpush1.msra.mxu0 0.0
    %368 = vmatprep.subr.mxu0 0.0
    %369 = vmatpush1.msra.mxu0 0.0
    %370 = vmatprep.subr.mxu0 0.0
    %371 = vmatpush1.msra.mxu0 0.0
    %372 = vmatprep.subr.mxu0 0.0
    %373 = vmatpush1.msra.mxu0 0.0
    %374 = vmatprep.subr.mxu0 0.0
    %375 = vmatpush1.msra.mxu0 0.0
    %376 = vmatprep.subr.mxu0 0.0
    %377 = vmatpush1.msra.mxu0 0.0
    %378 = vmatprep.subr.mxu0 0.0
    %379 = vmatpush1.msra.mxu0 0.0
    %380 = vmatprep.subr.mxu0 0.0
    %381 = vmatpush1.msra.mxu0 0.0
    %382 = vmatprep.subr.mxu0 0.0
    %383 = vmatpush1.msra.mxu0 0.0
    %384 = vmatprep.subr.mxu0 0.0
    %385 = vmatpush1.msra.mxu0 0.0
    %386 = vmatprep.subr.mxu0 0.0
    %387 = vmatpush1.msra.mxu0 0.0
    %388 = vmatprep.subr.mxu0 0.0
    %389 = vmatpush1.msra.mxu0 0.0
    %390 = vmatprep.subr.mxu0 0.0
    %391 = vmatpush1.msra.mxu0 0.0
    %392 = vmatprep.subr.mxu0 0.0
    %393 = vmatpush1.msra.mxu0 0.0
    %394 = vmatprep.subr.mxu0 0.0
    %395 = vmatpush1.msra.mxu0 0.0
    %396 = vmatprep.subr.mxu0 0.0
    %397 = vmatpush1.msra.mxu0 0.0
    %398 = vmatprep.subr.mxu0 0.0
    %399 = vmatpush1.msra.mxu0 0.0
    %400 = vmatprep.subr.mxu0 0.0
    %401 = vmatpush1.msra.mxu0 0.0
    %402 = vmatprep.mubr.f32.mxu0 0.0
    %403 = vmatmul.mubr.f32.gmra.mrb[0].mxu0 %v318
    %v404 = vpop.f32.mrb[0].mxu0
    %v405 = vadd.f32 %v171, %v404
    %v406 = vpop.f32.mrb[0].mxu0
    %v407 = vadd.f32 %v173, %v406
    %408 = vdwg.mxu0
    %409 = vmatprep.subr.mxu0 %v330
    %410 = vmatpush1.msra.mxu0 %v327
    %411 = vmatprep.subr.mxu0 0.0
    %412 = vmatpush1.msra.mxu0 0.0
    %413 = vmatprep.subr.mxu0 0.0
    %414 = vmatpush1.msra.mxu0 0.0
    %415 = vmatprep.subr.mxu0 0.0
    %416 = vmatpush1.msra.mxu0 0.0
    %417 = vmatprep.subr.mxu0 0.0
    %418 = vmatpush1.msra.mxu0 0.0
    %419 = vmatprep.subr.mxu0 0.0
    %420 = vmatpush1.msra.mxu0 0.0
    %421 = vmatprep.subr.mxu0 0.0
    %422 = vmatpush1.msra.mxu0 0.0
    %423 = vmatprep.subr.mxu0 0.0
    %424 = vmatpush1.msra.mxu0 0.0
    %425 = vmatprep.subr.mxu0 0.0
    %426 = vmatpush1.msra.mxu0 0.0
    %427 = vmatprep.subr.mxu0 0.0
    %428 = vmatpush1.msra.mxu0 0.0
    %429 = vmatprep.subr.mxu0 0.0
    %430 = vmatpush1.msra.mxu0 0.0
    %431 = vmatprep.subr.mxu0 0.0
    %432 = vmatpush1.msra.mxu0 0.0
    %433 = vmatprep.subr.mxu0 0.0
    %434 = vmatpush1.msra.mxu0 0.0
    %435 = vmatprep.subr.mxu0 0.0
    %436 = vmatpush1.msra.mxu0 0.0
    %437 = vmatprep.subr.mxu0 0.0
    %438 = vmatpush1.msra.mxu0 0.0
    %439 = vmatprep.subr.mxu0 0.0
    %440 = vmatpush1.msra.mxu0 0.0
    %441 = vmatprep.subr.mxu0 0.0
    %442 = vmatpush1.msra.mxu0 0.0
    %443 = vmatprep.subr.mxu0 0.0
    %444 = vmatpush1.msra.mxu0 0.0
    %445 = vmatprep.subr.mxu0 0.0
    %446 = vmatpush1.msra.mxu0 0.0
    %447 = vmatprep.subr.mxu0 0.0
    %448 = vmatpush1.msra.mxu0 0.0
    %449 = vmatprep.subr.mxu0 0.0
    %450 = vmatpush1.msra.mxu0 0.0
    %451 = vmatprep.subr.mxu0 0.0
    %452 = vmatpush1.msra.mxu0 0.0
    %453 = vmatprep.subr.mxu0 0.0
    %454 = vmatpush1.msra.mxu0 0.0
    %455 = vmatprep.subr.mxu0 0.0
    %456 = vmatpush1.msra.mxu0 0.0
    %457 = vmatprep.subr.mxu0 0.0
    %458 = vmatpush1.msra.mxu0 0.0
    %459 = vmatprep.subr.mxu0 0.0
    %460 = vmatpush1.msra.mxu0 0.0
    %461 = vmatprep.subr.mxu0 0.0
    %462 = vmatpush1.msra.mxu0 0.0
    %463 = vmatprep.subr.mxu0 0.0
    %464 = vmatpush1.msra.mxu0 0.0
    %465 = vmatprep.subr.mxu0 0.0
    %466 = vmatpush1.msra.mxu0 0.0
    %467 = vmatprep.subr.mxu0 0.0
    %468 = vmatpush1.msra.mxu0 0.0
    %469 = vmatprep.subr.mxu0 0.0
    %470 = vmatpush1.msra.mxu0 0.0
    %471 = vmatprep.subr.mxu0 0.0
    %472 = vmatpush1.msra.mxu0 0.0
    %473 = vmatprep.mubr.f32.mxu0 0.0
    %474 = vmatmul.mubr.f32.gmra.mrb[0].mxu0 %v318
    %v475 = vpop.f32.mrb[0].mxu0
    %v476 = vadd.f32 %v242, %v475
    %v477 = vpop.f32.mrb[0].mxu0
    %v478 = vadd.f32 %v244, %v477
    %479 = vdwg.mxu0
    %480 = vmatprep.subr.mxu0 %v336
    %481 = vmatpush1.msra.mxu0 %v333
    %482 = vmatprep.subr.mxu0 0.0
    %483 = vmatpush1.msra.mxu0 0.0
    %484 = vmatprep.subr.mxu0 0.0
    %485 = vmatpush1.msra.mxu0 0.0
    %486 = vmatprep.subr.mxu0 0.0
    %487 = vmatpush1.msra.mxu0 0.0
    %488 = vmatprep.subr.mxu0 0.0
    %489 = vmatpush1.msra.mxu0 0.0
    %490 = vmatprep.subr.mxu0 0.0
    %491 = vmatpush1.msra.mxu0 0.0
    %492 = vmatprep.subr.mxu0 0.0
    %493 = vmatpush1.msra.mxu0 0.0
    %494 = vmatprep.subr.mxu0 0.0
    %495 = vmatpush1.msra.mxu0 0.0
    %496 = vmatprep.subr.mxu0 0.0
    %497 = vmatpush1.msra.mxu0 0.0
    %498 = vmatprep.subr.mxu0 0.0
    %499 = vmatpush1.msra.mxu0 0.0
    %500 = vmatprep.subr.mxu0 0.0
    %501 = vmatpush1.msra.mxu0 0.0
    %502 = vmatprep.subr.mxu0 0.0
    %503 = vmatpush1.msra.mxu0 0.0
    %504 = vmatprep.subr.mxu0 0.0
    %505 = vmatpush1.msra.mxu0 0.0
    %506 = vmatprep.subr.mxu0 0.0
    %507 = vmatpush1.msra.mxu0 0.0
    %508 = vmatprep.subr.mxu0 0.0
    %509 = vmatpush1.msra.mxu0 0.0
    %510 = vmatprep.subr.mxu0 0.0
    %511 = vmatpush1.msra.mxu0 0.0
    %512 = vmatprep.subr.mxu0 0.0
    %513 = vmatpush1.msra.mxu0 0.0
    %514 = vmatprep.subr.mxu0 0.0
    %515 = vmatpush1.msra.mxu0 0.0
    %516 = vmatprep.subr.mxu0 0.0
    %517 = vmatpush1.msra.mxu0 0.0
    %518 = vmatprep.subr.mxu0 0.0
    %519 = vmatpush1.msra.mxu0 0.0
    %520 = vmatprep.subr.mxu0 0.0
    %521 = vmatpush1.msra.mxu0 0.0
    %522 = vmatprep.subr.mxu0 0.0
    %523 = vmatpush1.msra.mxu0 0.0
    %524 = vmatprep.subr.mxu0 0.0
    %525 = vmatpush1.msra.mxu0 0.0
    %526 = vmatprep.subr.mxu0 0.0
    %527 = vmatpush1.msra.mxu0 0.0
    %528 = vmatprep.subr.mxu0 0.0
    %529 = vmatpush1.msra.mxu0 0.0
    %530 = vmatprep.subr.mxu0 0.0
    %531 = vmatpush1.msra.mxu0 0.0
    %532 = vmatprep.subr.mxu0 0.0
    %533 = vmatpush1.msra.mxu0 0.0
    %534 = vmatprep.subr.mxu0 0.0
    %535 = vmatpush1.msra.mxu0 0.0
    %536 = vmatprep.subr.mxu0 0.0
    %537 = vmatpush1.msra.mxu0 0.0
    %538 = vmatprep.subr.mxu0 0.0
    %539 = vmatpush1.msra.mxu0 0.0
    %540 = vmatprep.subr.mxu0 0.0
    %541 = vmatpush1.msra.mxu0 0.0
    %542 = vmatprep.subr.mxu0 0.0
    %543 = vmatpush1.msra.mxu0 0.0
    %544 = vmatprep.mubr.f32.mxu0 0.0
    %545 = vmatmul.mubr.f32.gmra.mrb[0].mxu0 %v318
    %v546 = vpop.f32.mrb[0].mxu0
    %v547 = vadd.f32 %v313, %v546
    %v548 = vpop.f32.mrb[0].mxu0
    %v549 = vadd.f32 %v315, %v548
    %550 = vdwg.mxu0
    %551 = vrot.lane.b32.xlu0 %v26, 17
    %v552 = vpop.permute.xlu0 %551
    %553 = vrot.lane.b32.xlu0 %v32, 17
    %v554 = vpop.permute.xlu0 %553
    %555 = vrot.lane.b32.xlu0 %v27, 17
    %v556 = vpop.permute.xlu0 %555
    %557 = vrot.lane.b32.xlu0 %v33, 17
    %v558 = vpop.permute.xlu0 %557
    %559 = vrot.lane.b32.xlu0 %v28, 17
    %v560 = vpop.permute.xlu0 %559
    %561 = vrot.lane.b32.xlu0 %v34, 17
    %v562 = vpop.permute.xlu0 %561
    %vm563 = vcmp.lt.s32.totalorder %v51, 17
    %v564 = vsel %vm563, %v560, %v562
    %v565 = vsel %vm563, %v558, %v560
    %v566 = vsel %vm563, %v556, %v558
    %v567 = vsel %vm563, %v554, %v556
    %v568 = vsel %vm563, %v552, %v554
    %v569 = vsel %vm563, %v562, %v552
    %s570 = scalar_lea.vmem %s1, 8
    %v571 = vld [vmem:[%s570] sm:$0xf]
    %v573 = vsel %vm81, %v571, 0
    %v576 = vsel %vm85, %v569, 0
    %v579 = vsel %vm85, %v568, 0
    %v582 = vsel %vm85, %v567, 0
    %v585 = vsel %vm85, %v566, 0
    %v588 = vsel %vm85, %v565, 0
    %v591 = vsel %vm85, %v564, 0
    %593 = vmatprep.subr.mxu0 %v579
    %594 = vmatpush1.msra.mxu0 %v576
    %595 = vmatprep.subr.mxu0 0.0
    %596 = vmatpush1.msra.mxu0 0.0
    %597 = vmatprep.subr.mxu0 0.0
    %598 = vmatpush1.msra.mxu0 0.0
    %599 = vmatprep.subr.mxu0 0.0
    %600 = vmatpush1.msra.mxu0 0.0
    %601 = vmatprep.subr.mxu0 0.0
    %602 = vmatpush1.msra.mxu0 0.0
    %603 = vmatprep.subr.mxu0 0.0
    %604 = vmatpush1.msra.mxu0 0.0
    %605 = vmatprep.subr.mxu0 0.0
    %606 = vmatpush1.msra.mxu0 0.0
    %607 = vmatprep.subr.mxu0 0.0
    %608 = vmatpush1.msra.mxu0 0.0
    %609 = vmatprep.subr.mxu0 0.0
    %610 = vmatpush1.msra.mxu0 0.0
    %611 = vmatprep.subr.mxu0 0.0
    %612 = vmatpush1.msra.mxu0 0.0
    %613 = vmatprep.subr.mxu0 0.0
    %614 = vmatpush1.msra.mxu0 0.0
    %615 = vmatprep.subr.mxu0 0.0
    %616 = vmatpush1.msra.mxu0 0.0
    %617 = vmatprep.subr.mxu0 0.0
    %618 = vmatpush1.msra.mxu0 0.0
    %619 = vmatprep.subr.mxu0 0.0
    %620 = vmatpush1.msra.mxu0 0.0
    %621 = vmatprep.subr.mxu0 0.0
    %622 = vmatpush1.msra.mxu0 0.0
    %623 = vmatprep.subr.mxu0 0.0
    %624 = vmatpush1.msra.mxu0 0.0
    %625 = vmatprep.subr.mxu0 0.0
    %626 = vmatpush1.msra.mxu0 0.0
    %627 = vmatprep.subr.mxu0 0.0
    %628 = vmatpush1.msra.mxu0 0.0
    %629 = vmatprep.subr.mxu0 0.0
    %630 = vmatpush1.msra.mxu0 0.0
    %631 = vmatprep.subr.mxu0 0.0
    %632 = vmatpush1.msra.mxu0 0.0
    %633 = vmatprep.subr.mxu0 0.0
    %634 = vmatpush1.msra.mxu0 0.0
    %635 = vmatprep.subr.mxu0 0.0
    %636 = vmatpush1.msra.mxu0 0.0
    %637 = vmatprep.subr.mxu0 0.0
    %638 = vmatpush1.msra.mxu0 0.0
    %639 = vmatprep.subr.mxu0 0.0
    %640 = vmatpush1.msra.mxu0 0.0
    %641 = vmatprep.subr.mxu0 0.0
    %642 = vmatpush1.msra.mxu0 0.0
    %643 = vmatprep.subr.mxu0 0.0
    %644 = vmatpush1.msra.mxu0 0.0
    %645 = vmatprep.subr.mxu0 0.0
    %646 = vmatpush1.msra.mxu0 0.0
    %647 = vmatprep.subr.mxu0 0.0
    %648 = vmatpush1.msra.mxu0 0.0
    %649 = vmatprep.subr.mxu0 0.0
    %650 = vmatpush1.msra.mxu0 0.0
    %651 = vmatprep.subr.mxu0 0.0
    %652 = vmatpush1.msra.mxu0 0.0
    %653 = vmatprep.subr.mxu0 0.0
    %654 = vmatpush1.msra.mxu0 0.0
    %655 = vmatprep.subr.mxu0 0.0
    %656 = vmatpush1.msra.mxu0 0.0
    %657 = vmatprep.mubr.f32.mxu0 0.0
    %658 = vmatmul.mubr.f32.gmra.mrb[0].mxu0 %v573
    %v659 = vpop.f32.mrb[0].mxu0
    %v660 = vadd.f32 0.0, %v659
    %v661 = vpop.f32.mrb[0].mxu0
    %v662 = vadd.f32 0.0, %v661
    %663 = vdwg.mxu0
    %664 = vmatprep.subr.mxu0 %v585
    %665 = vmatpush1.msra.mxu0 %v582
    %666 = vmatprep.subr.mxu0 0.0
    %667 = vmatpush1.msra.mxu0 0.0
    %668 = vmatprep.subr.mxu0 0.0
    %669 = vmatpush1.msra.mxu0 0.0
    %670 = vmatprep.subr.mxu0 0.0
    %671 = vmatpush1.msra.mxu0 0.0
    %672 = vmatprep.subr.mxu0 0.0
    %673 = vmatpush1.msra.mxu0 0.0
    %674 = vmatprep.subr.mxu0 0.0
    %675 = vmatpush1.msra.mxu0 0.0
    %676 = vmatprep.subr.mxu0 0.0
    %677 = vmatpush1.msra.mxu0 0.0
    %678 = vmatprep.subr.mxu0 0.0
    %679 = vmatpush1.msra.mxu0 0.0
    %680 = vmatprep.subr.mxu0 0.0
    %681 = vmatpush1.msra.mxu0 0.0
    %682 = vmatprep.subr.mxu0 0.0
    %683 = vmatpush1.msra.mxu0 0.0
    %684 = vmatprep.subr.mxu0 0.0
    %685 = vmatpush1.msra.mxu0 0.0
    %686 = vmatprep.subr.mxu0 0.0
    %687 = vmatpush1.msra.mxu0 0.0
    %688 = vmatprep.subr.mxu0 0.0
    %689 = vmatpush1.msra.mxu0 0.0
    %690 = vmatprep.subr.mxu0 0.0
    %691 = vmatpush1.msra.mxu0 0.0
    %692 = vmatprep.subr.mxu0 0.0
    %693 = vmatpush1.msra.mxu0 0.0
    %694 = vmatprep.subr.mxu0 0.0
    %695 = vmatpush1.msra.mxu0 0.0
    %696 = vmatprep.subr.mxu0 0.0
    %697 = vmatpush1.msra.mxu0 0.0
    %698 = vmatprep.subr.mxu0 0.0
    %699 = vmatpush1.msra.mxu0 0.0
    %700 = vmatprep.subr.mxu0 0.0
    %701 = vmatpush1.msra.mxu0 0.0
    %702 = vmatprep.subr.mxu0 0.0
    %703 = vmatpush1.msra.mxu0 0.0
    %704 = vmatprep.subr.mxu0 0.0
    %705 = vmatpush1.msra.mxu0 0.0
    %706 = vmatprep.subr.mxu0 0.0
    %707 = vmatpush1.msra.mxu0 0.0
    %708 = vmatprep.subr.mxu0 0.0
    %709 = vmatpush1.msra.mxu0 0.0
    %710 = vmatprep.subr.mxu0 0.0
    %711 = vmatpush1.msra.mxu0 0.0
    %712 = vmatprep.subr.mxu0 0.0
    %713 = vmatpush1.msra.mxu0 0.0
    %714 = vmatprep.subr.mxu0 0.0
    %715 = vmatpush1.msra.mxu0 0.0
    %716 = vmatprep.subr.mxu0 0.0
    %717 = vmatpush1.msra.mxu0 0.0
    %718 = vmatprep.subr.mxu0 0.0
    %719 = vmatpush1.msra.mxu0 0.0
    %720 = vmatprep.subr.mxu0 0.0
    %721 = vmatpush1.msra.mxu0 0.0
    %722 = vmatprep.subr.mxu0 0.0
    %723 = vmatpush1.msra.mxu0 0.0
    %724 = vmatprep.subr.mxu0 0.0
    %725 = vmatpush1.msra.mxu0 0.0
    %726 = vmatprep.subr.mxu0 0.0
    %727 = vmatpush1.msra.mxu0 0.0
    %728 = vmatprep.mubr.f32.mxu0 0.0
    %729 = vmatmul.mubr.f32.gmra.mrb[0].mxu0 %v573
    %v730 = vpop.f32.mrb[0].mxu0
    %v731 = vadd.f32 0.0, %v730
    %v732 = vpop.f32.mrb[0].mxu0
    %v733 = vadd.f32 0.0, %v732
    %734 = vdwg.mxu0
    %735 = vmatprep.subr.mxu0 %v591
    %736 = vmatpush1.msra.mxu0 %v588
    %737 = vmatprep.subr.mxu0 0.0
    %738 = vmatpush1.msra.mxu0 0.0
    %739 = vmatprep.subr.mxu0 0.0
    %740 = vmatpush1.msra.mxu0 0.0
    %741 = vmatprep.subr.mxu0 0.0
    %742 = vmatpush1.msra.mxu0 0.0
    %743 = vmatprep.subr.mxu0 0.0
    %744 = vmatpush1.msra.mxu0 0.0
    %745 = vmatprep.subr.mxu0 0.0
    %746 = vmatpush1.msra.mxu0 0.0
    %747 = vmatprep.subr.mxu0 0.0
    %748 = vmatpush1.msra.mxu0 0.0
    %749 = vmatprep.subr.mxu0 0.0
    %750 = vmatpush1.msra.mxu0 0.0
    %751 = vmatprep.subr.mxu0 0.0
    %752 = vmatpush1.msra.mxu0 0.0
    %753 = vmatprep.subr.mxu0 0.0
    %754 = vmatpush1.msra.mxu0 0.0
    %755 = vmatprep.subr.mxu0 0.0
    %756 = vmatpush1.msra.mxu0 0.0
    %757 = vmatprep.subr.mxu0 0.0
    %758 = vmatpush1.msra.mxu0 0.0
    %759 = vmatprep.subr.mxu0 0.0
    %760 = vmatpush1.msra.mxu0 0.0
    %761 = vmatprep.subr.mxu0 0.0
    %762 = vmatpush1.msra.mxu0 0.0
    %763 = vmatprep.subr.mxu0 0.0
    %764 = vmatpush1.msra.mxu0 0.0
    %765 = vmatprep.subr.mxu0 0.0
    %766 = vmatpush1.msra.mxu0 0.0
    %767 = vmatprep.subr.mxu0 0.0
    %768 = vmatpush1.msra.mxu0 0.0
    %769 = vmatprep.subr.mxu0 0.0
    %770 = vmatpush1.msra.mxu0 0.0
    %771 = vmatprep.subr.mxu0 0.0
    %772 = vmatpush1.msra.mxu0 0.0
    %773 = vmatprep.subr.mxu0 0.0
    %774 = vmatpush1.msra.mxu0 0.0
    %775 = vmatprep.subr.mxu0 0.0
    %776 = vmatpush1.msra.mxu0 0.0
    %777 = vmatprep.subr.mxu0 0.0
    %778 = vmatpush1.msra.mxu0 0.0
    %779 = vmatprep.subr.mxu0 0.0
    %780 = vmatpush1.msra.mxu0 0.0
    %781 = vmatprep.subr.mxu0 0.0
    %782 = vmatpush1.msra.mxu0 0.0
    %783 = vmatprep.subr.mxu0 0.0
    %784 = vmatpush1.msra.mxu0 0.0
    %785 = vmatprep.subr.mxu0 0.0
    %786 = vmatpush1.msra.mxu0 0.0
    %787 = vmatprep.subr.mxu0 0.0
    %788 = vmatpush1.msra.mxu0 0.0
    %789 = vmatprep.subr.mxu0 0.0
    %790 = vmatpush1.msra.mxu0 0.0
    %791 = vmatprep.subr.mxu0 0.0
    %792 = vmatpush1.msra.mxu0 0.0
    %793 = vmatprep.subr.mxu0 0.0
    %794 = vmatpush1.msra.mxu0 0.0
    %795 = vmatprep.subr.mxu0 0.0
    %796 = vmatpush1.msra.mxu0 0.0
    %797 = vmatprep.subr.mxu0 0.0
    %798 = vmatpush1.msra.mxu0 0.0
    %799 = vmatprep.mubr.f32.mxu0 0.0
    %800 = vmatmul.mubr.f32.gmra.mrb[0].mxu0 %v573
    %v801 = vpop.f32.mrb[0].mxu0
    %v802 = vadd.f32 0.0, %v801
    %v803 = vpop.f32.mrb[0].mxu0
    %v804 = vadd.f32 0.0, %v803
    %805 = vdwg.mxu0
    %v806 = vadd.f32 %v405, %v660
    %v807 = vadd.f32 %v407, %v662
    %v808 = vadd.f32 %v476, %v731
    %v809 = vadd.f32 %v478, %v733
    %v810 = vadd.f32 %v547, %v802
    %v811 = vadd.f32 %v549, %v804
    %812 = vrot.lane.b32.xlu0 %v26, 1
    %v813 = vpop.permute.xlu0 %812
    %814 = vrot.lane.b32.xlu0 %v32, 1
    %v815 = vpop.permute.xlu0 %814
    %816 = vrot.lane.b32.xlu0 %v27, 1
    %v817 = vpop.permute.xlu0 %816
    %818 = vrot.lane.b32.xlu0 %v33, 1
    %v819 = vpop.permute.xlu0 %818
    %820 = vrot.lane.b32.xlu0 %v28, 1
    %v821 = vpop.permute.xlu0 %820
    %822 = vrot.lane.b32.xlu0 %v34, 1
    %v823 = vpop.permute.xlu0 %822
    %vm824 = vcmp.lt.s32.totalorder %v51, 1
    %v825 = vsel %vm824, %v821, %v823
    %v826 = vsel %vm824, %v819, %v821
    %v827 = vsel %vm824, %v817, %v819
    %v828 = vsel %vm824, %v815, %v817
    %v829 = vsel %vm824, %v813, %v815
    %v830 = vsel %vm824, %v823, %v813
    %s831 = scalar_lea.vmem %s1, 12
    %v832 = vld [vmem:[%s831] sm:$0xf]
    %v834 = vsel %vm81, %v832, 0
    %v837 = vsel %vm85, %v830, 0
    %v840 = vsel %vm85, %v829, 0
    %v843 = vsel %vm85, %v828, 0
    %v846 = vsel %vm85, %v827, 0
    %v849 = vsel %vm85, %v826, 0
    %v852 = vsel %vm85, %v825, 0
    %854 = vmatprep.subr.mxu0 %v840
    %855 = vmatpush1.msra.mxu0 %v837
    %856 = vmatprep.subr.mxu0 0.0
    %857 = vmatpush1.msra.mxu0 0.0
    %858 = vmatprep.subr.mxu0 0.0
    %859 = vmatpush1.msra.mxu0 0.0
    %860 = vmatprep.subr.mxu0 0.0
    %861 = vmatpush1.msra.mxu0 0.0
    %862 = vmatprep.subr.mxu0 0.0
    %863 = vmatpush1.msra.mxu0 0.0
    %864 = vmatprep.subr.mxu0 0.0
    %865 = vmatpush1.msra.mxu0 0.0
    %866 = vmatprep.subr.mxu0 0.0
    %867 = vmatpush1.msra.mxu0 0.0
    %868 = vmatprep.subr.mxu0 0.0
    %869 = vmatpush1.msra.mxu0 0.0
    %870 = vmatprep.subr.mxu0 0.0
    %871 = vmatpush1.msra.mxu0 0.0
    %872 = vmatprep.subr.mxu0 0.0
    %873 = vmatpush1.msra.mxu0 0.0
    %874 = vmatprep.subr.mxu0 0.0
    %875 = vmatpush1.msra.mxu0 0.0
    %876 = vmatprep.subr.mxu0 0.0
    %877 = vmatpush1.msra.mxu0 0.0
    %878 = vmatprep.subr.mxu0 0.0
    %879 = vmatpush1.msra.mxu0 0.0
    %880 = vmatprep.subr.mxu0 0.0
    %881 = vmatpush1.msra.mxu0 0.0
    %882 = vmatprep.subr.mxu0 0.0
    %883 = vmatpush1.msra.mxu0 0.0
    %884 = vmatprep.subr.mxu0 0.0
    %885 = vmatpush1.msra.mxu0 0.0
    %886 = vmatprep.subr.mxu0 0.0
    %887 = vmatpush1.msra.mxu0 0.0
    %888 = vmatprep.subr.mxu0 0.0
    %889 = vmatpush1.msra.mxu0 0.0
    %890 = vmatprep.subr.mxu0 0.0
    %891 = vmatpush1.msra.mxu0 0.0
    %892 = vmatprep.subr.mxu0 0.0
    %893 = vmatpush1.msra.mxu0 0.0
    %894 = vmatprep.subr.mxu0 0.0
    %895 = vmatpush1.msra.mxu0 0.0
    %896 = vmatprep.subr.mxu0 0.0
    %897 = vmatpush1.msra.mxu0 0.0
    %898 = vmatprep.subr.mxu0 0.0
    %899 = vmatpush1.msra.mxu0 0.0
    %900 = vmatprep.subr.mxu0 0.0
    %901 = vmatpush1.msra.mxu0 0.0
    %902 = vmatprep.subr.mxu0 0.0
    %903 = vmatpush1.msra.mxu0 0.0
    %904 = vmatprep.subr.mxu0 0.0
    %905 = vmatpush1.msra.mxu0 0.0
    %906 = vmatprep.subr.mxu0 0.0
    %907 = vmatpush1.msra.mxu0 0.0
    %908 = vmatprep.subr.mxu0 0.0
    %909 = vmatpush1.msra.mxu0 0.0
    %910 = vmatprep.subr.mxu0 0.0
    %911 = vmatpush1.msra.mxu0 0.0
    %912 = vmatprep.subr.mxu0 0.0
    %913 = vmatpush1.msra.mxu0 0.0
    %914 = vmatprep.subr.mxu0 0.0
    %915 = vmatpush1.msra.mxu0 0.0
    %916 = vmatprep.subr.mxu0 0.0
    %917 = vmatpush1.msra.mxu0 0.0
    %918 = vmatprep.mubr.f32.mxu0 0.0
    %919 = vmatmul.mubr.f32.gmra.mrb[0].mxu0 %v834
    %v920 = vpop.f32.mrb[0].mxu0
    %v921 = vadd.f32 0.0, %v920
    %v922 = vpop.f32.mrb[0].mxu0
    %v923 = vadd.f32 0.0, %v922
    %924 = vdwg.mxu0
    %925 = vmatprep.subr.mxu0 %v846
    %926 = vmatpush1.msra.mxu0 %v843
    %927 = vmatprep.subr.mxu0 0.0
    %928 = vmatpush1.msra.mxu0 0.0
    %929 = vmatprep.subr.mxu0 0.0
    %930 = vmatpush1.msra.mxu0 0.0
    %931 = vmatprep.subr.mxu0 0.0
    %932 = vmatpush1.msra.mxu0 0.0
    %933 = vmatprep.subr.mxu0 0.0
    %934 = vmatpush1.msra.mxu0 0.0
    %935 = vmatprep.subr.mxu0 0.0
    %936 = vmatpush1.msra.mxu0 0.0
    %937 = vmatprep.subr.mxu0 0.0
    %938 = vmatpush1.msra.mxu0 0.0
    %939 = vmatprep.subr.mxu0 0.0
    %940 = vmatpush1.msra.mxu0 0.0
    %941 = vmatprep.subr.mxu0 0.0
    %942 = vmatpush1.msra.mxu0 0.0
    %943 = vmatprep.subr.mxu0 0.0
    %944 = vmatpush1.msra.mxu0 0.0
    %945 = vmatprep.subr.mxu0 0.0
    %946 = vmatpush1.msra.mxu0 0.0
    %947 = vmatprep.subr.mxu0 0.0
    %948 = vmatpush1.msra.mxu0 0.0
    %949 = vmatprep.subr.mxu0 0.0
    %950 = vmatpush1.msra.mxu0 0.0
    %951 = vmatprep.subr.mxu0 0.0
    %952 = vmatpush1.msra.mxu0 0.0
    %953 = vmatprep.subr.mxu0 0.0
    %954 = vmatpush1.msra.mxu0 0.0
    %955 = vmatprep.subr.mxu0 0.0
    %956 = vmatpush1.msra.mxu0 0.0
    %957 = vmatprep.subr.mxu0 0.0
    %958 = vmatpush1.msra.mxu0 0.0
    %959 = vmatprep.subr.mxu0 0.0
    %960 = vmatpush1.msra.mxu0 0.0
    %961 = vmatprep.subr.mxu0 0.0
    %962 = vmatpush1.msra.mxu0 0.0
    %963 = vmatprep.subr.mxu0 0.0
    %964 = vmatpush1.msra.mxu0 0.0
    %965 = vmatprep.subr.mxu0 0.0
    %966 = vmatpush1.msra.mxu0 0.0
    %967 = vmatprep.subr.mxu0 0.0
    %968 = vmatpush1.msra.mxu0 0.0
    %969 = vmatprep.subr.mxu0 0.0
    %970 = vmatpush1.msra.mxu0 0.0
    %971 = vmatprep.subr.mxu0 0.0
    %972 = vmatpush1.msra.mxu0 0.0
    %973 = vmatprep.subr.mxu0 0.0
    %974 = vmatpush1.msra.mxu0 0.0
    %975 = vmatprep.subr.mxu0 0.0
    %976 = vmatpush1.msra.mxu0 0.0
    %977 = vmatprep.subr.mxu0 0.0
    %978 = vmatpush1.msra.mxu0 0.0
    %979 = vmatprep.subr.mxu0 0.0
    %980 = vmatpush1.msra.mxu0 0.0
    %981 = vmatprep.subr.mxu0 0.0
    %982 = vmatpush1.msra.mxu0 0.0
    %983 = vmatprep.subr.mxu0 0.0
    %984 = vmatpush1.msra.mxu0 0.0
    %985 = vmatprep.subr.mxu0 0.0
    %986 = vmatpush1.msra.mxu0 0.0
    %987 = vmatprep.subr.mxu0 0.0
    %988 = vmatpush1.msra.mxu0 0.0
    %989 = vmatprep.mubr.f32.mxu0 0.0
    %990 = vmatmul.mubr.f32.gmra.mrb[0].mxu0 %v834
    %v991 = vpop.f32.mrb[0].mxu0
    %v992 = vadd.f32 0.0, %v991
    %v993 = vpop.f32.mrb[0].mxu0
    %v994 = vadd.f32 0.0, %v993
    %995 = vdwg.mxu0
    %996 = vmatprep.subr.mxu0 %v852
    %997 = vmatpush1.msra.mxu0 %v849
    %998 = vmatprep.subr.mxu0 0.0
    %999 = vmatpush1.msra.mxu0 0.0
    %1000 = vmatprep.subr.mxu0 0.0
    %1001 = vmatpush1.msra.mxu0 0.0
    %1002 = vmatprep.subr.mxu0 0.0
    %1003 = vmatpush1.msra.mxu0 0.0
    %1004 = vmatprep.subr.mxu0 0.0
    %1005 = vmatpush1.msra.mxu0 0.0
    %1006 = vmatprep.subr.mxu0 0.0
    %1007 = vmatpush1.msra.mxu0 0.0
    %1008 = vmatprep.subr.mxu0 0.0
    %1009 = vmatpush1.msra.mxu0 0.0
    %1010 = vmatprep.subr.mxu0 0.0
    %1011 = vmatpush1.msra.mxu0 0.0
    %1012 = vmatprep.subr.mxu0 0.0
    %1013 = vmatpush1.msra.mxu0 0.0
    %1014 = vmatprep.subr.mxu0 0.0
    %1015 = vmatpush1.msra.mxu0 0.0
    %1016 = vmatprep.subr.mxu0 0.0
    %1017 = vmatpush1.msra.mxu0 0.0
    %1018 = vmatprep.subr.mxu0 0.0
    %1019 = vmatpush1.msra.mxu0 0.0
    %1020 = vmatprep.subr.mxu0 0.0
    %1021 = vmatpush1.msra.mxu0 0.0
    %1022 = vmatprep.subr.mxu0 0.0
    %1023 = vmatpush1.msra.mxu0 0.0
    %1024 = vmatprep.subr.mxu0 0.0
    %1025 = vmatpush1.msra.mxu0 0.0
    %1026 = vmatprep.subr.mxu0 0.0
    %1027 = vmatpush1.msra.mxu0 0.0
    %1028 = vmatprep.subr.mxu0 0.0
    %1029 = vmatpush1.msra.mxu0 0.0
    %1030 = vmatprep.subr.mxu0 0.0
    %1031 = vmatpush1.msra.mxu0 0.0
    %1032 = vmatprep.subr.mxu0 0.0
    %1033 = vmatpush1.msra.mxu0 0.0
    %1034 = vmatprep.subr.mxu0 0.0
    %1035 = vmatpush1.msra.mxu0 0.0
    %1036 = vmatprep.subr.mxu0 0.0
    %1037 = vmatpush1.msra.mxu0 0.0
    %1038 = vmatprep.subr.mxu0 0.0
    %1039 = vmatpush1.msra.mxu0 0.0
    %1040 = vmatprep.subr.mxu0 0.0
    %1041 = vmatpush1.msra.mxu0 0.0
    %1042 = vmatprep.subr.mxu0 0.0
    %1043 = vmatpush1.msra.mxu0 0.0
    %1044 = vmatprep.subr.mxu0 0.0
    %1045 = vmatpush1.msra.mxu0 0.0
    %1046 = vmatprep.subr.mxu0 0.0
    %1047 = vmatpush1.msra.mxu0 0.0
    %1048 = vmatprep.subr.mxu0 0.0
    %1049 = vmatpush1.msra.mxu0 0.0
    %1050 = vmatprep.subr.mxu0 0.0
    %1051 = vmatpush1.msra.mxu0 0.0
    %1052 = vmatprep.subr.mxu0 0.0
    %1053 = vmatpush1.msra.mxu0 0.0
    %1054 = vmatprep.subr.mxu0 0.0
    %1055 = vmatpush1.msra.mxu0 0.0
    %1056 = vmatprep.subr.mxu0 0.0
    %1057 = vmatpush1.msra.mxu0 0.0
    %1058 = vmatprep.subr.mxu0 0.0
    %1059 = vmatpush1.msra.mxu0 0.0
    %1060 = vmatprep.mubr.f32.mxu0 0.0
    %1061 = vmatmul.mubr.f32.gmra.mrb[0].mxu0 %v834
    %v1062 = vpop.f32.mrb[0].mxu0
    %v1063 = vadd.f32 0.0, %v1062
    %v1064 = vpop.f32.mrb[0].mxu0
    %v1065 = vadd.f32 0.0, %v1064
    %1066 = vdwg.mxu0
    %v1067 = vadd.f32 %v806, %v921
    %v1068 = vadd.f32 %v807, %v923
    %v1069 = vadd.f32 %v808, %v992
    %v1070 = vadd.f32 %v809, %v994
    %v1071 = vadd.f32 %v810, %v1063
    %v1072 = vadd.f32 %v811, %v1065
    %s1073 = scalar_lea.vmem %s1, 16
    %v1074 = vld [vmem:[%s1073] sm:$0xf]
    %v1076 = vsel %vm81, %v1074, 0
    %v1078 = vsel %vm85, %v26, 0
    %v1080 = vsel %vm85, %v32, 0
    %v1082 = vsel %vm85, %v27, 0
    %v1084 = vsel %vm85, %v33, 0
    %v1086 = vsel %vm85, %v28, 0
    %v1088 = vsel %vm85, %v34, 0
    %1090 = vmatprep.subr.mxu0 %v1080
    %1091 = vmatpush1.msra.mxu0 %v1078
    %1092 = vmatprep.subr.mxu0 0.0
    %1093 = vmatpush1.msra.mxu0 0.0
    %1094 = vmatprep.subr.mxu0 0.0
    %1095 = vmatpush1.msra.mxu0 0.0
    %1096 = vmatprep.subr.mxu0 0.0
    %1097 = vmatpush1.msra.mxu0 0.0
    %1098 = vmatprep.subr.mxu0 0.0
    %1099 = vmatpush1.msra.mxu0 0.0
    %1100 = vmatprep.subr.mxu0 0.0
    %1101 = vmatpush1.msra.mxu0 0.0
    %1102 = vmatprep.subr.mxu0 0.0
    %1103 = vmatpush1.msra.mxu0 0.0
    %1104 = vmatprep.subr.mxu0 0.0
    %1105 = vmatpush1.msra.mxu0 0.0
    %1106 = vmatprep.subr.mxu0 0.0
    %1107 = vmatpush1.msra.mxu0 0.0
    %1108 = vmatprep.subr.mxu0 0.0
    %1109 = vmatpush1.msra.mxu0 0.0
    %1110 = vmatprep.subr.mxu0 0.0
    %1111 = vmatpush1.msra.mxu0 0.0
    %1112 = vmatprep.subr.mxu0 0.0
    %1113 = vmatpush1.msra.mxu0 0.0
    %1114 = vmatprep.subr.mxu0 0.0
    %1115 = vmatpush1.msra.mxu0 0.0
    %1116 = vmatprep.subr.mxu0 0.0
    %1117 = vmatpush1.msra.mxu0 0.0
    %1118 = vmatprep.subr.mxu0 0.0
    %1119 = vmatpush1.msra.mxu0 0.0
    %1120 = vmatprep.subr.mxu0 0.0
    %1121 = vmatpush1.msra.mxu0 0.0
    %1122 = vmatprep.subr.mxu0 0.0
    %1123 = vmatpush1.msra.mxu0 0.0
    %1124 = vmatprep.subr.mxu0 0.0
    %1125 = vmatpush1.msra.mxu0 0.0
    %1126 = vmatprep.subr.mxu0 0.0
    %1127 = vmatpush1.msra.mxu0 0.0
    %1128 = vmatprep.subr.mxu0 0.0
    %1129 = vmatpush1.msra.mxu0 0.0
    %1130 = vmatprep.subr.mxu0 0.0
    %1131 = vmatpush1.msra.mxu0 0.0
    %1132 = vmatprep.subr.mxu0 0.0
    %1133 = vmatpush1.msra.mxu0 0.0
    %1134 = vmatprep.subr.mxu0 0.0
    %1135 = vmatpush1.msra.mxu0 0.0
    %1136 = vmatprep.subr.mxu0 0.0
    %1137 = vmatpush1.msra.mxu0 0.0
    %1138 = vmatprep.subr.mxu0 0.0
    %1139 = vmatpush1.msra.mxu0 0.0
    %1140 = vmatprep.subr.mxu0 0.0
    %1141 = vmatpush1.msra.mxu0 0.0
    %1142 = vmatprep.subr.mxu0 0.0
    %1143 = vmatpush1.msra.mxu0 0.0
    %1144 = vmatprep.subr.mxu0 0.0
    %1145 = vmatpush1.msra.mxu0 0.0
    %1146 = vmatprep.subr.mxu0 0.0
    %1147 = vmatpush1.msra.mxu0 0.0
    %1148 = vmatprep.subr.mxu0 0.0
    %1149 = vmatpush1.msra.mxu0 0.0
    %1150 = vmatprep.subr.mxu0 0.0
    %1151 = vmatpush1.msra.mxu0 0.0
    %1152 = vmatprep.subr.mxu0 0.0
    %1153 = vmatpush1.msra.mxu0 0.0
    %1154 = vmatprep.mubr.f32.mxu0 0.0
    %1155 = vmatmul.mubr.f32.gmra.mrb[0].mxu0 %v1076
    %v1156 = vpop.f32.mrb[0].mxu0
    %v1157 = vadd.f32 0.0, %v1156
    %v1158 = vpop.f32.mrb[0].mxu0
    %v1159 = vadd.f32 0.0, %v1158
    %1160 = vdwg.mxu0
    %1161 = vmatprep.subr.mxu0 %v1084
    %1162 = vmatpush1.msra.mxu0 %v1082
    %1163 = vmatprep.subr.mxu0 0.0
    %1164 = vmatpush1.msra.mxu0 0.0
    %1165 = vmatprep.subr.mxu0 0.0
    %1166 = vmatpush1.msra.mxu0 0.0
    %1167 = vmatprep.subr.mxu0 0.0
    %1168 = vmatpush1.msra.mxu0 0.0
    %1169 = vmatprep.subr.mxu0 0.0
    %1170 = vmatpush1.msra.mxu0 0.0
    %1171 = vmatprep.subr.mxu0 0.0
    %1172 = vmatpush1.msra.mxu0 0.0
    %1173 = vmatprep.subr.mxu0 0.0
    %1174 = vmatpush1.msra.mxu0 0.0
    %1175 = vmatprep.subr.mxu0 0.0
    %1176 = vmatpush1.msra.mxu0 0.0
    %1177 = vmatprep.subr.mxu0 0.0
    %1178 = vmatpush1.msra.mxu0 0.0
    %1179 = vmatprep.subr.mxu0 0.0
    %1180 = vmatpush1.msra.mxu0 0.0
    %1181 = vmatprep.subr.mxu0 0.0
    %1182 = vmatpush1.msra.mxu0 0.0
    %1183 = vmatprep.subr.mxu0 0.0
    %1184 = vmatpush1.msra.mxu0 0.0
    %1185 = vmatprep.subr.mxu0 0.0
    %1186 = vmatpush1.msra.mxu0 0.0
    %1187 = vmatprep.subr.mxu0 0.0
    %1188 = vmatpush1.msra.mxu0 0.0
    %1189 = vmatprep.subr.mxu0 0.0
    %1190 = vmatpush1.msra.mxu0 0.0
    %1191 = vmatprep.subr.mxu0 0.0
    %1192 = vmatpush1.msra.mxu0 0.0
    %1193 = vmatprep.subr.mxu0 0.0
    %1194 = vmatpush1.msra.mxu0 0.0
    %1195 = vmatprep.subr.mxu0 0.0
    %1196 = vmatpush1.msra.mxu0 0.0
    %1197 = vmatprep.subr.mxu0 0.0
    %1198 = vmatpush1.msra.mxu0 0.0
    %1199 = vmatprep.subr.mxu0 0.0
    %1200 = vmatpush1.msra.mxu0 0.0
    %1201 = vmatprep.subr.mxu0 0.0
    %1202 = vmatpush1.msra.mxu0 0.0
    %1203 = vmatprep.subr.mxu0 0.0
    %1204 = vmatpush1.msra.mxu0 0.0
    %1205 = vmatprep.subr.mxu0 0.0
    %1206 = vmatpush1.msra.mxu0 0.0
    %1207 = vmatprep.subr.mxu0 0.0
    %1208 = vmatpush1.msra.mxu0 0.0
    %1209 = vmatprep.subr.mxu0 0.0
    %1210 = vmatpush1.msra.mxu0 0.0
    %1211 = vmatprep.subr.mxu0 0.0
    %1212 = vmatpush1.msra.mxu0 0.0
    %1213 = vmatprep.subr.mxu0 0.0
    %1214 = vmatpush1.msra.mxu0 0.0
    %1215 = vmatprep.subr.mxu0 0.0
    %1216 = vmatpush1.msra.mxu0 0.0
    %1217 = vmatprep.subr.mxu0 0.0
    %1218 = vmatpush1.msra.mxu0 0.0
    %1219 = vmatprep.subr.mxu0 0.0
    %1220 = vmatpush1.msra.mxu0 0.0
    %1221 = vmatprep.subr.mxu0 0.0
    %1222 = vmatpush1.msra.mxu0 0.0
    %1223 = vmatprep.subr.mxu0 0.0
    %1224 = vmatpush1.msra.mxu0 0.0
    %1225 = vmatprep.mubr.f32.mxu0 0.0
    %1226 = vmatmul.mubr.f32.gmra.mrb[0].mxu0 %v1076
    %v1227 = vpop.f32.mrb[0].mxu0
    %v1228 = vadd.f32 0.0, %v1227
    %v1229 = vpop.f32.mrb[0].mxu0
    %v1230 = vadd.f32 0.0, %v1229
    %1231 = vdwg.mxu0
    %1232 = vmatprep.subr.mxu0 %v1088
    %1233 = vmatpush1.msra.mxu0 %v1086
    %1234 = vmatprep.subr.mxu0 0.0
    %1235 = vmatpush1.msra.mxu0 0.0
    %1236 = vmatprep.subr.mxu0 0.0
    %1237 = vmatpush1.msra.mxu0 0.0
    %1238 = vmatprep.subr.mxu0 0.0
    %1239 = vmatpush1.msra.mxu0 0.0
    %1240 = vmatprep.subr.mxu0 0.0
    %1241 = vmatpush1.msra.mxu0 0.0
    %1242 = vmatprep.subr.mxu0 0.0
    %1243 = vmatpush1.msra.mxu0 0.0
    %1244 = vmatprep.subr.mxu0 0.0
    %1245 = vmatpush1.msra.mxu0 0.0
    %1246 = vmatprep.subr.mxu0 0.0
    %1247 = vmatpush1.msra.mxu0 0.0
    %1248 = vmatprep.subr.mxu0 0.0
    %1249 = vmatpush1.msra.mxu0 0.0
    %1250 = vmatprep.subr.mxu0 0.0
    %1251 = vmatpush1.msra.mxu0 0.0
    %1252 = vmatprep.subr.mxu0 0.0
    %1253 = vmatpush1.msra.mxu0 0.0
    %1254 = vmatprep.subr.mxu0 0.0
    %1255 = vmatpush1.msra.mxu0 0.0
    %1256 = vmatprep.subr.mxu0 0.0
    %1257 = vmatpush1.msra.mxu0 0.0
    %1258 = vmatprep.subr.mxu0 0.0
    %1259 = vmatpush1.msra.mxu0 0.0
    %1260 = vmatprep.subr.mxu0 0.0
    %1261 = vmatpush1.msra.mxu0 0.0
    %1262 = vmatprep.subr.mxu0 0.0
    %1263 = vmatpush1.msra.mxu0 0.0
    %1264 = vmatprep.subr.mxu0 0.0
    %1265 = vmatpush1.msra.mxu0 0.0
    %1266 = vmatprep.subr.mxu0 0.0
    %1267 = vmatpush1.msra.mxu0 0.0
    %1268 = vmatprep.subr.mxu0 0.0
    %1269 = vmatpush1.msra.mxu0 0.0
    %1270 = vmatprep.subr.mxu0 0.0
    %1271 = vmatpush1.msra.mxu0 0.0
    %1272 = vmatprep.subr.mxu0 0.0
    %1273 = vmatpush1.msra.mxu0 0.0
    %1274 = vmatprep.subr.mxu0 0.0
    %1275 = vmatpush1.msra.mxu0 0.0
    %1276 = vmatprep.subr.mxu0 0.0
    %1277 = vmatpush1.msra.mxu0 0.0
    %1278 = vmatprep.subr.mxu0 0.0
    %1279 = vmatpush1.msra.mxu0 0.0
    %1280 = vmatprep.subr.mxu0 0.0
    %1281 = vmatpush1.msra.mxu0 0.0
    %1282 = vmatprep.subr.mxu0 0.0
    %1283 = vmatpush1.msra.mxu0 0.0
    %1284 = vmatprep.subr.mxu0 0.0
    %1285 = vmatpush1.msra.mxu0 0.0
    %1286 = vmatprep.subr.mxu0 0.0
    %1287 = vmatpush1.msra.mxu0 0.0
    %1288 = vmatprep.subr.mxu0 0.0
    %1289 = vmatpush1.msra.mxu0 0.0
    %1290 = vmatprep.subr.mxu0 0.0
    %1291 = vmatpush1.msra.mxu0 0.0
    %1292 = vmatprep.subr.mxu0 0.0
    %1293 = vmatpush1.msra.mxu0 0.0
    %1294 = vmatprep.subr.mxu0 0.0
    %1295 = vmatpush1.msra.mxu0 0.0
    %1296 = vmatprep.mubr.f32.mxu0 0.0
    %1297 = vmatmul.mubr.f32.gmra.mrb[0].mxu0 %v1076
    %v1298 = vpop.f32.mrb[0].mxu0
    %v1299 = vadd.f32 0.0, %v1298
    %v1300 = vpop.f32.mrb[0].mxu0
    %v1301 = vadd.f32 0.0, %v1300
    %1302 = vdwg.mxu0
    %v1303 = vadd.f32 %v1067, %v1157
    %v1304 = vadd.f32 %v1068, %v1159
    %v1305 = vadd.f32 %v1069, %v1228
    %v1306 = vadd.f32 %v1070, %v1230
    %v1307 = vadd.f32 %v1071, %v1299
    %v1308 = vadd.f32 %v1072, %v1301
    %1309 = vrot.lane.b32.xlu0 %v26, 127
    %v1310 = vpop.permute.xlu0 %1309
    %1311 = vrot.lane.b32.xlu0 %v32, 127
    %v1312 = vpop.permute.xlu0 %1311
    %1313 = vrot.lane.b32.xlu0 %v27, 127
    %v1314 = vpop.permute.xlu0 %1313
    %1315 = vrot.lane.b32.xlu0 %v33, 127
    %v1316 = vpop.permute.xlu0 %1315
    %1317 = vrot.lane.b32.xlu0 %v28, 127
    %v1318 = vpop.permute.xlu0 %1317
    %1319 = vrot.lane.b32.xlu0 %v34, 127
    %v1320 = vpop.permute.xlu0 %1319
    %vm1321 = vcmp.lt.s32.totalorder %v51, 127
    %v1322 = vsel %vm1321, %v1318, %v1320
    %v1323 = vsel %vm1321, %v1316, %v1318
    %v1324 = vsel %vm1321, %v1314, %v1316
    %v1325 = vsel %vm1321, %v1312, %v1314
    %v1326 = vsel %vm1321, %v1310, %v1312
    %v1327 = vsel %vm1321, %v1320, %v1310
    %s1328 = scalar_lea.vmem %s1, 20
    %v1329 = vld [vmem:[%s1328] sm:$0xf]
    %v1331 = vsel %vm81, %v1329, 0
    %v1334 = vsel %vm85, %v1326, 0
    %v1337 = vsel %vm85, %v1325, 0
    %v1340 = vsel %vm85, %v1324, 0
    %v1343 = vsel %vm85, %v1323, 0
    %v1346 = vsel %vm85, %v1322, 0
    %v1349 = vsel %vm85, %v1327, 0
    %1351 = vmatprep.subr.mxu0 %v1337
    %1352 = vmatpush1.msra.mxu0 %v1334
    %1353 = vmatprep.subr.mxu0 0.0
    %1354 = vmatpush1.msra.mxu0 0.0
    %1355 = vmatprep.subr.mxu0 0.0
    %1356 = vmatpush1.msra.mxu0 0.0
    %1357 = vmatprep.subr.mxu0 0.0
    %1358 = vmatpush1.msra.mxu0 0.0
    %1359 = vmatprep.subr.mxu0 0.0
    %1360 = vmatpush1.msra.mxu0 0.0
    %1361 = vmatprep.subr.mxu0 0.0
    %1362 = vmatpush1.msra.mxu0 0.0
    %1363 = vmatprep.subr.mxu0 0.0
    %1364 = vmatpush1.msra.mxu0 0.0
    %1365 = vmatprep.subr.mxu0 0.0
    %1366 = vmatpush1.msra.mxu0 0.0
    %1367 = vmatprep.subr.mxu0 0.0
    %1368 = vmatpush1.msra.mxu0 0.0
    %1369 = vmatprep.subr.mxu0 0.0
    %1370 = vmatpush1.msra.mxu0 0.0
    %1371 = vmatprep.subr.mxu0 0.0
    %1372 = vmatpush1.msra.mxu0 0.0
    %1373 = vmatprep.subr.mxu0 0.0
    %1374 = vmatpush1.msra.mxu0 0.0
    %1375 = vmatprep.subr.mxu0 0.0
    %1376 = vmatpush1.msra.mxu0 0.0
    %1377 = vmatprep.subr.mxu0 0.0
    %1378 = vmatpush1.msra.mxu0 0.0
    %1379 = vmatprep.subr.mxu0 0.0
    %1380 = vmatpush1.msra.mxu0 0.0
    %1381 = vmatprep.subr.mxu0 0.0
    %1382 = vmatpush1.msra.mxu0 0.0
    %1383 = vmatprep.subr.mxu0 0.0
    %1384 = vmatpush1.msra.mxu0 0.0
    %1385 = vmatprep.subr.mxu0 0.0
    %1386 = vmatpush1.msra.mxu0 0.0
    %1387 = vmatprep.subr.mxu0 0.0
    %1388 = vmatpush1.msra.mxu0 0.0
    %1389 = vmatprep.subr.mxu0 0.0
    %1390 = vmatpush1.msra.mxu0 0.0
    %1391 = vmatprep.subr.mxu0 0.0
    %1392 = vmatpush1.msra.mxu0 0.0
    %1393 = vmatprep.subr.mxu0 0.0
    %1394 = vmatpush1.msra.mxu0 0.0
    %1395 = vmatprep.subr.mxu0 0.0
    %1396 = vmatpush1.msra.mxu0 0.0
    %1397 = vmatprep.subr.mxu0 0.0
    %1398 = vmatpush1.msra.mxu0 0.0
    %1399 = vmatprep.subr.mxu0 0.0
    %1400 = vmatpush1.msra.mxu0 0.0
    %1401 = vmatprep.subr.mxu0 0.0
    %1402 = vmatpush1.msra.mxu0 0.0
    %1403 = vmatprep.subr.mxu0 0.0
    %1404 = vmatpush1.msra.mxu0 0.0
    %1405 = vmatprep.subr.mxu0 0.0
    %1406 = vmatpush1.msra.mxu0 0.0
    %1407 = vmatprep.subr.mxu0 0.0
    %1408 = vmatpush1.msra.mxu0 0.0
    %1409 = vmatprep.subr.mxu0 0.0
    %1410 = vmatpush1.msra.mxu0 0.0
    %1411 = vmatprep.subr.mxu0 0.0
    %1412 = vmatpush1.msra.mxu0 0.0
    %1413 = vmatprep.subr.mxu0 0.0
    %1414 = vmatpush1.msra.mxu0 0.0
    %1415 = vmatprep.mubr.f32.mxu0 0.0
    %1416 = vmatmul.mubr.f32.gmra.mrb[0].mxu0 %v1331
    %v1417 = vpop.f32.mrb[0].mxu0
    %v1418 = vadd.f32 0.0, %v1417
    %v1419 = vpop.f32.mrb[0].mxu0
    %v1420 = vadd.f32 0.0, %v1419
    %1421 = vdwg.mxu0
    %1422 = vmatprep.subr.mxu0 %v1343
    %1423 = vmatpush1.msra.mxu0 %v1340
    %1424 = vmatprep.subr.mxu0 0.0
    %1425 = vmatpush1.msra.mxu0 0.0
    %1426 = vmatprep.subr.mxu0 0.0
    %1427 = vmatpush1.msra.mxu0 0.0
    %1428 = vmatprep.subr.mxu0 0.0
    %1429 = vmatpush1.msra.mxu0 0.0
    %1430 = vmatprep.subr.mxu0 0.0
    %1431 = vmatpush1.msra.mxu0 0.0
    %1432 = vmatprep.subr.mxu0 0.0
    %1433 = vmatpush1.msra.mxu0 0.0
    %1434 = vmatprep.subr.mxu0 0.0
    %1435 = vmatpush1.msra.mxu0 0.0
    %1436 = vmatprep.subr.mxu0 0.0
    %1437 = vmatpush1.msra.mxu0 0.0
    %1438 = vmatprep.subr.mxu0 0.0
    %1439 = vmatpush1.msra.mxu0 0.0
    %1440 = vmatprep.subr.mxu0 0.0
    %1441 = vmatpush1.msra.mxu0 0.0
    %1442 = vmatprep.subr.mxu0 0.0
    %1443 = vmatpush1.msra.mxu0 0.0
    %1444 = vmatprep.subr.mxu0 0.0
    %1445 = vmatpush1.msra.mxu0 0.0
    %1446 = vmatprep.subr.mxu0 0.0
    %1447 = vmatpush1.msra.mxu0 0.0
    %1448 = vmatprep.subr.mxu0 0.0
    %1449 = vmatpush1.msra.mxu0 0.0
    %1450 = vmatprep.subr.mxu0 0.0
    %1451 = vmatpush1.msra.mxu0 0.0
    %1452 = vmatprep.subr.mxu0 0.0
    %1453 = vmatpush1.msra.mxu0 0.0
    %1454 = vmatprep.subr.mxu0 0.0
    %1455 = vmatpush1.msra.mxu0 0.0
    %1456 = vmatprep.subr.mxu0 0.0
    %1457 = vmatpush1.msra.mxu0 0.0
    %1458 = vmatprep.subr.mxu0 0.0
    %1459 = vmatpush1.msra.mxu0 0.0
    %1460 = vmatprep.subr.mxu0 0.0
    %1461 = vmatpush1.msra.mxu0 0.0
    %1462 = vmatprep.subr.mxu0 0.0
    %1463 = vmatpush1.msra.mxu0 0.0
    %1464 = vmatprep.subr.mxu0 0.0
    %1465 = vmatpush1.msra.mxu0 0.0
    %1466 = vmatprep.subr.mxu0 0.0
    %1467 = vmatpush1.msra.mxu0 0.0
    %1468 = vmatprep.subr.mxu0 0.0
    %1469 = vmatpush1.msra.mxu0 0.0
    %1470 = vmatprep.subr.mxu0 0.0
    %1471 = vmatpush1.msra.mxu0 0.0
    %1472 = vmatprep.subr.mxu0 0.0
    %1473 = vmatpush1.msra.mxu0 0.0
    %1474 = vmatprep.subr.mxu0 0.0
    %1475 = vmatpush1.msra.mxu0 0.0
    %1476 = vmatprep.subr.mxu0 0.0
    %1477 = vmatpush1.msra.mxu0 0.0
    %1478 = vmatprep.subr.mxu0 0.0
    %1479 = vmatpush1.msra.mxu0 0.0
    %1480 = vmatprep.subr.mxu0 0.0
    %1481 = vmatpush1.msra.mxu0 0.0
    %1482 = vmatprep.subr.mxu0 0.0
    %1483 = vmatpush1.msra.mxu0 0.0
    %1484 = vmatprep.subr.mxu0 0.0
    %1485 = vmatpush1.msra.mxu0 0.0
    %1486 = vmatprep.mubr.f32.mxu0 0.0
    %1487 = vmatmul.mubr.f32.gmra.mrb[0].mxu0 %v1331
    %v1488 = vpop.f32.mrb[0].mxu0
    %v1489 = vadd.f32 0.0, %v1488
    %v1490 = vpop.f32.mrb[0].mxu0
    %v1491 = vadd.f32 0.0, %v1490
    %1492 = vdwg.mxu0
    %1493 = vmatprep.subr.mxu0 %v1349
    %1494 = vmatpush1.msra.mxu0 %v1346
    %1495 = vmatprep.subr.mxu0 0.0
    %1496 = vmatpush1.msra.mxu0 0.0
    %1497 = vmatprep.subr.mxu0 0.0
    %1498 = vmatpush1.msra.mxu0 0.0
    %1499 = vmatprep.subr.mxu0 0.0
    %1500 = vmatpush1.msra.mxu0 0.0
    %1501 = vmatprep.subr.mxu0 0.0
    %1502 = vmatpush1.msra.mxu0 0.0
    %1503 = vmatprep.subr.mxu0 0.0
    %1504 = vmatpush1.msra.mxu0 0.0
    %1505 = vmatprep.subr.mxu0 0.0
    %1506 = vmatpush1.msra.mxu0 0.0
    %1507 = vmatprep.subr.mxu0 0.0
    %1508 = vmatpush1.msra.mxu0 0.0
    %1509 = vmatprep.subr.mxu0 0.0
    %1510 = vmatpush1.msra.mxu0 0.0
    %1511 = vmatprep.subr.mxu0 0.0
    %1512 = vmatpush1.msra.mxu0 0.0
    %1513 = vmatprep.subr.mxu0 0.0
    %1514 = vmatpush1.msra.mxu0 0.0
    %1515 = vmatprep.subr.mxu0 0.0
    %1516 = vmatpush1.msra.mxu0 0.0
    %1517 = vmatprep.subr.mxu0 0.0
    %1518 = vmatpush1.msra.mxu0 0.0
    %1519 = vmatprep.subr.mxu0 0.0
    %1520 = vmatpush1.msra.mxu0 0.0
    %1521 = vmatprep.subr.mxu0 0.0
    %1522 = vmatpush1.msra.mxu0 0.0
    %1523 = vmatprep.subr.mxu0 0.0
    %1524 = vmatpush1.msra.mxu0 0.0
    %1525 = vmatprep.subr.mxu0 0.0
    %1526 = vmatpush1.msra.mxu0 0.0
    %1527 = vmatprep.subr.mxu0 0.0
    %1528 = vmatpush1.msra.mxu0 0.0
    %1529 = vmatprep.subr.mxu0 0.0
    %1530 = vmatpush1.msra.mxu0 0.0
    %1531 = vmatprep.subr.mxu0 0.0
    %1532 = vmatpush1.msra.mxu0 0.0
    %1533 = vmatprep.subr.mxu0 0.0
    %1534 = vmatpush1.msra.mxu0 0.0
    %1535 = vmatprep.subr.mxu0 0.0
    %1536 = vmatpush1.msra.mxu0 0.0
    %1537 = vmatprep.subr.mxu0 0.0
    %1538 = vmatpush1.msra.mxu0 0.0
    %1539 = vmatprep.subr.mxu0 0.0
    %1540 = vmatpush1.msra.mxu0 0.0
    %1541 = vmatprep.subr.mxu0 0.0
    %1542 = vmatpush1.msra.mxu0 0.0
    %1543 = vmatprep.subr.mxu0 0.0
    %1544 = vmatpush1.msra.mxu0 0.0
    %1545 = vmatprep.subr.mxu0 0.0
    %1546 = vmatpush1.msra.mxu0 0.0
    %1547 = vmatprep.subr.mxu0 0.0
    %1548 = vmatpush1.msra.mxu0 0.0
    %1549 = vmatprep.subr.mxu0 0.0
    %1550 = vmatpush1.msra.mxu0 0.0
    %1551 = vmatprep.subr.mxu0 0.0
    %1552 = vmatpush1.msra.mxu0 0.0
    %1553 = vmatprep.subr.mxu0 0.0
    %1554 = vmatpush1.msra.mxu0 0.0
    %1555 = vmatprep.subr.mxu0 0.0
    %1556 = vmatpush1.msra.mxu0 0.0
    %1557 = vmatprep.mubr.f32.mxu0 0.0
    %1558 = vmatmul.mubr.f32.gmra.mrb[0].mxu0 %v1331
    %v1559 = vpop.f32.mrb[0].mxu0
    %v1560 = vadd.f32 0.0, %v1559
    %v1561 = vpop.f32.mrb[0].mxu0
    %v1562 = vadd.f32 0.0, %v1561
    %1563 = vdwg.mxu0
    %v1564 = vadd.f32 %v1303, %v1418
    %v1565 = vadd.f32 %v1304, %v1420
    %v1566 = vadd.f32 %v1305, %v1489
    %v1567 = vadd.f32 %v1306, %v1491
    %v1568 = vadd.f32 %v1307, %v1560
    %v1569 = vadd.f32 %v1308, %v1562
    %1570 = vrot.lane.b32.xlu0 %v26, 111
    %v1571 = vpop.permute.xlu0 %1570
    %1572 = vrot.lane.b32.xlu0 %v32, 111
    %v1573 = vpop.permute.xlu0 %1572
    %1574 = vrot.lane.b32.xlu0 %v27, 111
    %v1575 = vpop.permute.xlu0 %1574
    %1576 = vrot.lane.b32.xlu0 %v33, 111
    %v1577 = vpop.permute.xlu0 %1576
    %1578 = vrot.lane.b32.xlu0 %v28, 111
    %v1579 = vpop.permute.xlu0 %1578
    %1580 = vrot.lane.b32.xlu0 %v34, 111
    %v1581 = vpop.permute.xlu0 %1580
    %vm1582 = vcmp.lt.s32.totalorder %v51, 111
    %v1583 = vsel %vm1582, %v1579, %v1581
    %v1584 = vsel %vm1582, %v1577, %v1579
    %v1585 = vsel %vm1582, %v1575, %v1577
    %v1586 = vsel %vm1582, %v1573, %v1575
    %v1587 = vsel %vm1582, %v1571, %v1573
    %v1588 = vsel %vm1582, %v1581, %v1571
    %s1589 = scalar_lea.vmem %s1, 24
    %v1590 = vld [vmem:[%s1589] sm:$0xf]
    %v1592 = vsel %vm81, %v1590, 0
    %v1595 = vsel %vm85, %v1587, 0
    %v1598 = vsel %vm85, %v1586, 0
    %v1601 = vsel %vm85, %v1585, 0
    %v1604 = vsel %vm85, %v1584, 0
    %v1607 = vsel %vm85, %v1583, 0
    %v1610 = vsel %vm85, %v1588, 0
    %1612 = vmatprep.subr.mxu0 %v1598
    %1613 = vmatpush1.msra.mxu0 %v1595
    %1614 = vmatprep.subr.mxu0 0.0
    %1615 = vmatpush1.msra.mxu0 0.0
    %1616 = vmatprep.subr.mxu0 0.0
    %1617 = vmatpush1.msra.mxu0 0.0
    %1618 = vmatprep.subr.mxu0 0.0
    %1619 = vmatpush1.msra.mxu0 0.0
    %1620 = vmatprep.subr.mxu0 0.0
    %1621 = vmatpush1.msra.mxu0 0.0
    %1622 = vmatprep.subr.mxu0 0.0
    %1623 = vmatpush1.msra.mxu0 0.0
    %1624 = vmatprep.subr.mxu0 0.0
    %1625 = vmatpush1.msra.mxu0 0.0
    %1626 = vmatprep.subr.mxu0 0.0
    %1627 = vmatpush1.msra.mxu0 0.0
    %1628 = vmatprep.subr.mxu0 0.0
    %1629 = vmatpush1.msra.mxu0 0.0
    %1630 = vmatprep.subr.mxu0 0.0
    %1631 = vmatpush1.msra.mxu0 0.0
    %1632 = vmatprep.subr.mxu0 0.0
    %1633 = vmatpush1.msra.mxu0 0.0
    %1634 = vmatprep.subr.mxu0 0.0
    %1635 = vmatpush1.msra.mxu0 0.0
    %1636 = vmatprep.subr.mxu0 0.0
    %1637 = vmatpush1.msra.mxu0 0.0
    %1638 = vmatprep.subr.mxu0 0.0
    %1639 = vmatpush1.msra.mxu0 0.0
    %1640 = vmatprep.subr.mxu0 0.0
    %1641 = vmatpush1.msra.mxu0 0.0
    %1642 = vmatprep.subr.mxu0 0.0
    %1643 = vmatpush1.msra.mxu0 0.0
    %1644 = vmatprep.subr.mxu0 0.0
    %1645 = vmatpush1.msra.mxu0 0.0
    %1646 = vmatprep.subr.mxu0 0.0
    %1647 = vmatpush1.msra.mxu0 0.0
    %1648 = vmatprep.subr.mxu0 0.0
    %1649 = vmatpush1.msra.mxu0 0.0
    %1650 = vmatprep.subr.mxu0 0.0
    %1651 = vmatpush1.msra.mxu0 0.0
    %1652 = vmatprep.subr.mxu0 0.0
    %1653 = vmatpush1.msra.mxu0 0.0
    %1654 = vmatprep.subr.mxu0 0.0
    %1655 = vmatpush1.msra.mxu0 0.0
    %1656 = vmatprep.subr.mxu0 0.0
    %1657 = vmatpush1.msra.mxu0 0.0
    %1658 = vmatprep.subr.mxu0 0.0
    %1659 = vmatpush1.msra.mxu0 0.0
    %1660 = vmatprep.subr.mxu0 0.0
    %1661 = vmatpush1.msra.mxu0 0.0
    %1662 = vmatprep.subr.mxu0 0.0
    %1663 = vmatpush1.msra.mxu0 0.0
    %1664 = vmatprep.subr.mxu0 0.0
    %1665 = vmatpush1.msra.mxu0 0.0
    %1666 = vmatprep.subr.mxu0 0.0
    %1667 = vmatpush1.msra.mxu0 0.0
    %1668 = vmatprep.subr.mxu0 0.0
    %1669 = vmatpush1.msra.mxu0 0.0
    %1670 = vmatprep.subr.mxu0 0.0
    %1671 = vmatpush1.msra.mxu0 0.0
    %1672 = vmatprep.subr.mxu0 0.0
    %1673 = vmatpush1.msra.mxu0 0.0
    %1674 = vmatprep.subr.mxu0 0.0
    %1675 = vmatpush1.msra.mxu0 0.0
    %1676 = vmatprep.mubr.f32.mxu0 0.0
    %1677 = vmatmul.mubr.f32.gmra.mrb[0].mxu0 %v1592
    %v1678 = vpop.f32.mrb[0].mxu0
    %v1679 = vadd.f32 0.0, %v1678
    %v1680 = vpop.f32.mrb[0].mxu0
    %v1681 = vadd.f32 0.0, %v1680
    %1682 = vdwg.mxu0
    %1683 = vmatprep.subr.mxu0 %v1604
    %1684 = vmatpush1.msra.mxu0 %v1601
    %1685 = vmatprep.subr.mxu0 0.0
    %1686 = vmatpush1.msra.mxu0 0.0
    %1687 = vmatprep.subr.mxu0 0.0
    %1688 = vmatpush1.msra.mxu0 0.0
    %1689 = vmatprep.subr.mxu0 0.0
    %1690 = vmatpush1.msra.mxu0 0.0
    %1691 = vmatprep.subr.mxu0 0.0
    %1692 = vmatpush1.msra.mxu0 0.0
    %1693 = vmatprep.subr.mxu0 0.0
    %1694 = vmatpush1.msra.mxu0 0.0
    %1695 = vmatprep.subr.mxu0 0.0
    %1696 = vmatpush1.msra.mxu0 0.0
    %1697 = vmatprep.subr.mxu0 0.0
    %1698 = vmatpush1.msra.mxu0 0.0
    %1699 = vmatprep.subr.mxu0 0.0
    %1700 = vmatpush1.msra.mxu0 0.0
    %1701 = vmatprep.subr.mxu0 0.0
    %1702 = vmatpush1.msra.mxu0 0.0
    %1703 = vmatprep.subr.mxu0 0.0
    %1704 = vmatpush1.msra.mxu0 0.0
    %1705 = vmatprep.subr.mxu0 0.0
    %1706 = vmatpush1.msra.mxu0 0.0
    %1707 = vmatprep.subr.mxu0 0.0
    %1708 = vmatpush1.msra.mxu0 0.0
    %1709 = vmatprep.subr.mxu0 0.0
    %1710 = vmatpush1.msra.mxu0 0.0
    %1711 = vmatprep.subr.mxu0 0.0
    %1712 = vmatpush1.msra.mxu0 0.0
    %1713 = vmatprep.subr.mxu0 0.0
    %1714 = vmatpush1.msra.mxu0 0.0
    %1715 = vmatprep.subr.mxu0 0.0
    %1716 = vmatpush1.msra.mxu0 0.0
    %1717 = vmatprep.subr.mxu0 0.0
    %1718 = vmatpush1.msra.mxu0 0.0
    %1719 = vmatprep.subr.mxu0 0.0
    %1720 = vmatpush1.msra.mxu0 0.0
    %1721 = vmatprep.subr.mxu0 0.0
    %1722 = vmatpush1.msra.mxu0 0.0
    %1723 = vmatprep.subr.mxu0 0.0
    %1724 = vmatpush1.msra.mxu0 0.0
    %1725 = vmatprep.subr.mxu0 0.0
    %1726 = vmatpush1.msra.mxu0 0.0
    %1727 = vmatprep.subr.mxu0 0.0
    %1728 = vmatpush1.msra.mxu0 0.0
    %1729 = vmatprep.subr.mxu0 0.0
    %1730 = vmatpush1.msra.mxu0 0.0
    %1731 = vmatprep.subr.mxu0 0.0
    %1732 = vmatpush1.msra.mxu0 0.0
    %1733 = vmatprep.subr.mxu0 0.0
    %1734 = vmatpush1.msra.mxu0 0.0
    %1735 = vmatprep.subr.mxu0 0.0
    %1736 = vmatpush1.msra.mxu0 0.0
    %1737 = vmatprep.subr.mxu0 0.0
    %1738 = vmatpush1.msra.mxu0 0.0
    %1739 = vmatprep.subr.mxu0 0.0
    %1740 = vmatpush1.msra.mxu0 0.0
    %1741 = vmatprep.subr.mxu0 0.0
    %1742 = vmatpush1.msra.mxu0 0.0
    %1743 = vmatprep.subr.mxu0 0.0
    %1744 = vmatpush1.msra.mxu0 0.0
    %1745 = vmatprep.subr.mxu0 0.0
    %1746 = vmatpush1.msra.mxu0 0.0
    %1747 = vmatprep.mubr.f32.mxu0 0.0
    %1748 = vmatmul.mubr.f32.gmra.mrb[0].mxu0 %v1592
    %v1749 = vpop.f32.mrb[0].mxu0
    %v1750 = vadd.f32 0.0, %v1749
    %v1751 = vpop.f32.mrb[0].mxu0
    %v1752 = vadd.f32 0.0, %v1751
    %1753 = vdwg.mxu0
    %1754 = vmatprep.subr.mxu0 %v1610
    %1755 = vmatpush1.msra.mxu0 %v1607
    %1756 = vmatprep.subr.mxu0 0.0
    %1757 = vmatpush1.msra.mxu0 0.0
    %1758 = vmatprep.subr.mxu0 0.0
    %1759 = vmatpush1.msra.mxu0 0.0
    %1760 = vmatprep.subr.mxu0 0.0
    %1761 = vmatpush1.msra.mxu0 0.0
    %1762 = vmatprep.subr.mxu0 0.0
    %1763 = vmatpush1.msra.mxu0 0.0
    %1764 = vmatprep.subr.mxu0 0.0
    %1765 = vmatpush1.msra.mxu0 0.0
    %1766 = vmatprep.subr.mxu0 0.0
    %1767 = vmatpush1.msra.mxu0 0.0
    %1768 = vmatprep.subr.mxu0 0.0
    %1769 = vmatpush1.msra.mxu0 0.0
    %1770 = vmatprep.subr.mxu0 0.0
    %1771 = vmatpush1.msra.mxu0 0.0
    %1772 = vmatprep.subr.mxu0 0.0
    %1773 = vmatpush1.msra.mxu0 0.0
    %1774 = vmatprep.subr.mxu0 0.0
    %1775 = vmatpush1.msra.mxu0 0.0
    %1776 = vmatprep.subr.mxu0 0.0
    %1777 = vmatpush1.msra.mxu0 0.0
    %1778 = vmatprep.subr.mxu0 0.0
    %1779 = vmatpush1.msra.mxu0 0.0
    %1780 = vmatprep.subr.mxu0 0.0
    %1781 = vmatpush1.msra.mxu0 0.0
    %1782 = vmatprep.subr.mxu0 0.0
    %1783 = vmatpush1.msra.mxu0 0.0
    %1784 = vmatprep.subr.mxu0 0.0
    %1785 = vmatpush1.msra.mxu0 0.0
    %1786 = vmatprep.subr.mxu0 0.0
    %1787 = vmatpush1.msra.mxu0 0.0
    %1788 = vmatprep.subr.mxu0 0.0
    %1789 = vmatpush1.msra.mxu0 0.0
    %1790 = vmatprep.subr.mxu0 0.0
    %1791 = vmatpush1.msra.mxu0 0.0
    %1792 = vmatprep.subr.mxu0 0.0
    %1793 = vmatpush1.msra.mxu0 0.0
    %1794 = vmatprep.subr.mxu0 0.0
    %1795 = vmatpush1.msra.mxu0 0.0
    %1796 = vmatprep.subr.mxu0 0.0
    %1797 = vmatpush1.msra.mxu0 0.0
    %1798 = vmatprep.subr.mxu0 0.0
    %1799 = vmatpush1.msra.mxu0 0.0
    %1800 = vmatprep.subr.mxu0 0.0
    %1801 = vmatpush1.msra.mxu0 0.0
    %1802 = vmatprep.subr.mxu0 0.0
    %1803 = vmatpush1.msra.mxu0 0.0
    %1804 = vmatprep.subr.mxu0 0.0
    %1805 = vmatpush1.msra.mxu0 0.0
    %1806 = vmatprep.subr.mxu0 0.0
    %1807 = vmatpush1.msra.mxu0 0.0
    %1808 = vmatprep.subr.mxu0 0.0
    %1809 = vmatpush1.msra.mxu0 0.0
    %1810 = vmatprep.subr.mxu0 0.0
    %1811 = vmatpush1.msra.mxu0 0.0
    %1812 = vmatprep.subr.mxu0 0.0
    %1813 = vmatpush1.msra.mxu0 0.0
    %1814 = vmatprep.subr.mxu0 0.0
    %1815 = vmatpush1.msra.mxu0 0.0
    %1816 = vmatprep.subr.mxu0 0.0
    %1817 = vmatpush1.msra.mxu0 0.0
    %1818 = vmatprep.mubr.f32.mxu0 0.0
    %1819 = vmatmul.mubr.f32.gmra.mrb[0].mxu0 %v1592
    %v1820 = vpop.f32.mrb[0].mxu0
    %v1821 = vadd.f32 0.0, %v1820
    %v1822 = vpop.f32.mrb[0].mxu0
    %v1823 = vadd.f32 0.0, %v1822
    %1824 = vdwg.mxu0
    %v1825 = vadd.f32 %v1564, %v1679
    %v1826 = vadd.f32 %v1565, %v1681
    %v1827 = vadd.f32 %v1566, %v1750
    %v1828 = vadd.f32 %v1567, %v1752
    %v1829 = vadd.f32 %v1568, %v1821
    %v1830 = vadd.f32 %v1569, %v1823
    %1831 = vrot.lane.b32.xlu0 %v26, 110
    %v1832 = vpop.permute.xlu0 %1831
    %1833 = vrot.lane.b32.xlu0 %v32, 110
    %v1834 = vpop.permute.xlu0 %1833
    %1835 = vrot.lane.b32.xlu0 %v27, 110
    %v1836 = vpop.permute.xlu0 %1835
    %1837 = vrot.lane.b32.xlu0 %v33, 110
    %v1838 = vpop.permute.xlu0 %1837
    %1839 = vrot.lane.b32.xlu0 %v28, 110
    %v1840 = vpop.permute.xlu0 %1839
    %1841 = vrot.lane.b32.xlu0 %v34, 110
    %v1842 = vpop.permute.xlu0 %1841
    %vm1843 = vcmp.lt.s32.totalorder %v51, 110
    %v1844 = vsel %vm1843, %v1840, %v1842
    %v1845 = vsel %vm1843, %v1838, %v1840
    %v1846 = vsel %vm1843, %v1836, %v1838
    %v1847 = vsel %vm1843, %v1834, %v1836
    %v1848 = vsel %vm1843, %v1832, %v1834
    %v1849 = vsel %vm1843, %v1842, %v1832
    %s1850 = scalar_lea.vmem %s1, 28
    %v1851 = vld [vmem:[%s1850] sm:$0xf]
    %v1853 = vsel %vm81, %v1851, 0
    %v1856 = vsel %vm85, %v1848, 0
    %v1859 = vsel %vm85, %v1847, 0
    %v1862 = vsel %vm85, %v1846, 0
    %v1865 = vsel %vm85, %v1845, 0
    %v1868 = vsel %vm85, %v1844, 0
    %v1871 = vsel %vm85, %v1849, 0
    %1873 = vmatprep.subr.mxu0 %v1859
    %1874 = vmatpush1.msra.mxu0 %v1856
    %1875 = vmatprep.subr.mxu0 0.0
    %1876 = vmatpush1.msra.mxu0 0.0
    %1877 = vmatprep.subr.mxu0 0.0
    %1878 = vmatpush1.msra.mxu0 0.0
    %1879 = vmatprep.subr.mxu0 0.0
    %1880 = vmatpush1.msra.mxu0 0.0
    %1881 = vmatprep.subr.mxu0 0.0
    %1882 = vmatpush1.msra.mxu0 0.0
    %1883 = vmatprep.subr.mxu0 0.0
    %1884 = vmatpush1.msra.mxu0 0.0
    %1885 = vmatprep.subr.mxu0 0.0
    %1886 = vmatpush1.msra.mxu0 0.0
    %1887 = vmatprep.subr.mxu0 0.0
    %1888 = vmatpush1.msra.mxu0 0.0
    %1889 = vmatprep.subr.mxu0 0.0
    %1890 = vmatpush1.msra.mxu0 0.0
    %1891 = vmatprep.subr.mxu0 0.0
    %1892 = vmatpush1.msra.mxu0 0.0
    %1893 = vmatprep.subr.mxu0 0.0
    %1894 = vmatpush1.msra.mxu0 0.0
    %1895 = vmatprep.subr.mxu0 0.0
    %1896 = vmatpush1.msra.mxu0 0.0
    %1897 = vmatprep.subr.mxu0 0.0
    %1898 = vmatpush1.msra.mxu0 0.0
    %1899 = vmatprep.subr.mxu0 0.0
    %1900 = vmatpush1.msra.mxu0 0.0
    %1901 = vmatprep.subr.mxu0 0.0
    %1902 = vmatpush1.msra.mxu0 0.0
    %1903 = vmatprep.subr.mxu0 0.0
    %1904 = vmatpush1.msra.mxu0 0.0
    %1905 = vmatprep.subr.mxu0 0.0
    %1906 = vmatpush1.msra.mxu0 0.0
    %1907 = vmatprep.subr.mxu0 0.0
    %1908 = vmatpush1.msra.mxu0 0.0
    %1909 = vmatprep.subr.mxu0 0.0
    %1910 = vmatpush1.msra.mxu0 0.0
    %1911 = vmatprep.subr.mxu0 0.0
    %1912 = vmatpush1.msra.mxu0 0.0
    %1913 = vmatprep.subr.mxu0 0.0
    %1914 = vmatpush1.msra.mxu0 0.0
    %1915 = vmatprep.subr.mxu0 0.0
    %1916 = vmatpush1.msra.mxu0 0.0
    %1917 = vmatprep.subr.mxu0 0.0
    %1918 = vmatpush1.msra.mxu0 0.0
    %1919 = vmatprep.subr.mxu0 0.0
    %1920 = vmatpush1.msra.mxu0 0.0
    %1921 = vmatprep.subr.mxu0 0.0
    %1922 = vmatpush1.msra.mxu0 0.0
    %1923 = vmatprep.subr.mxu0 0.0
    %1924 = vmatpush1.msra.mxu0 0.0
    %1925 = vmatprep.subr.mxu0 0.0
    %1926 = vmatpush1.msra.mxu0 0.0
    %1927 = vmatprep.subr.mxu0 0.0
    %1928 = vmatpush1.msra.mxu0 0.0
    %1929 = vmatprep.subr.mxu0 0.0
    %1930 = vmatpush1.msra.mxu0 0.0
    %1931 = vmatprep.subr.mxu0 0.0
    %1932 = vmatpush1.msra.mxu0 0.0
    %1933 = vmatprep.subr.mxu0 0.0
    %1934 = vmatpush1.msra.mxu0 0.0
    %1935 = vmatprep.subr.mxu0 0.0
    %1936 = vmatpush1.msra.mxu0 0.0
    %1937 = vmatprep.mubr.f32.mxu0 0.0
    %1938 = vmatmul.mubr.f32.gmra.mrb[0].mxu0 %v1853
    %v1939 = vpop.f32.mrb[0].mxu0
    %v1940 = vadd.f32 0.0, %v1939
    %v1941 = vpop.f32.mrb[0].mxu0
    %v1942 = vadd.f32 0.0, %v1941
    %1943 = vdwg.mxu0
    %1944 = vmatprep.subr.mxu0 %v1865
    %1945 = vmatpush1.msra.mxu0 %v1862
    %1946 = vmatprep.subr.mxu0 0.0
    %1947 = vmatpush1.msra.mxu0 0.0
    %1948 = vmatprep.subr.mxu0 0.0
    %1949 = vmatpush1.msra.mxu0 0.0
    %1950 = vmatprep.subr.mxu0 0.0
    %1951 = vmatpush1.msra.mxu0 0.0
    %1952 = vmatprep.subr.mxu0 0.0
    %1953 = vmatpush1.msra.mxu0 0.0
    %1954 = vmatprep.subr.mxu0 0.0
    %1955 = vmatpush1.msra.mxu0 0.0
    %1956 = vmatprep.subr.mxu0 0.0
    %1957 = vmatpush1.msra.mxu0 0.0
    %1958 = vmatprep.subr.mxu0 0.0
    %1959 = vmatpush1.msra.mxu0 0.0
    %1960 = vmatprep.subr.mxu0 0.0
    %1961 = vmatpush1.msra.mxu0 0.0
    %1962 = vmatprep.subr.mxu0 0.0
    %1963 = vmatpush1.msra.mxu0 0.0
    %1964 = vmatprep.subr.mxu0 0.0
    %1965 = vmatpush1.msra.mxu0 0.0
    %1966 = vmatprep.subr.mxu0 0.0
    %1967 = vmatpush1.msra.mxu0 0.0
    %1968 = vmatprep.subr.mxu0 0.0
    %1969 = vmatpush1.msra.mxu0 0.0
    %1970 = vmatprep.subr.mxu0 0.0
    %1971 = vmatpush1.msra.mxu0 0.0
    %1972 = vmatprep.subr.mxu0 0.0
    %1973 = vmatpush1.msra.mxu0 0.0
    %1974 = vmatprep.subr.mxu0 0.0
    %1975 = vmatpush1.msra.mxu0 0.0
    %1976 = vmatprep.subr.mxu0 0.0
    %1977 = vmatpush1.msra.mxu0 0.0
    %1978 = vmatprep.subr.mxu0 0.0
    %1979 = vmatpush1.msra.mxu0 0.0
    %1980 = vmatprep.subr.mxu0 0.0
    %1981 = vmatpush1.msra.mxu0 0.0
    %1982 = vmatprep.subr.mxu0 0.0
    %1983 = vmatpush1.msra.mxu0 0.0
    %1984 = vmatprep.subr.mxu0 0.0
    %1985 = vmatpush1.msra.mxu0 0.0
    %1986 = vmatprep.subr.mxu0 0.0
    %1987 = vmatpush1.msra.mxu0 0.0
    %1988 = vmatprep.subr.mxu0 0.0
    %1989 = vmatpush1.msra.mxu0 0.0
    %1990 = vmatprep.subr.mxu0 0.0
    %1991 = vmatpush1.msra.mxu0 0.0
    %1992 = vmatprep.subr.mxu0 0.0
    %1993 = vmatpush1.msra.mxu0 0.0
    %1994 = vmatprep.subr.mxu0 0.0
    %1995 = vmatpush1.msra.mxu0 0.0
    %1996 = vmatprep.subr.mxu0 0.0
    %1997 = vmatpush1.msra.mxu0 0.0
    %1998 = vmatprep.subr.mxu0 0.0
    %1999 = vmatpush1.msra.mxu0 0.0
    %2000 = vmatprep.subr.mxu0 0.0
    %2001 = vmatpush1.msra.mxu0 0.0
    %2002 = vmatprep.subr.mxu0 0.0
    %2003 = vmatpush1.msra.mxu0 0.0
    %2004 = vmatprep.subr.mxu0 0.0
    %2005 = vmatpush1.msra.mxu0 0.0
    %2006 = vmatprep.subr.mxu0 0.0
    %2007 = vmatpush1.msra.mxu0 0.0
    %2008 = vmatprep.mubr.f32.mxu0 0.0
    %2009 = vmatmul.mubr.f32.gmra.mrb[0].mxu0 %v1853
    %v2010 = vpop.f32.mrb[0].mxu0
    %v2011 = vadd.f32 0.0, %v2010
    %v2012 = vpop.f32.mrb[0].mxu0
    %v2013 = vadd.f32 0.0, %v2012
    %2014 = vdwg.mxu0
    %2015 = vmatprep.subr.mxu0 %v1871
    %2016 = vmatpush1.msra.mxu0 %v1868
    %2017 = vmatprep.subr.mxu0 0.0
    %2018 = vmatpush1.msra.mxu0 0.0
    %2019 = vmatprep.subr.mxu0 0.0
    %2020 = vmatpush1.msra.mxu0 0.0
    %2021 = vmatprep.subr.mxu0 0.0
    %2022 = vmatpush1.msra.mxu0 0.0
    %2023 = vmatprep.subr.mxu0 0.0
    %2024 = vmatpush1.msra.mxu0 0.0
    %2025 = vmatprep.subr.mxu0 0.0
    %2026 = vmatpush1.msra.mxu0 0.0
    %2027 = vmatprep.subr.mxu0 0.0
    %2028 = vmatpush1.msra.mxu0 0.0
    %2029 = vmatprep.subr.mxu0 0.0
    %2030 = vmatpush1.msra.mxu0 0.0
    %2031 = vmatprep.subr.mxu0 0.0
    %2032 = vmatpush1.msra.mxu0 0.0
    %2033 = vmatprep.subr.mxu0 0.0
    %2034 = vmatpush1.msra.mxu0 0.0
    %2035 = vmatprep.subr.mxu0 0.0
    %2036 = vmatpush1.msra.mxu0 0.0
    %2037 = vmatprep.subr.mxu0 0.0
    %2038 = vmatpush1.msra.mxu0 0.0
    %2039 = vmatprep.subr.mxu0 0.0
    %2040 = vmatpush1.msra.mxu0 0.0
    %2041 = vmatprep.subr.mxu0 0.0
    %2042 = vmatpush1.msra.mxu0 0.0
    %2043 = vmatprep.subr.mxu0 0.0
    %2044 = vmatpush1.msra.mxu0 0.0
    %2045 = vmatprep.subr.mxu0 0.0
    %2046 = vmatpush1.msra.mxu0 0.0
    %2047 = vmatprep.subr.mxu0 0.0
    %2048 = vmatpush1.msra.mxu0 0.0
    %2049 = vmatprep.subr.mxu0 0.0
    %2050 = vmatpush1.msra.mxu0 0.0
    %2051 = vmatprep.subr.mxu0 0.0
    %2052 = vmatpush1.msra.mxu0 0.0
    %2053 = vmatprep.subr.mxu0 0.0
    %2054 = vmatpush1.msra.mxu0 0.0
    %2055 = vmatprep.subr.mxu0 0.0
    %2056 = vmatpush1.msra.mxu0 0.0
    %2057 = vmatprep.subr.mxu0 0.0
    %2058 = vmatpush1.msra.mxu0 0.0
    %2059 = vmatprep.subr.mxu0 0.0
    %2060 = vmatpush1.msra.mxu0 0.0
    %2061 = vmatprep.subr.mxu0 0.0
    %2062 = vmatpush1.msra.mxu0 0.0
    %2063 = vmatprep.subr.mxu0 0.0
    %2064 = vmatpush1.msra.mxu0 0.0
    %2065 = vmatprep.subr.mxu0 0.0
    %2066 = vmatpush1.msra.mxu0 0.0
    %2067 = vmatprep.subr.mxu0 0.0
    %2068 = vmatpush1.msra.mxu0 0.0
    %2069 = vmatprep.subr.mxu0 0.0
    %2070 = vmatpush1.msra.mxu0 0.0
    %2071 = vmatprep.subr.mxu0 0.0
    %2072 = vmatpush1.msra.mxu0 0.0
    %2073 = vmatprep.subr.mxu0 0.0
    %2074 = vmatpush1.msra.mxu0 0.0
    %2075 = vmatprep.subr.mxu0 0.0
    %2076 = vmatpush1.msra.mxu0 0.0
    %2077 = vmatprep.subr.mxu0 0.0
    %2078 = vmatpush1.msra.mxu0 0.0
    %2079 = vmatprep.mubr.f32.mxu0 0.0
    %2080 = vmatmul.mubr.f32.gmra.mrb[0].mxu0 %v1853
    %v2081 = vpop.f32.mrb[0].mxu0
    %v2082 = vadd.f32 0.0, %v2081
    %v2083 = vpop.f32.mrb[0].mxu0
    %v2084 = vadd.f32 0.0, %v2083
    %2085 = vdwg.mxu0
    %v2086 = vadd.f32 %v1825, %v1940
    %v2087 = vadd.f32 %v1826, %v1942
    %v2088 = vadd.f32 %v1827, %v2011
    %v2089 = vadd.f32 %v1828, %v2013
    %v2090 = vadd.f32 %v1829, %v2082
    %v2091 = vadd.f32 %v1830, %v2084
    %2092 = vrot.lane.b32.xlu0 %v26, 109
    %v2093 = vpop.permute.xlu0 %2092
    %2094 = vrot.lane.b32.xlu0 %v32, 109
    %v2095 = vpop.permute.xlu0 %2094
    %2096 = vrot.lane.b32.xlu0 %v27, 109
    %v2097 = vpop.permute.xlu0 %2096
    %2098 = vrot.lane.b32.xlu0 %v33, 109
    %v2099 = vpop.permute.xlu0 %2098
    %2100 = vrot.lane.b32.xlu0 %v28, 109
    %v2101 = vpop.permute.xlu0 %2100
    %2102 = vrot.lane.b32.xlu0 %v34, 109
    %v2103 = vpop.permute.xlu0 %2102
    %vm2104 = vcmp.lt.s32.totalorder %v51, 109
    %v2105 = vsel %vm2104, %v2101, %v2103
    %v2106 = vsel %vm2104, %v2099, %v2101
    %v2107 = vsel %vm2104, %v2097, %v2099
    %v2108 = vsel %vm2104, %v2095, %v2097
    %v2109 = vsel %vm2104, %v2093, %v2095
    %v2110 = vsel %vm2104, %v2103, %v2093
    %s2111 = scalar_lea.vmem %s1, 32
    %v2112 = vld [vmem:[%s2111] sm:$0xf]
    %v2114 = vsel %vm81, %v2112, 0
    %v2117 = vsel %vm85, %v2109, 0
    %v2120 = vsel %vm85, %v2108, 0
    %v2123 = vsel %vm85, %v2107, 0
    %v2126 = vsel %vm85, %v2106, 0
    %v2129 = vsel %vm85, %v2105, 0
    %v2132 = vsel %vm85, %v2110, 0
    %2134 = vmatprep.subr.mxu0 %v2120
    %2135 = vmatpush1.msra.mxu0 %v2117
    %2136 = vmatprep.subr.mxu0 0.0
    %2137 = vmatpush1.msra.mxu0 0.0
    %2138 = vmatprep.subr.mxu0 0.0
    %2139 = vmatpush1.msra.mxu0 0.0
    %2140 = vmatprep.subr.mxu0 0.0
    %2141 = vmatpush1.msra.mxu0 0.0
    %2142 = vmatprep.subr.mxu0 0.0
    %2143 = vmatpush1.msra.mxu0 0.0
    %2144 = vmatprep.subr.mxu0 0.0
    %2145 = vmatpush1.msra.mxu0 0.0
    %2146 = vmatprep.subr.mxu0 0.0
    %2147 = vmatpush1.msra.mxu0 0.0
    %2148 = vmatprep.subr.mxu0 0.0
    %2149 = vmatpush1.msra.mxu0 0.0
    %2150 = vmatprep.subr.mxu0 0.0
    %2151 = vmatpush1.msra.mxu0 0.0
    %2152 = vmatprep.subr.mxu0 0.0
    %2153 = vmatpush1.msra.mxu0 0.0
    %2154 = vmatprep.subr.mxu0 0.0
    %2155 = vmatpush1.msra.mxu0 0.0
    %2156 = vmatprep.subr.mxu0 0.0
    %2157 = vmatpush1.msra.mxu0 0.0
    %2158 = vmatprep.subr.mxu0 0.0
    %2159 = vmatpush1.msra.mxu0 0.0
    %2160 = vmatprep.subr.mxu0 0.0
    %2161 = vmatpush1.msra.mxu0 0.0
    %2162 = vmatprep.subr.mxu0 0.0
    %2163 = vmatpush1.msra.mxu0 0.0
    %2164 = vmatprep.subr.mxu0 0.0
    %2165 = vmatpush1.msra.mxu0 0.0
    %2166 = vmatprep.subr.mxu0 0.0
    %2167 = vmatpush1.msra.mxu0 0.0
    %2168 = vmatprep.subr.mxu0 0.0
    %2169 = vmatpush1.msra.mxu0 0.0
    %2170 = vmatprep.subr.mxu0 0.0
    %2171 = vmatpush1.msra.mxu0 0.0
    %2172 = vmatprep.subr.mxu0 0.0
    %2173 = vmatpush1.msra.mxu0 0.0
    %2174 = vmatprep.subr.mxu0 0.0
    %2175 = vmatpush1.msra.mxu0 0.0
    %2176 = vmatprep.subr.mxu0 0.0
    %2177 = vmatpush1.msra.mxu0 0.0
    %2178 = vmatprep.subr.mxu0 0.0
    %2179 = vmatpush1.msra.mxu0 0.0
    %2180 = vmatprep.subr.mxu0 0.0
    %2181 = vmatpush1.msra.mxu0 0.0
    %2182 = vmatprep.subr.mxu0 0.0
    %2183 = vmatpush1.msra.mxu0 0.0
    %2184 = vmatprep.subr.mxu0 0.0
    %2185 = vmatpush1.msra.mxu0 0.0
    %2186 = vmatprep.subr.mxu0 0.0
    %2187 = vmatpush1.msra.mxu0 0.0
    %2188 = vmatprep.subr.mxu0 0.0
    %2189 = vmatpush1.msra.mxu0 0.0
    %2190 = vmatprep.subr.mxu0 0.0
    %2191 = vmatpush1.msra.mxu0 0.0
    %2192 = vmatprep.subr.mxu0 0.0
    %2193 = vmatpush1.msra.mxu0 0.0
    %2194 = vmatprep.subr.mxu0 0.0
    %2195 = vmatpush1.msra.mxu0 0.0
    %2196 = vmatprep.subr.mxu0 0.0
    %2197 = vmatpush1.msra.mxu0 0.0
    %2198 = vmatprep.mubr.f32.mxu0 0.0
    %2199 = vmatmul.mubr.f32.gmra.mrb[0].mxu0 %v2114
    %v2200 = vpop.f32.mrb[0].mxu0
    %v2201 = vadd.f32 0.0, %v2200
    %v2202 = vpop.f32.mrb[0].mxu0
    %v2203 = vadd.f32 0.0, %v2202
    %2204 = vdwg.mxu0
    %2205 = vmatprep.subr.mxu0 %v2126
    %2206 = vmatpush1.msra.mxu0 %v2123
    %2207 = vmatprep.subr.mxu0 0.0
    %2208 = vmatpush1.msra.mxu0 0.0
    %2209 = vmatprep.subr.mxu0 0.0
    %2210 = vmatpush1.msra.mxu0 0.0
    %2211 = vmatprep.subr.mxu0 0.0
    %2212 = vmatpush1.msra.mxu0 0.0
    %2213 = vmatprep.subr.mxu0 0.0
    %2214 = vmatpush1.msra.mxu0 0.0
    %2215 = vmatprep.subr.mxu0 0.0
    %2216 = vmatpush1.msra.mxu0 0.0
    %2217 = vmatprep.subr.mxu0 0.0
    %2218 = vmatpush1.msra.mxu0 0.0
    %2219 = vmatprep.subr.mxu0 0.0
    %2220 = vmatpush1.msra.mxu0 0.0
    %2221 = vmatprep.subr.mxu0 0.0
    %2222 = vmatpush1.msra.mxu0 0.0
    %2223 = vmatprep.subr.mxu0 0.0
    %2224 = vmatpush1.msra.mxu0 0.0
    %2225 = vmatprep.subr.mxu0 0.0
    %2226 = vmatpush1.msra.mxu0 0.0
    %2227 = vmatprep.subr.mxu0 0.0
    %2228 = vmatpush1.msra.mxu0 0.0
    %2229 = vmatprep.subr.mxu0 0.0
    %2230 = vmatpush1.msra.mxu0 0.0
    %2231 = vmatprep.subr.mxu0 0.0
    %2232 = vmatpush1.msra.mxu0 0.0
    %2233 = vmatprep.subr.mxu0 0.0
    %2234 = vmatpush1.msra.mxu0 0.0
    %2235 = vmatprep.subr.mxu0 0.0
    %2236 = vmatpush1.msra.mxu0 0.0
    %2237 = vmatprep.subr.mxu0 0.0
    %2238 = vmatpush1.msra.mxu0 0.0
    %2239 = vmatprep.subr.mxu0 0.0
    %2240 = vmatpush1.msra.mxu0 0.0
    %2241 = vmatprep.subr.mxu0 0.0
    %2242 = vmatpush1.msra.mxu0 0.0
    %2243 = vmatprep.subr.mxu0 0.0
    %2244 = vmatpush1.msra.mxu0 0.0
    %2245 = vmatprep.subr.mxu0 0.0
    %2246 = vmatpush1.msra.mxu0 0.0
    %2247 = vmatprep.subr.mxu0 0.0
    %2248 = vmatpush1.msra.mxu0 0.0
    %2249 = vmatprep.subr.mxu0 0.0
    %2250 = vmatpush1.msra.mxu0 0.0
    %2251 = vmatprep.subr.mxu0 0.0
    %2252 = vmatpush1.msra.mxu0 0.0
    %2253 = vmatprep.subr.mxu0 0.0
    %2254 = vmatpush1.msra.mxu0 0.0
    %2255 = vmatprep.subr.mxu0 0.0
    %2256 = vmatpush1.msra.mxu0 0.0
    %2257 = vmatprep.subr.mxu0 0.0
    %2258 = vmatpush1.msra.mxu0 0.0
    %2259 = vmatprep.subr.mxu0 0.0
    %2260 = vmatpush1.msra.mxu0 0.0
    %2261 = vmatprep.subr.mxu0 0.0
    %2262 = vmatpush1.msra.mxu0 0.0
    %2263 = vmatprep.subr.mxu0 0.0
    %2264 = vmatpush1.msra.mxu0 0.0
    %2265 = vmatprep.subr.mxu0 0.0
    %2266 = vmatpush1.msra.mxu0 0.0
    %2267 = vmatprep.subr.mxu0 0.0
    %2268 = vmatpush1.msra.mxu0 0.0
    %2269 = vmatprep.mubr.f32.mxu0 0.0
    %2270 = vmatmul.mubr.f32.gmra.mrb[0].mxu0 %v2114
    %v2271 = vpop.f32.mrb[0].mxu0
    %v2272 = vadd.f32 0.0, %v2271
    %v2273 = vpop.f32.mrb[0].mxu0
    %v2274 = vadd.f32 0.0, %v2273
    %2275 = vdwg.mxu0
    %2276 = vmatprep.subr.mxu0 %v2132
    %2277 = vmatpush1.msra.mxu0 %v2129
    %2278 = vmatprep.subr.mxu0 0.0
    %2279 = vmatpush1.msra.mxu0 0.0
    %2280 = vmatprep.subr.mxu0 0.0
    %2281 = vmatpush1.msra.mxu0 0.0
    %2282 = vmatprep.subr.mxu0 0.0
    %2283 = vmatpush1.msra.mxu0 0.0
    %2284 = vmatprep.subr.mxu0 0.0
    %2285 = vmatpush1.msra.mxu0 0.0
    %2286 = vmatprep.subr.mxu0 0.0
    %2287 = vmatpush1.msra.mxu0 0.0
    %2288 = vmatprep.subr.mxu0 0.0
    %2289 = vmatpush1.msra.mxu0 0.0
    %2290 = vmatprep.subr.mxu0 0.0
    %2291 = vmatpush1.msra.mxu0 0.0
    %2292 = vmatprep.subr.mxu0 0.0
    %2293 = vmatpush1.msra.mxu0 0.0
    %2294 = vmatprep.subr.mxu0 0.0
    %2295 = vmatpush1.msra.mxu0 0.0
    %2296 = vmatprep.subr.mxu0 0.0
    %2297 = vmatpush1.msra.mxu0 0.0
    %2298 = vmatprep.subr.mxu0 0.0
    %2299 = vmatpush1.msra.mxu0 0.0
    %2300 = vmatprep.subr.mxu0 0.0
    %2301 = vmatpush1.msra.mxu0 0.0
    %2302 = vmatprep.subr.mxu0 0.0
    %2303 = vmatpush1.msra.mxu0 0.0
    %2304 = vmatprep.subr.mxu0 0.0
    %2305 = vmatpush1.msra.mxu0 0.0
    %2306 = vmatprep.subr.mxu0 0.0
    %2307 = vmatpush1.msra.mxu0 0.0
    %2308 = vmatprep.subr.mxu0 0.0
    %2309 = vmatpush1.msra.mxu0 0.0
    %2310 = vmatprep.subr.mxu0 0.0
    %2311 = vmatpush1.msra.mxu0 0.0
    %2312 = vmatprep.subr.mxu0 0.0
    %2313 = vmatpush1.msra.mxu0 0.0
    %2314 = vmatprep.subr.mxu0 0.0
    %2315 = vmatpush1.msra.mxu0 0.0
    %2316 = vmatprep.subr.mxu0 0.0
    %2317 = vmatpush1.msra.mxu0 0.0
    %2318 = vmatprep.subr.mxu0 0.0
    %2319 = vmatpush1.msra.mxu0 0.0
    %2320 = vmatprep.subr.mxu0 0.0
    %2321 = vmatpush1.msra.mxu0 0.0
    %2322 = vmatprep.subr.mxu0 0.0
    %2323 = vmatpush1.msra.mxu0 0.0
    %2324 = vmatprep.subr.mxu0 0.0
    %2325 = vmatpush1.msra.mxu0 0.0
    %2326 = vmatprep.subr.mxu0 0.0
    %2327 = vmatpush1.msra.mxu0 0.0
    %2328 = vmatprep.subr.mxu0 0.0
    %2329 = vmatpush1.msra.mxu0 0.0
    %2330 = vmatprep.subr.mxu0 0.0
    %2331 = vmatpush1.msra.mxu0 0.0
    %2332 = vmatprep.subr.mxu0 0.0
    %2333 = vmatpush1.msra.mxu0 0.0
    %2334 = vmatprep.subr.mxu0 0.0
    %2335 = vmatpush1.msra.mxu0 0.0
    %2336 = vmatprep.subr.mxu0 0.0
    %2337 = vmatpush1.msra.mxu0 0.0
    %2338 = vmatprep.subr.mxu0 0.0
    %2339 = vmatpush1.msra.mxu0 0.0
    %2340 = vmatprep.mubr.f32.mxu0 0.0
    %2341 = vmatmul.mubr.f32.gmra.mrb[0].mxu0 %v2114
    %v2342 = vpop.f32.mrb[0].mxu0
    %v2343 = vadd.f32 0.0, %v2342
    %v2344 = vpop.f32.mrb[0].mxu0
    %v2345 = vadd.f32 0.0, %v2344
    %2346 = vdwg.mxu0
    %v2347 = vadd.f32 %v2086, %v2201
    %v2348 = vadd.f32 %v2087, %v2203
    %v2349 = vadd.f32 %v2088, %v2272
    %v2350 = vadd.f32 %v2089, %v2274
    %v2351 = vadd.f32 %v2090, %v2343
    %v2352 = vadd.f32 %v2091, %v2345
    %v2354 = vlaneseq
    %v2355 = vshrl.u32 %v2354, 7
    %v2356 = vsub.s32 0, %v2355
    %v2357 = vrot.slane %v25, %v2356
    %v2358 = vlaneseq
    %v2359 = vshrl.u32 %v2358, 7
    %v2360 = vsub.s32 1, %v2359
    %v2361 = vrot.slane %v25, %v2360
    %v2362 = vlaneseq
    %v2363 = vshrl.u32 %v2362, 7
    %v2364 = vsub.s32 2, %v2363
    %v2365 = vrot.slane %v25, %v2364
    %v2366 = vlaneseq
    %v2367 = vshrl.u32 %v2366, 7
    %v2368 = vsub.s32 3, %v2367
    %v2369 = vrot.slane %v25, %v2368
    %v2370 = vlaneseq
    %v2371 = vshrl.u32 %v2370, 7
    %v2372 = vsub.s32 4, %v2371
    %v2373 = vrot.slane %v25, %v2372
    %v2374 = vlaneseq
    %v2375 = vshrl.u32 %v2374, 7
    %v2376 = vsub.s32 5, %v2375
    %v2377 = vrot.slane %v25, %v2376
    %v2384 = vmul.f32 %v2347, %v2357
    %v2385 = vmul.f32 %v2348, %v2361
    %v2386 = vmul.f32 %v2349, %v2365
    %v2387 = vmul.f32 %v2350, %v2369
    %v2388 = vmul.f32 %v2351, %v2373
    %v2389 = vmul.f32 %v2352, %v2377
    %v2390 = vsel %vm85, %v2384, 0.0
    %v2391 = vsel %vm85, %v2385, 0.0
    %v2392 = vadd.f32 %v2390, %v2391
    %v2393 = vsel %vm85, %v2386, 0.0
    %v2394 = vadd.f32 %v2392, %v2393
    %v2395 = vsel %vm85, %v2387, 0.0
    %v2396 = vadd.f32 %v2394, %v2395
    %v2397 = vsel %vm85, %v2388, 0.0
    %v2398 = vadd.f32 %v2396, %v2397
    %v2399 = vsel %vm85, %v2389, 0.0
    %v2400 = vadd.f32 %v2398, %v2399
    %2401 = vadd.xlane.f32.xlu0 %v2400
    %v2402 = vpop.xlane.xlu0 %2401
    %v2403 = vmul.f32 %v2402, 0.001953125
    %v2404 = vmul.f32 %v2384, %v2384
    %v2405 = vmul.f32 %v2385, %v2385
    %v2406 = vmul.f32 %v2386, %v2386
    %v2407 = vmul.f32 %v2387, %v2387
    %v2408 = vmul.f32 %v2388, %v2388
    %v2409 = vmul.f32 %v2389, %v2389
    %v2410 = vsel %vm85, %v2404, 0.0
    %v2411 = vsel %vm85, %v2405, 0.0
    %v2412 = vadd.f32 %v2410, %v2411
    %v2413 = vsel %vm85, %v2406, 0.0
    %v2414 = vadd.f32 %v2412, %v2413
    %v2415 = vsel %vm85, %v2407, 0.0
    %v2416 = vadd.f32 %v2414, %v2415
    %v2417 = vsel %vm85, %v2408, 0.0
    %v2418 = vadd.f32 %v2416, %v2417
    %v2419 = vsel %vm85, %v2409, 0.0
    %v2420 = vadd.f32 %v2418, %v2419
    %2421 = vadd.xlane.f32.xlu0 %v2420
    %v2422 = vpop.xlane.xlu0 %2421
    %v2423 = vmul.f32 %v2422, 0.001953125
    %v2424 = vmul.f32 %v2403, %v2403
    %v2425 = vsub.f32 %v2423, %v2424
    %v2426 = vadd.f32 %v2425, 0.8
    %v2427 = vrsqrt.pop %v2426
    %v2428 = vld [vmem:[%s2] sm:$0xf]
    %v2429 = vmul.f32 %v2427, %v2428
    %v2430 = vld [vmem:[%s3] sm:$0xf]
    %v2431 = vmul.f32 %v2403, %v2429
    %v2432 = vsub.f32 %v2430, %v2431
    %2434 = vset.pattern.permute.xlu0 0
    %2435 = vperm.xlu0 %2434, %v2429
    %v2436 = vpop.permute.xlu0 %2435
    %v2438 = vmul.f32 %v2384, %v2436
    %v2439 = vmul.f32 %v2385, %v2436
    %v2440 = vmul.f32 %v2386, %v2436
    %v2441 = vmul.f32 %v2387, %v2436
    %v2442 = vmul.f32 %v2388, %v2436
    %v2443 = vmul.f32 %v2389, %v2436
    %2445 = vset.pattern.permute.xlu0 0
    %2446 = vperm.xlu0 %2445, %v2432
    %v2447 = vpop.permute.xlu0 %2446
    %v2449 = vmul.f32 %v2447, %v2357
    %v2450 = vmul.f32 %v2447, %v2361
    %v2451 = vmul.f32 %v2447, %v2365
    %v2452 = vmul.f32 %v2447, %v2369
    %v2453 = vmul.f32 %v2447, %v2373
    %v2454 = vmul.f32 %v2447, %v2377
    %v2455 = vadd.f32 %v2438, %v2449
    %v2456 = vadd.f32 %v2439, %v2450
    %v2457 = vadd.f32 %v2440, %v2451
    %v2458 = vadd.f32 %v2441, %v2452
    %v2459 = vadd.f32 %v2442, %v2453
    %v2460 = vadd.f32 %v2443, %v2454
    %s2461 = sld [smem:[#allocation2]]
    %vm2462 = vcmp.ge.f32.partialorder %v2455, 0.0
    %vm2463 = vcmp.ge.f32.partialorder %v2456, 0.0
    %vm2464 = vcmp.ge.f32.partialorder %v2457, 0.0
    %vm2465 = vcmp.ge.f32.partialorder %v2458, 0.0
    %vm2466 = vcmp.ge.f32.partialorder %v2459, 0.0
    %vm2467 = vcmp.ge.f32.partialorder %v2460, 0.0
    %v2468 = vstv %s2461
    %v2469 = vmul.f32 %v2468, %v2455
    %v2470 = vmul.f32 %v2468, %v2456
    %v2471 = vmul.f32 %v2468, %v2457
    %v2472 = vmul.f32 %v2468, %v2458
    %v2473 = vmul.f32 %v2468, %v2459
    %v2474 = vmul.f32 %v2468, %v2460
    %v2475 = vsel %vm2462, %v2455, %v2469
    %v2476 = vsel %vm2463, %v2456, %v2470
    %v2477 = vsel %vm2464, %v2457, %v2471
    %v2478 = vsel %vm2465, %v2458, %v2472
    %v2479 = vsel %vm2466, %v2459, %v2473
    %v2480 = vsel %vm2467, %v2460, %v2474
    %2481 = vrot.lane.b32.xlu0 %v2475, 19
    %v2482 = vpop.permute.xlu0 %2481
    %2483 = vrot.lane.b32.xlu0 %v2476, 19
    %v2484 = vpop.permute.xlu0 %2483
    %2485 = vrot.lane.b32.xlu0 %v2477, 19
    %v2486 = vpop.permute.xlu0 %2485
    %2487 = vrot.lane.b32.xlu0 %v2478, 19
    %v2488 = vpop.permute.xlu0 %2487
    %2489 = vrot.lane.b32.xlu0 %v2479, 19
    %v2490 = vpop.permute.xlu0 %2489
    %2491 = vrot.lane.b32.xlu0 %v2480, 19
    %v2492 = vpop.permute.xlu0 %2491
    %v2493 = vsel %vm52, %v2490, %v2492
    %v2494 = vsel %vm52, %v2488, %v2490
    %v2495 = vsel %vm52, %v2486, %v2488
    %v2496 = vsel %vm52, %v2484, %v2486
    %v2497 = vsel %vm52, %v2482, %v2484
    %v2498 = vsel %vm52, %v2492, %v2482
    %2499 = vrot.lane.b32.xlu0 %v2475, 18
    %v2500 = vpop.permute.xlu0 %2499
    %2501 = vrot.lane.b32.xlu0 %v2476, 18
    %v2502 = vpop.permute.xlu0 %2501
    %2503 = vrot.lane.b32.xlu0 %v2477, 18
    %v2504 = vpop.permute.xlu0 %2503
    %2505 = vrot.lane.b32.xlu0 %v2478, 18
    %v2506 = vpop.permute.xlu0 %2505
    %2507 = vrot.lane.b32.xlu0 %v2479, 18
    %v2508 = vpop.permute.xlu0 %2507
    %2509 = vrot.lane.b32.xlu0 %v2480, 18
    %v2510 = vpop.permute.xlu0 %2509
    %v2511 = vsel %vm72, %v2508, %v2510
    %v2512 = vsel %vm72, %v2506, %v2508
    %v2513 = vsel %vm72, %v2504, %v2506
    %v2514 = vsel %vm72, %v2502, %v2504
    %v2515 = vsel %vm72, %v2500, %v2502
    %v2516 = vsel %vm72, %v2510, %v2500
    %v2518 = vsel %vm85, %v2516, 0
    %v2521 = vsel %vm85, %v2515, 0
    %v2524 = vsel %vm85, %v2514, 0
    %v2527 = vsel %vm85, %v2513, 0
    %v2530 = vsel %vm85, %v2512, 0
    %v2533 = vsel %vm85, %v2511, 0
    %2535 = vmatprep.subr.mxu0 %v2521
    %2536 = vmatpush1.msra.mxu0 %v2518
    %2537 = vmatprep.subr.mxu0 0.0
    %2538 = vmatpush1.msra.mxu0 0.0
    %2539 = vmatprep.subr.mxu0 0.0
    %2540 = vmatpush1.msra.mxu0 0.0
    %2541 = vmatprep.subr.mxu0 0.0
    %2542 = vmatpush1.msra.mxu0 0.0
    %2543 = vmatprep.subr.mxu0 0.0
    %2544 = vmatpush1.msra.mxu0 0.0
    %2545 = vmatprep.subr.mxu0 0.0
    %2546 = vmatpush1.msra.mxu0 0.0
    %2547 = vmatprep.subr.mxu0 0.0
    %2548 = vmatpush1.msra.mxu0 0.0
    %2549 = vmatprep.subr.mxu0 0.0
    %2550 = vmatpush1.msra.mxu0 0.0
    %2551 = vmatprep.subr.mxu0 0.0
    %2552 = vmatpush1.msra.mxu0 0.0
    %2553 = vmatprep.subr.mxu0 0.0
    %2554 = vmatpush1.msra.mxu0 0.0
    %2555 = vmatprep.subr.mxu0 0.0
    %2556 = vmatpush1.msra.mxu0 0.0
    %2557 = vmatprep.subr.mxu0 0.0
    %2558 = vmatpush1.msra.mxu0 0.0
    %2559 = vmatprep.subr.mxu0 0.0
    %2560 = vmatpush1.msra.mxu0 0.0
    %2561 = vmatprep.subr.mxu0 0.0
    %2562 = vmatpush1.msra.mxu0 0.0
    %2563 = vmatprep.subr.mxu0 0.0
    %2564 = vmatpush1.msra.mxu0 0.0
    %2565 = vmatprep.subr.mxu0 0.0
    %2566 = vmatpush1.msra.mxu0 0.0
    %2567 = vmatprep.subr.mxu0 0.0
    %2568 = vmatpush1.msra.mxu0 0.0
    %2569 = vmatprep.subr.mxu0 0.0
    %2570 = vmatpush1.msra.mxu0 0.0
    %2571 = vmatprep.subr.mxu0 0.0
    %2572 = vmatpush1.msra.mxu0 0.0
    %2573 = vmatprep.subr.mxu0 0.0
    %2574 = vmatpush1.msra.mxu0 0.0
    %2575 = vmatprep.subr.mxu0 0.0
    %2576 = vmatpush1.msra.mxu0 0.0
    %2577 = vmatprep.subr.mxu0 0.0
    %2578 = vmatpush1.msra.mxu0 0.0
    %2579 = vmatprep.subr.mxu0 0.0
    %2580 = vmatpush1.msra.mxu0 0.0
    %2581 = vmatprep.subr.mxu0 0.0
    %2582 = vmatpush1.msra.mxu0 0.0
    %2583 = vmatprep.subr.mxu0 0.0
    %2584 = vmatpush1.msra.mxu0 0.0
    %2585 = vmatprep.subr.mxu0 0.0
    %2586 = vmatpush1.msra.mxu0 0.0
    %2587 = vmatprep.subr.mxu0 0.0
    %2588 = vmatpush1.msra.mxu0 0.0
    %2589 = vmatprep.subr.mxu0 0.0
    %2590 = vmatpush1.msra.mxu0 0.0
    %2591 = vmatprep.subr.mxu0 0.0
    %2592 = vmatpush1.msra.mxu0 0.0
    %2593 = vmatprep.subr.mxu0 0.0
    %2594 = vmatpush1.msra.mxu0 0.0
    %2595 = vmatprep.subr.mxu0 0.0
    %2596 = vmatpush1.msra.mxu0 0.0
    %2597 = vmatprep.subr.mxu0 0.0
    %2598 = vmatpush1.msra.mxu0 0.0
    %2599 = vmatprep.mubr.f32.mxu0 0.0
    %2600 = vmatmul.mubr.f32.gmra.mrb[0].mxu0 %v83
    %v2601 = vpop.f32.mrb[0].mxu0
    %v2602 = vadd.f32 0.0, %v2601
    %v2603 = vpop.f32.mrb[0].mxu0
    %v2604 = vadd.f32 0.0, %v2603
    %2605 = vdwg.mxu0
    %2606 = vmatprep.subr.mxu0 %v2527
    %2607 = vmatpush1.msra.mxu0 %v2524
    %2608 = vmatprep.subr.mxu0 0.0
    %2609 = vmatpush1.msra.mxu0 0.0
    %2610 = vmatprep.subr.mxu0 0.0
    %2611 = vmatpush1.msra.mxu0 0.0
    %2612 = vmatprep.subr.mxu0 0.0
    %2613 = vmatpush1.msra.mxu0 0.0
    %2614 = vmatprep.subr.mxu0 0.0
    %2615 = vmatpush1.msra.mxu0 0.0
    %2616 = vmatprep.subr.mxu0 0.0
    %2617 = vmatpush1.msra.mxu0 0.0
    %2618 = vmatprep.subr.mxu0 0.0
    %2619 = vmatpush1.msra.mxu0 0.0
    %2620 = vmatprep.subr.mxu0 0.0
    %2621 = vmatpush1.msra.mxu0 0.0
    %2622 = vmatprep.subr.mxu0 0.0
    %2623 = vmatpush1.msra.mxu0 0.0
    %2624 = vmatprep.subr.mxu0 0.0
    %2625 = vmatpush1.msra.mxu0 0.0
    %2626 = vmatprep.subr.mxu0 0.0
    %2627 = vmatpush1.msra.mxu0 0.0
    %2628 = vmatprep.subr.mxu0 0.0
    %2629 = vmatpush1.msra.mxu0 0.0
    %2630 = vmatprep.subr.mxu0 0.0
    %2631 = vmatpush1.msra.mxu0 0.0
    %2632 = vmatprep.subr.mxu0 0.0
    %2633 = vmatpush1.msra.mxu0 0.0
    %2634 = vmatprep.subr.mxu0 0.0
    %2635 = vmatpush1.msra.mxu0 0.0
    %2636 = vmatprep.subr.mxu0 0.0
    %2637 = vmatpush1.msra.mxu0 0.0
    %2638 = vmatprep.subr.mxu0 0.0
    %2639 = vmatpush1.msra.mxu0 0.0
    %2640 = vmatprep.subr.mxu0 0.0
    %2641 = vmatpush1.msra.mxu0 0.0
    %2642 = vmatprep.subr.mxu0 0.0
    %2643 = vmatpush1.msra.mxu0 0.0
    %2644 = vmatprep.subr.mxu0 0.0
    %2645 = vmatpush1.msra.mxu0 0.0
    %2646 = vmatprep.subr.mxu0 0.0
    %2647 = vmatpush1.msra.mxu0 0.0
    %2648 = vmatprep.subr.mxu0 0.0
    %2649 = vmatpush1.msra.mxu0 0.0
    %2650 = vmatprep.subr.mxu0 0.0
    %2651 = vmatpush1.msra.mxu0 0.0
    %2652 = vmatprep.subr.mxu0 0.0
    %2653 = vmatpush1.msra.mxu0 0.0
    %2654 = vmatprep.subr.mxu0 0.0
    %2655 = vmatpush1.msra.mxu0 0.0
    %2656 = vmatprep.subr.mxu0 0.0
    %2657 = vmatpush1.msra.mxu0 0.0
    %2658 = vmatprep.subr.mxu0 0.0
    %2659 = vmatpush1.msra.mxu0 0.0
    %2660 = vmatprep.subr.mxu0 0.0
    %2661 = vmatpush1.msra.mxu0 0.0
    %2662 = vmatprep.subr.mxu0 0.0
    %2663 = vmatpush1.msra.mxu0 0.0
    %2664 = vmatprep.subr.mxu0 0.0
    %2665 = vmatpush1.msra.mxu0 0.0
    %2666 = vmatprep.subr.mxu0 0.0
    %2667 = vmatpush1.msra.mxu0 0.0
    %2668 = vmatprep.subr.mxu0 0.0
    %2669 = vmatpush1.msra.mxu0 0.0
    %2670 = vmatprep.mubr.f32.mxu0 0.0
    %2671 = vmatmul.mubr.f32.gmra.mrb[0].mxu0 %v83
    %v2672 = vpop.f32.mrb[0].mxu0
    %v2673 = vadd.f32 0.0, %v2672
    %v2674 = vpop.f32.mrb[0].mxu0
    %v2675 = vadd.f32 0.0, %v2674
    %2676 = vdwg.mxu0
    %2677 = vmatprep.subr.mxu0 %v2533
    %2678 = vmatpush1.msra.mxu0 %v2530
    %2679 = vmatprep.subr.mxu0 0.0
    %2680 = vmatpush1.msra.mxu0 0.0
    %2681 = vmatprep.subr.mxu0 0.0
    %2682 = vmatpush1.msra.mxu0 0.0
    %2683 = vmatprep.subr.mxu0 0.0
    %2684 = vmatpush1.msra.mxu0 0.0
    %2685 = vmatprep.subr.mxu0 0.0
    %2686 = vmatpush1.msra.mxu0 0.0
    %2687 = vmatprep.subr.mxu0 0.0
    %2688 = vmatpush1.msra.mxu0 0.0
    %2689 = vmatprep.subr.mxu0 0.0
    %2690 = vmatpush1.msra.mxu0 0.0
    %2691 = vmatprep.subr.mxu0 0.0
    %2692 = vmatpush1.msra.mxu0 0.0
    %2693 = vmatprep.subr.mxu0 0.0
    %2694 = vmatpush1.msra.mxu0 0.0
    %2695 = vmatprep.subr.mxu0 0.0
    %2696 = vmatpush1.msra.mxu0 0.0
    %2697 = vmatprep.subr.mxu0 0.0
    %2698 = vmatpush1.msra.mxu0 0.0
    %2699 = vmatprep.subr.mxu0 0.0
    %2700 = vmatpush1.msra.mxu0 0.0
    %2701 = vmatprep.subr.mxu0 0.0
    %2702 = vmatpush1.msra.mxu0 0.0
    %2703 = vmatprep.subr.mxu0 0.0
    %2704 = vmatpush1.msra.mxu0 0.0
    %2705 = vmatprep.subr.mxu0 0.0
    %2706 = vmatpush1.msra.mxu0 0.0
    %2707 = vmatprep.subr.mxu0 0.0
    %2708 = vmatpush1.msra.mxu0 0.0
    %2709 = vmatprep.subr.mxu0 0.0
    %2710 = vmatpush1.msra.mxu0 0.0
    %2711 = vmatprep.subr.mxu0 0.0
    %2712 = vmatpush1.msra.mxu0 0.0
    %2713 = vmatprep.subr.mxu0 0.0
    %2714 = vmatpush1.msra.mxu0 0.0
    %2715 = vmatprep.subr.mxu0 0.0
    %2716 = vmatpush1.msra.mxu0 0.0
    %2717 = vmatprep.subr.mxu0 0.0
    %2718 = vmatpush1.msra.mxu0 0.0
    %2719 = vmatprep.subr.mxu0 0.0
    %2720 = vmatpush1.msra.mxu0 0.0
    %2721 = vmatprep.subr.mxu0 0.0
    %2722 = vmatpush1.msra.mxu0 0.0
    %2723 = vmatprep.subr.mxu0 0.0
    %2724 = vmatpush1.msra.mxu0 0.0
    %2725 = vmatprep.subr.mxu0 0.0
    %2726 = vmatpush1.msra.mxu0 0.0
    %2727 = vmatprep.subr.mxu0 0.0
    %2728 = vmatpush1.msra.mxu0 0.0
    %2729 = vmatprep.subr.mxu0 0.0
    %2730 = vmatpush1.msra.mxu0 0.0
    %2731 = vmatprep.subr.mxu0 0.0
    %2732 = vmatpush1.msra.mxu0 0.0
    %2733 = vmatprep.subr.mxu0 0.0
    %2734 = vmatpush1.msra.mxu0 0.0
    %2735 = vmatprep.subr.mxu0 0.0
    %2736 = vmatpush1.msra.mxu0 0.0
    %2737 = vmatprep.subr.mxu0 0.0
    %2738 = vmatpush1.msra.mxu0 0.0
    %2739 = vmatprep.subr.mxu0 0.0
    %2740 = vmatpush1.msra.mxu0 0.0
    %2741 = vmatprep.mubr.f32.mxu0 0.0
    %2742 = vmatmul.mubr.f32.gmra.mrb[0].mxu0 %v83
    %v2743 = vpop.f32.mrb[0].mxu0
    %v2744 = vadd.f32 0.0, %v2743
    %v2745 = vpop.f32.mrb[0].mxu0
    %v2746 = vadd.f32 0.0, %v2745
    %2747 = vdwg.mxu0
    %v2749 = vsel %vm85, %v2498, 0
    %v2752 = vsel %vm85, %v2497, 0
    %v2755 = vsel %vm85, %v2496, 0
    %v2758 = vsel %vm85, %v2495, 0
    %v2761 = vsel %vm85, %v2494, 0
    %v2764 = vsel %vm85, %v2493, 0
    %2766 = vmatprep.subr.mxu0 %v2752
    %2767 = vmatpush1.msra.mxu0 %v2749
    %2768 = vmatprep.subr.mxu0 0.0
    %2769 = vmatpush1.msra.mxu0 0.0
    %2770 = vmatprep.subr.mxu0 0.0
    %2771 = vmatpush1.msra.mxu0 0.0
    %2772 = vmatprep.subr.mxu0 0.0
    %2773 = vmatpush1.msra.mxu0 0.0
    %2774 = vmatprep.subr.mxu0 0.0
    %2775 = vmatpush1.msra.mxu0 0.0
    %2776 = vmatprep.subr.mxu0 0.0
    %2777 = vmatpush1.msra.mxu0 0.0
    %2778 = vmatprep.subr.mxu0 0.0
    %2779 = vmatpush1.msra.mxu0 0.0
    %2780 = vmatprep.subr.mxu0 0.0
    %2781 = vmatpush1.msra.mxu0 0.0
    %2782 = vmatprep.subr.mxu0 0.0
    %2783 = vmatpush1.msra.mxu0 0.0
    %2784 = vmatprep.subr.mxu0 0.0
    %2785 = vmatpush1.msra.mxu0 0.0
    %2786 = vmatprep.subr.mxu0 0.0
    %2787 = vmatpush1.msra.mxu0 0.0
    %2788 = vmatprep.subr.mxu0 0.0
    %2789 = vmatpush1.msra.mxu0 0.0
    %2790 = vmatprep.subr.mxu0 0.0
    %2791 = vmatpush1.msra.mxu0 0.0
    %2792 = vmatprep.subr.mxu0 0.0
    %2793 = vmatpush1.msra.mxu0 0.0
    %2794 = vmatprep.subr.mxu0 0.0
    %2795 = vmatpush1.msra.mxu0 0.0
    %2796 = vmatprep.subr.mxu0 0.0
    %2797 = vmatpush1.msra.mxu0 0.0
    %2798 = vmatprep.subr.mxu0 0.0
    %2799 = vmatpush1.msra.mxu0 0.0
    %2800 = vmatprep.subr.mxu0 0.0
    %2801 = vmatpush1.msra.mxu0 0.0
    %2802 = vmatprep.subr.mxu0 0.0
    %2803 = vmatpush1.msra.mxu0 0.0
    %2804 = vmatprep.subr.mxu0 0.0
    %2805 = vmatpush1.msra.mxu0 0.0
    %2806 = vmatprep.subr.mxu0 0.0
    %2807 = vmatpush1.msra.mxu0 0.0
    %2808 = vmatprep.subr.mxu0 0.0
    %2809 = vmatpush1.msra.mxu0 0.0
    %2810 = vmatprep.subr.mxu0 0.0
    %2811 = vmatpush1.msra.mxu0 0.0
    %2812 = vmatprep.subr.mxu0 0.0
    %2813 = vmatpush1.msra.mxu0 0.0
    %2814 = vmatprep.subr.mxu0 0.0
    %2815 = vmatpush1.msra.mxu0 0.0
    %2816 = vmatprep.subr.mxu0 0.0
    %2817 = vmatpush1.msra.mxu0 0.0
    %2818 = vmatprep.subr.mxu0 0.0
    %2819 = vmatpush1.msra.mxu0 0.0
    %2820 = vmatprep.subr.mxu0 0.0
    %2821 = vmatpush1.msra.mxu0 0.0
    %2822 = vmatprep.subr.mxu0 0.0
    %2823 = vmatpush1.msra.mxu0 0.0
    %2824 = vmatprep.subr.mxu0 0.0
    %2825 = vmatpush1.msra.mxu0 0.0
    %2826 = vmatprep.subr.mxu0 0.0
    %2827 = vmatpush1.msra.mxu0 0.0
    %2828 = vmatprep.subr.mxu0 0.0
    %2829 = vmatpush1.msra.mxu0 0.0
    %2830 = vmatprep.mubr.f32.mxu0 0.0
    %2831 = vmatmul.mubr.f32.gmra.mrb[0].mxu0 %v318
    %v2832 = vpop.f32.mrb[0].mxu0
    %v2833 = vadd.f32 %v2602, %v2832
    %v2834 = vpop.f32.mrb[0].mxu0
    %v2835 = vadd.f32 %v2604, %v2834
    %2836 = vdwg.mxu0
    %2837 = vmatprep.subr.mxu0 %v2758
    %2838 = vmatpush1.msra.mxu0 %v2755
    %2839 = vmatprep.subr.mxu0 0.0
    %2840 = vmatpush1.msra.mxu0 0.0
    %2841 = vmatprep.subr.mxu0 0.0
    %2842 = vmatpush1.msra.mxu0 0.0
    %2843 = vmatprep.subr.mxu0 0.0
    %2844 = vmatpush1.msra.mxu0 0.0
    %2845 = vmatprep.subr.mxu0 0.0
    %2846 = vmatpush1.msra.mxu0 0.0
    %2847 = vmatprep.subr.mxu0 0.0
    %2848 = vmatpush1.msra.mxu0 0.0
    %2849 = vmatprep.subr.mxu0 0.0
    %2850 = vmatpush1.msra.mxu0 0.0
    %2851 = vmatprep.subr.mxu0 0.0
    %2852 = vmatpush1.msra.mxu0 0.0
    %2853 = vmatprep.subr.mxu0 0.0
    %2854 = vmatpush1.msra.mxu0 0.0
    %2855 = vmatprep.subr.mxu0 0.0
    %2856 = vmatpush1.msra.mxu0 0.0
    %2857 = vmatprep.subr.mxu0 0.0
    %2858 = vmatpush1.msra.mxu0 0.0
    %2859 = vmatprep.subr.mxu0 0.0
    %2860 = vmatpush1.msra.mxu0 0.0
    %2861 = vmatprep.subr.mxu0 0.0
    %2862 = vmatpush1.msra.mxu0 0.0
    %2863 = vmatprep.subr.mxu0 0.0
    %2864 = vmatpush1.msra.mxu0 0.0
    %2865 = vmatprep.subr.mxu0 0.0
    %2866 = vmatpush1.msra.mxu0 0.0
    %2867 = vmatprep.subr.mxu0 0.0
    %2868 = vmatpush1.msra.mxu0 0.0
    %2869 = vmatprep.subr.mxu0 0.0
    %2870 = vmatpush1.msra.mxu0 0.0
    %2871 = vmatprep.subr.mxu0 0.0
    %2872 = vmatpush1.msra.mxu0 0.0
    %2873 = vmatprep.subr.mxu0 0.0
    %2874 = vmatpush1.msra.mxu0 0.0
    %2875 = vmatprep.subr.mxu0 0.0
    %2876 = vmatpush1.msra.mxu0 0.0
    %2877 = vmatprep.subr.mxu0 0.0
    %2878 = vmatpush1.msra.mxu0 0.0
    %2879 = vmatprep.subr.mxu0 0.0
    %2880 = vmatpush1.msra.mxu0 0.0
    %2881 = vmatprep.subr.mxu0 0.0
    %2882 = vmatpush1.msra.mxu0 0.0
    %2883 = vmatprep.subr.mxu0 0.0
    %2884 = vmatpush1.msra.mxu0 0.0
    %2885 = vmatprep.subr.mxu0 0.0
    %2886 = vmatpush1.msra.mxu0 0.0
    %2887 = vmatprep.subr.mxu0 0.0
    %2888 = vmatpush1.msra.mxu0 0.0
    %2889 = vmatprep.subr.mxu0 0.0
    %2890 = vmatpush1.msra.mxu0 0.0
    %2891 = vmatprep.subr.mxu0 0.0
    %2892 = vmatpush1.msra.mxu0 0.0
    %2893 = vmatprep.subr.mxu0 0.0
    %2894 = vmatpush1.msra.mxu0 0.0
    %2895 = vmatprep.subr.mxu0 0.0
    %2896 = vmatpush1.msra.mxu0 0.0
    %2897 = vmatprep.subr.mxu0 0.0
    %2898 = vmatpush1.msra.mxu0 0.0
    %2899 = vmatprep.subr.mxu0 0.0
    %2900 = vmatpush1.msra.mxu0 0.0
    %2901 = vmatprep.mubr.f32.mxu0 0.0
    %2902 = vmatmul.mubr.f32.gmra.mrb[0].mxu0 %v318
    %v2903 = vpop.f32.mrb[0].mxu0
    %v2904 = vadd.f32 %v2673, %v2903
    %v2905 = vpop.f32.mrb[0].mxu0
    %v2906 = vadd.f32 %v2675, %v2905
    %2907 = vdwg.mxu0
    %2908 = vmatprep.subr.mxu0 %v2764
    %2909 = vmatpush1.msra.mxu0 %v2761
    %2910 = vmatprep.subr.mxu0 0.0
    %2911 = vmatpush1.msra.mxu0 0.0
    %2912 = vmatprep.subr.mxu0 0.0
    %2913 = vmatpush1.msra.mxu0 0.0
    %2914 = vmatprep.subr.mxu0 0.0
    %2915 = vmatpush1.msra.mxu0 0.0
    %2916 = vmatprep.subr.mxu0 0.0
    %2917 = vmatpush1.msra.mxu0 0.0
    %2918 = vmatprep.subr.mxu0 0.0
    %2919 = vmatpush1.msra.mxu0 0.0
    %2920 = vmatprep.subr.mxu0 0.0
    %2921 = vmatpush1.msra.mxu0 0.0
    %2922 = vmatprep.subr.mxu0 0.0
    %2923 = vmatpush1.msra.mxu0 0.0
    %2924 = vmatprep.subr.mxu0 0.0
    %2925 = vmatpush1.msra.mxu0 0.0
    %2926 = vmatprep.subr.mxu0 0.0
    %2927 = vmatpush1.msra.mxu0 0.0
    %2928 = vmatprep.subr.mxu0 0.0
    %2929 = vmatpush1.msra.mxu0 0.0
    %2930 = vmatprep.subr.mxu0 0.0
    %2931 = vmatpush1.msra.mxu0 0.0
    %2932 = vmatprep.subr.mxu0 0.0
    %2933 = vmatpush1.msra.mxu0 0.0
    %2934 = vmatprep.subr.mxu0 0.0
    %2935 = vmatpush1.msra.mxu0 0.0
    %2936 = vmatprep.subr.mxu0 0.0
    %2937 = vmatpush1.msra.mxu0 0.0
    %2938 = vmatprep.subr.mxu0 0.0
    %2939 = vmatpush1.msra.mxu0 0.0
    %2940 = vmatprep.subr.mxu0 0.0
    %2941 = vmatpush1.msra.mxu0 0.0
    %2942 = vmatprep.subr.mxu0 0.0
    %2943 = vmatpush1.msra.mxu0 0.0
    %2944 = vmatprep.subr.mxu0 0.0
    %2945 = vmatpush1.msra.mxu0 0.0
    %2946 = vmatprep.subr.mxu0 0.0
    %2947 = vmatpush1.msra.mxu0 0.0
    %2948 = vmatprep.subr.mxu0 0.0
    %2949 = vmatpush1.msra.mxu0 0.0
    %2950 = vmatprep.subr.mxu0 0.0
    %2951 = vmatpush1.msra.mxu0 0.0
    %2952 = vmatprep.subr.mxu0 0.0
    %2953 = vmatpush1.msra.mxu0 0.0
    %2954 = vmatprep.subr.mxu0 0.0
    %2955 = vmatpush1.msra.mxu0 0.0
    %2956 = vmatprep.subr.mxu0 0.0
    %2957 = vmatpush1.msra.mxu0 0.0
    %2958 = vmatprep.subr.mxu0 0.0
    %2959 = vmatpush1.msra.mxu0 0.0
    %2960 = vmatprep.subr.mxu0 0.0
    %2961 = vmatpush1.msra.mxu0 0.0
    %2962 = vmatprep.subr.mxu0 0.0
    %2963 = vmatpush1.msra.mxu0 0.0
    %2964 = vmatprep.subr.mxu0 0.0
    %2965 = vmatpush1.msra.mxu0 0.0
    %2966 = vmatprep.subr.mxu0 0.0
    %2967 = vmatpush1.msra.mxu0 0.0
    %2968 = vmatprep.subr.mxu0 0.0
    %2969 = vmatpush1.msra.mxu0 0.0
    %2970 = vmatprep.subr.mxu0 0.0
    %2971 = vmatpush1.msra.mxu0 0.0
    %2972 = vmatprep.mubr.f32.mxu0 0.0
    %2973 = vmatmul.mubr.f32.gmra.mrb[0].mxu0 %v318
    %v2974 = vpop.f32.mrb[0].mxu0
    %v2975 = vadd.f32 %v2744, %v2974
    %v2976 = vpop.f32.mrb[0].mxu0
    %v2977 = vadd.f32 %v2746, %v2976
    %2978 = vdwg.mxu0
    %2979 = vrot.lane.b32.xlu0 %v2475, 17
    %v2980 = vpop.permute.xlu0 %2979
    %2981 = vrot.lane.b32.xlu0 %v2476, 17
    %v2982 = vpop.permute.xlu0 %2981
    %2983 = vrot.lane.b32.xlu0 %v2477, 17
    %v2984 = vpop.permute.xlu0 %2983
    %2985 = vrot.lane.b32.xlu0 %v2478, 17
    %v2986 = vpop.permute.xlu0 %2985
    %2987 = vrot.lane.b32.xlu0 %v2479, 17
    %v2988 = vpop.permute.xlu0 %2987
    %2989 = vrot.lane.b32.xlu0 %v2480, 17
    %v2990 = vpop.permute.xlu0 %2989
    %v2991 = vsel %vm563, %v2988, %v2990
    %v2992 = vsel %vm563, %v2986, %v2988
    %v2993 = vsel %vm563, %v2984, %v2986
    %v2994 = vsel %vm563, %v2982, %v2984
    %v2995 = vsel %vm563, %v2980, %v2982
    %v2996 = vsel %vm563, %v2990, %v2980
    %v2998 = vsel %vm85, %v2996, 0
    %v3001 = vsel %vm85, %v2995, 0
    %v3004 = vsel %vm85, %v2994, 0
    %v3007 = vsel %vm85, %v2993, 0
    %v3010 = vsel %vm85, %v2992, 0
    %v3013 = vsel %vm85, %v2991, 0
    %3015 = vmatprep.subr.mxu0 %v3001
    %3016 = vmatpush1.msra.mxu0 %v2998
    %3017 = vmatprep.subr.mxu0 0.0
    %3018 = vmatpush1.msra.mxu0 0.0
    %3019 = vmatprep.subr.mxu0 0.0
    %3020 = vmatpush1.msra.mxu0 0.0
    %3021 = vmatprep.subr.mxu0 0.0
    %3022 = vmatpush1.msra.mxu0 0.0
    %3023 = vmatprep.subr.mxu0 0.0
    %3024 = vmatpush1.msra.mxu0 0.0
    %3025 = vmatprep.subr.mxu0 0.0
    %3026 = vmatpush1.msra.mxu0 0.0
    %3027 = vmatprep.subr.mxu0 0.0
    %3028 = vmatpush1.msra.mxu0 0.0
    %3029 = vmatprep.subr.mxu0 0.0
    %3030 = vmatpush1.msra.mxu0 0.0
    %3031 = vmatprep.subr.mxu0 0.0
    %3032 = vmatpush1.msra.mxu0 0.0
    %3033 = vmatprep.subr.mxu0 0.0
    %3034 = vmatpush1.msra.mxu0 0.0
    %3035 = vmatprep.subr.mxu0 0.0
    %3036 = vmatpush1.msra.mxu0 0.0
    %3037 = vmatprep.subr.mxu0 0.0
    %3038 = vmatpush1.msra.mxu0 0.0
    %3039 = vmatprep.subr.mxu0 0.0
    %3040 = vmatpush1.msra.mxu0 0.0
    %3041 = vmatprep.subr.mxu0 0.0
    %3042 = vmatpush1.msra.mxu0 0.0
    %3043 = vmatprep.subr.mxu0 0.0
    %3044 = vmatpush1.msra.mxu0 0.0
    %3045 = vmatprep.subr.mxu0 0.0
    %3046 = vmatpush1.msra.mxu0 0.0
    %3047 = vmatprep.subr.mxu0 0.0
    %3048 = vmatpush1.msra.mxu0 0.0
    %3049 = vmatprep.subr.mxu0 0.0
    %3050 = vmatpush1.msra.mxu0 0.0
    %3051 = vmatprep.subr.mxu0 0.0
    %3052 = vmatpush1.msra.mxu0 0.0
    %3053 = vmatprep.subr.mxu0 0.0
    %3054 = vmatpush1.msra.mxu0 0.0
    %3055 = vmatprep.subr.mxu0 0.0
    %3056 = vmatpush1.msra.mxu0 0.0
    %3057 = vmatprep.subr.mxu0 0.0
    %3058 = vmatpush1.msra.mxu0 0.0
    %3059 = vmatprep.subr.mxu0 0.0
    %3060 = vmatpush1.msra.mxu0 0.0
    %3061 = vmatprep.subr.mxu0 0.0
    %3062 = vmatpush1.msra.mxu0 0.0
    %3063 = vmatprep.subr.mxu0 0.0
    %3064 = vmatpush1.msra.mxu0 0.0
    %3065 = vmatprep.subr.mxu0 0.0
    %3066 = vmatpush1.msra.mxu0 0.0
    %3067 = vmatprep.subr.mxu0 0.0
    %3068 = vmatpush1.msra.mxu0 0.0
    %3069 = vmatprep.subr.mxu0 0.0
    %3070 = vmatpush1.msra.mxu0 0.0
    %3071 = vmatprep.subr.mxu0 0.0
    %3072 = vmatpush1.msra.mxu0 0.0
    %3073 = vmatprep.subr.mxu0 0.0
    %3074 = vmatpush1.msra.mxu0 0.0
    %3075 = vmatprep.subr.mxu0 0.0
    %3076 = vmatpush1.msra.mxu0 0.0
    %3077 = vmatprep.subr.mxu0 0.0
    %3078 = vmatpush1.msra.mxu0 0.0
    %3079 = vmatprep.mubr.f32.mxu0 0.0
    %3080 = vmatmul.mubr.f32.gmra.mrb[0].mxu0 %v573
    %v3081 = vpop.f32.mrb[0].mxu0
    %v3082 = vadd.f32 0.0, %v3081
    %v3083 = vpop.f32.mrb[0].mxu0
    %v3084 = vadd.f32 0.0, %v3083
    %3085 = vdwg.mxu0
    %3086 = vmatprep.subr.mxu0 %v3007
    %3087 = vmatpush1.msra.mxu0 %v3004
    %3088 = vmatprep.subr.mxu0 0.0
    %3089 = vmatpush1.msra.mxu0 0.0
    %3090 = vmatprep.subr.mxu0 0.0
    %3091 = vmatpush1.msra.mxu0 0.0
    %3092 = vmatprep.subr.mxu0 0.0
    %3093 = vmatpush1.msra.mxu0 0.0
    %3094 = vmatprep.subr.mxu0 0.0
    %3095 = vmatpush1.msra.mxu0 0.0
    %3096 = vmatprep.subr.mxu0 0.0
    %3097 = vmatpush1.msra.mxu0 0.0
    %3098 = vmatprep.subr.mxu0 0.0
    %3099 = vmatpush1.msra.mxu0 0.0
    %3100 = vmatprep.subr.mxu0 0.0
    %3101 = vmatpush1.msra.mxu0 0.0
    %3102 = vmatprep.subr.mxu0 0.0
    %3103 = vmatpush1.msra.mxu0 0.0
    %3104 = vmatprep.subr.mxu0 0.0
    %3105 = vmatpush1.msra.mxu0 0.0
    %3106 = vmatprep.subr.mxu0 0.0
    %3107 = vmatpush1.msra.mxu0 0.0
    %3108 = vmatprep.subr.mxu0 0.0
    %3109 = vmatpush1.msra.mxu0 0.0
    %3110 = vmatprep.subr.mxu0 0.0
    %3111 = vmatpush1.msra.mxu0 0.0
    %3112 = vmatprep.subr.mxu0 0.0
    %3113 = vmatpush1.msra.mxu0 0.0
    %3114 = vmatprep.subr.mxu0 0.0
    %3115 = vmatpush1.msra.mxu0 0.0
    %3116 = vmatprep.subr.mxu0 0.0
    %3117 = vmatpush1.msra.mxu0 0.0
    %3118 = vmatprep.subr.mxu0 0.0
    %3119 = vmatpush1.msra.mxu0 0.0
    %3120 = vmatprep.subr.mxu0 0.0
    %3121 = vmatpush1.msra.mxu0 0.0
    %3122 = vmatprep.subr.mxu0 0.0
    %3123 = vmatpush1.msra.mxu0 0.0
    %3124 = vmatprep.subr.mxu0 0.0
    %3125 = vmatpush1.msra.mxu0 0.0
    %3126 = vmatprep.subr.mxu0 0.0
    %3127 = vmatpush1.msra.mxu0 0.0
    %3128 = vmatprep.subr.mxu0 0.0
    %3129 = vmatpush1.msra.mxu0 0.0
    %3130 = vmatprep.subr.mxu0 0.0
    %3131 = vmatpush1.msra.mxu0 0.0
    %3132 = vmatprep.subr.mxu0 0.0
    %3133 = vmatpush1.msra.mxu0 0.0
    %3134 = vmatprep.subr.mxu0 0.0
    %3135 = vmatpush1.msra.mxu0 0.0
    %3136 = vmatprep.subr.mxu0 0.0
    %3137 = vmatpush1.msra.mxu0 0.0
    %3138 = vmatprep.subr.mxu0 0.0
    %3139 = vmatpush1.msra.mxu0 0.0
    %3140 = vmatprep.subr.mxu0 0.0
    %3141 = vmatpush1.msra.mxu0 0.0
    %3142 = vmatprep.subr.mxu0 0.0
    %3143 = vmatpush1.msra.mxu0 0.0
    %3144 = vmatprep.subr.mxu0 0.0
    %3145 = vmatpush1.msra.mxu0 0.0
    %3146 = vmatprep.subr.mxu0 0.0
    %3147 = vmatpush1.msra.mxu0 0.0
    %3148 = vmatprep.subr.mxu0 0.0
    %3149 = vmatpush1.msra.mxu0 0.0
    %3150 = vmatprep.mubr.f32.mxu0 0.0
    %3151 = vmatmul.mubr.f32.gmra.mrb[0].mxu0 %v573
    %v3152 = vpop.f32.mrb[0].mxu0
    %v3153 = vadd.f32 0.0, %v3152
    %v3154 = vpop.f32.mrb[0].mxu0
    %v3155 = vadd.f32 0.0, %v3154
    %3156 = vdwg.mxu0
    %3157 = vmatprep.subr.mxu0 %v3013
    %3158 = vmatpush1.msra.mxu0 %v3010
    %3159 = vmatprep.subr.mxu0 0.0
    %3160 = vmatpush1.msra.mxu0 0.0
    %3161 = vmatprep.subr.mxu0 0.0
    %3162 = vmatpush1.msra.mxu0 0.0
    %3163 = vmatprep.subr.mxu0 0.0
    %3164 = vmatpush1.msra.mxu0 0.0
    %3165 = vmatprep.subr.mxu0 0.0
    %3166 = vmatpush1.msra.mxu0 0.0
    %3167 = vmatprep.subr.mxu0 0.0
    %3168 = vmatpush1.msra.mxu0 0.0
    %3169 = vmatprep.subr.mxu0 0.0
    %3170 = vmatpush1.msra.mxu0 0.0
    %3171 = vmatprep.subr.mxu0 0.0
    %3172 = vmatpush1.msra.mxu0 0.0
    %3173 = vmatprep.subr.mxu0 0.0
    %3174 = vmatpush1.msra.mxu0 0.0
    %3175 = vmatprep.subr.mxu0 0.0
    %3176 = vmatpush1.msra.mxu0 0.0
    %3177 = vmatprep.subr.mxu0 0.0
    %3178 = vmatpush1.msra.mxu0 0.0
    %3179 = vmatprep.subr.mxu0 0.0
    %3180 = vmatpush1.msra.mxu0 0.0
    %3181 = vmatprep.subr.mxu0 0.0
    %3182 = vmatpush1.msra.mxu0 0.0
    %3183 = vmatprep.subr.mxu0 0.0
    %3184 = vmatpush1.msra.mxu0 0.0
    %3185 = vmatprep.subr.mxu0 0.0
    %3186 = vmatpush1.msra.mxu0 0.0
    %3187 = vmatprep.subr.mxu0 0.0
    %3188 = vmatpush1.msra.mxu0 0.0
    %3189 = vmatprep.subr.mxu0 0.0
    %3190 = vmatpush1.msra.mxu0 0.0
    %3191 = vmatprep.subr.mxu0 0.0
    %3192 = vmatpush1.msra.mxu0 0.0
    %3193 = vmatprep.subr.mxu0 0.0
    %3194 = vmatpush1.msra.mxu0 0.0
    %3195 = vmatprep.subr.mxu0 0.0
    %3196 = vmatpush1.msra.mxu0 0.0
    %3197 = vmatprep.subr.mxu0 0.0
    %3198 = vmatpush1.msra.mxu0 0.0
    %3199 = vmatprep.subr.mxu0 0.0
    %3200 = vmatpush1.msra.mxu0 0.0
    %3201 = vmatprep.subr.mxu0 0.0
    %3202 = vmatpush1.msra.mxu0 0.0
    %3203 = vmatprep.subr.mxu0 0.0
    %3204 = vmatpush1.msra.mxu0 0.0
    %3205 = vmatprep.subr.mxu0 0.0
    %3206 = vmatpush1.msra.mxu0 0.0
    %3207 = vmatprep.subr.mxu0 0.0
    %3208 = vmatpush1.msra.mxu0 0.0
    %3209 = vmatprep.subr.mxu0 0.0
    %3210 = vmatpush1.msra.mxu0 0.0
    %3211 = vmatprep.subr.mxu0 0.0
    %3212 = vmatpush1.msra.mxu0 0.0
    %3213 = vmatprep.subr.mxu0 0.0
    %3214 = vmatpush1.msra.mxu0 0.0
    %3215 = vmatprep.subr.mxu0 0.0
    %3216 = vmatpush1.msra.mxu0 0.0
    %3217 = vmatprep.subr.mxu0 0.0
    %3218 = vmatpush1.msra.mxu0 0.0
    %3219 = vmatprep.subr.mxu0 0.0
    %3220 = vmatpush1.msra.mxu0 0.0
    %3221 = vmatprep.mubr.f32.mxu0 0.0
    %3222 = vmatmul.mubr.f32.gmra.mrb[0].mxu0 %v573
    %v3223 = vpop.f32.mrb[0].mxu0
    %v3224 = vadd.f32 0.0, %v3223
    %v3225 = vpop.f32.mrb[0].mxu0
    %v3226 = vadd.f32 0.0, %v3225
    %3227 = vdwg.mxu0
    %v3228 = vadd.f32 %v2833, %v3082
    %v3229 = vadd.f32 %v2835, %v3084
    %v3230 = vadd.f32 %v2904, %v3153
    %v3231 = vadd.f32 %v2906, %v3155
    %v3232 = vadd.f32 %v2975, %v3224
    %v3233 = vadd.f32 %v2977, %v3226
    %3234 = vrot.lane.b32.xlu0 %v2475, 1
    %v3235 = vpop.permute.xlu0 %3234
    %3236 = vrot.lane.b32.xlu0 %v2476, 1
    %v3237 = vpop.permute.xlu0 %3236
    %3238 = vrot.lane.b32.xlu0 %v2477, 1
    %v3239 = vpop.permute.xlu0 %3238
    %3240 = vrot.lane.b32.xlu0 %v2478, 1
    %v3241 = vpop.permute.xlu0 %3240
    %3242 = vrot.lane.b32.xlu0 %v2479, 1
    %v3243 = vpop.permute.xlu0 %3242
    %3244 = vrot.lane.b32.xlu0 %v2480, 1
    %v3245 = vpop.permute.xlu0 %3244
    %v3246 = vsel %vm824, %v3243, %v3245
    %v3247 = vsel %vm824, %v3241, %v3243
    %v3248 = vsel %vm824, %v3239, %v3241
    %v3249 = vsel %vm824, %v3237, %v3239
    %v3250 = vsel %vm824, %v3235, %v3237
    %v3251 = vsel %vm824, %v3245, %v3235
    %v3253 = vsel %vm85, %v3251, 0
    %v3256 = vsel %vm85, %v3250, 0
    %v3259 = vsel %vm85, %v3249, 0
    %v3262 = vsel %vm85, %v3248, 0
    %v3265 = vsel %vm85, %v3247, 0
    %v3268 = vsel %vm85, %v3246, 0
    %3270 = vmatprep.subr.mxu0 %v3256
    %3271 = vmatpush1.msra.mxu0 %v3253
    %3272 = vmatprep.subr.mxu0 0.0
    %3273 = vmatpush1.msra.mxu0 0.0
    %3274 = vmatprep.subr.mxu0 0.0
    %3275 = vmatpush1.msra.mxu0 0.0
    %3276 = vmatprep.subr.mxu0 0.0
    %3277 = vmatpush1.msra.mxu0 0.0
    %3278 = vmatprep.subr.mxu0 0.0
    %3279 = vmatpush1.msra.mxu0 0.0
    %3280 = vmatprep.subr.mxu0 0.0
    %3281 = vmatpush1.msra.mxu0 0.0
    %3282 = vmatprep.subr.mxu0 0.0
    %3283 = vmatpush1.msra.mxu0 0.0
    %3284 = vmatprep.subr.mxu0 0.0
    %3285 = vmatpush1.msra.mxu0 0.0
    %3286 = vmatprep.subr.mxu0 0.0
    %3287 = vmatpush1.msra.mxu0 0.0
    %3288 = vmatprep.subr.mxu0 0.0
    %3289 = vmatpush1.msra.mxu0 0.0
    %3290 = vmatprep.subr.mxu0 0.0
    %3291 = vmatpush1.msra.mxu0 0.0
    %3292 = vmatprep.subr.mxu0 0.0
    %3293 = vmatpush1.msra.mxu0 0.0
    %3294 = vmatprep.subr.mxu0 0.0
    %3295 = vmatpush1.msra.mxu0 0.0
    %3296 = vmatprep.subr.mxu0 0.0
    %3297 = vmatpush1.msra.mxu0 0.0
    %3298 = vmatprep.subr.mxu0 0.0
    %3299 = vmatpush1.msra.mxu0 0.0
    %3300 = vmatprep.subr.mxu0 0.0
    %3301 = vmatpush1.msra.mxu0 0.0
    %3302 = vmatprep.subr.mxu0 0.0
    %3303 = vmatpush1.msra.mxu0 0.0
    %3304 = vmatprep.subr.mxu0 0.0
    %3305 = vmatpush1.msra.mxu0 0.0
    %3306 = vmatprep.subr.mxu0 0.0
    %3307 = vmatpush1.msra.mxu0 0.0
    %3308 = vmatprep.subr.mxu0 0.0
    %3309 = vmatpush1.msra.mxu0 0.0
    %3310 = vmatprep.subr.mxu0 0.0
    %3311 = vmatpush1.msra.mxu0 0.0
    %3312 = vmatprep.subr.mxu0 0.0
    %3313 = vmatpush1.msra.mxu0 0.0
    %3314 = vmatprep.subr.mxu0 0.0
    %3315 = vmatpush1.msra.mxu0 0.0
    %3316 = vmatprep.subr.mxu0 0.0
    %3317 = vmatpush1.msra.mxu0 0.0
    %3318 = vmatprep.subr.mxu0 0.0
    %3319 = vmatpush1.msra.mxu0 0.0
    %3320 = vmatprep.subr.mxu0 0.0
    %3321 = vmatpush1.msra.mxu0 0.0
    %3322 = vmatprep.subr.mxu0 0.0
    %3323 = vmatpush1.msra.mxu0 0.0
    %3324 = vmatprep.subr.mxu0 0.0
    %3325 = vmatpush1.msra.mxu0 0.0
    %3326 = vmatprep.subr.mxu0 0.0
    %3327 = vmatpush1.msra.mxu0 0.0
    %3328 = vmatprep.subr.mxu0 0.0
    %3329 = vmatpush1.msra.mxu0 0.0
    %3330 = vmatprep.subr.mxu0 0.0
    %3331 = vmatpush1.msra.mxu0 0.0
    %3332 = vmatprep.subr.mxu0 0.0
    %3333 = vmatpush1.msra.mxu0 0.0
    %3334 = vmatprep.mubr.f32.mxu0 0.0
    %3335 = vmatmul.mubr.f32.gmra.mrb[0].mxu0 %v834
    %v3336 = vpop.f32.mrb[0].mxu0
    %v3337 = vadd.f32 0.0, %v3336
    %v3338 = vpop.f32.mrb[0].mxu0
    %v3339 = vadd.f32 0.0, %v3338
    %3340 = vdwg.mxu0
    %3341 = vmatprep.subr.mxu0 %v3262
    %3342 = vmatpush1.msra.mxu0 %v3259
    %3343 = vmatprep.subr.mxu0 0.0
    %3344 = vmatpush1.msra.mxu0 0.0
    %3345 = vmatprep.subr.mxu0 0.0
    %3346 = vmatpush1.msra.mxu0 0.0
    %3347 = vmatprep.subr.mxu0 0.0
    %3348 = vmatpush1.msra.mxu0 0.0
    %3349 = vmatprep.subr.mxu0 0.0
    %3350 = vmatpush1.msra.mxu0 0.0
    %3351 = vmatprep.subr.mxu0 0.0
    %3352 = vmatpush1.msra.mxu0 0.0
    %3353 = vmatprep.subr.mxu0 0.0
    %3354 = vmatpush1.msra.mxu0 0.0
    %3355 = vmatprep.subr.mxu0 0.0
    %3356 = vmatpush1.msra.mxu0 0.0
    %3357 = vmatprep.subr.mxu0 0.0
    %3358 = vmatpush1.msra.mxu0 0.0
    %3359 = vmatprep.subr.mxu0 0.0
    %3360 = vmatpush1.msra.mxu0 0.0
    %3361 = vmatprep.subr.mxu0 0.0
    %3362 = vmatpush1.msra.mxu0 0.0
    %3363 = vmatprep.subr.mxu0 0.0
    %3364 = vmatpush1.msra.mxu0 0.0
    %3365 = vmatprep.subr.mxu0 0.0
    %3366 = vmatpush1.msra.mxu0 0.0
    %3367 = vmatprep.subr.mxu0 0.0
    %3368 = vmatpush1.msra.mxu0 0.0
    %3369 = vmatprep.subr.mxu0 0.0
    %3370 = vmatpush1.msra.mxu0 0.0
    %3371 = vmatprep.subr.mxu0 0.0
    %3372 = vmatpush1.msra.mxu0 0.0
    %3373 = vmatprep.subr.mxu0 0.0
    %3374 = vmatpush1.msra.mxu0 0.0
    %3375 = vmatprep.subr.mxu0 0.0
    %3376 = vmatpush1.msra.mxu0 0.0
    %3377 = vmatprep.subr.mxu0 0.0
    %3378 = vmatpush1.msra.mxu0 0.0
    %3379 = vmatprep.subr.mxu0 0.0
    %3380 = vmatpush1.msra.mxu0 0.0
    %3381 = vmatprep.subr.mxu0 0.0
    %3382 = vmatpush1.msra.mxu0 0.0
    %3383 = vmatprep.subr.mxu0 0.0
    %3384 = vmatpush1.msra.mxu0 0.0
    %3385 = vmatprep.subr.mxu0 0.0
    %3386 = vmatpush1.msra.mxu0 0.0
    %3387 = vmatprep.subr.mxu0 0.0
    %3388 = vmatpush1.msra.mxu0 0.0
    %3389 = vmatprep.subr.mxu0 0.0
    %3390 = vmatpush1.msra.mxu0 0.0
    %3391 = vmatprep.subr.mxu0 0.0
    %3392 = vmatpush1.msra.mxu0 0.0
    %3393 = vmatprep.subr.mxu0 0.0
    %3394 = vmatpush1.msra.mxu0 0.0
    %3395 = vmatprep.subr.mxu0 0.0
    %3396 = vmatpush1.msra.mxu0 0.0
    %3397 = vmatprep.subr.mxu0 0.0
    %3398 = vmatpush1.msra.mxu0 0.0
    %3399 = vmatprep.subr.mxu0 0.0
    %3400 = vmatpush1.msra.mxu0 0.0
    %3401 = vmatprep.subr.mxu0 0.0
    %3402 = vmatpush1.msra.mxu0 0.0
    %3403 = vmatprep.subr.mxu0 0.0
    %3404 = vmatpush1.msra.mxu0 0.0
    %3405 = vmatprep.mubr.f32.mxu0 0.0
    %3406 = vmatmul.mubr.f32.gmra.mrb[0].mxu0 %v834
    %v3407 = vpop.f32.mrb[0].mxu0
    %v3408 = vadd.f32 0.0, %v3407
    %v3409 = vpop.f32.mrb[0].mxu0
    %v3410 = vadd.f32 0.0, %v3409
    %3411 = vdwg.mxu0
    %3412 = vmatprep.subr.mxu0 %v3268
    %3413 = vmatpush1.msra.mxu0 %v3265
    %3414 = vmatprep.subr.mxu0 0.0
    %3415 = vmatpush1.msra.mxu0 0.0
    %3416 = vmatprep.subr.mxu0 0.0
    %3417 = vmatpush1.msra.mxu0 0.0
    %3418 = vmatprep.subr.mxu0 0.0
    %3419 = vmatpush1.msra.mxu0 0.0
    %3420 = vmatprep.subr.mxu0 0.0
    %3421 = vmatpush1.msra.mxu0 0.0
    %3422 = vmatprep.subr.mxu0 0.0
    %3423 = vmatpush1.msra.mxu0 0.0
    %3424 = vmatprep.subr.mxu0 0.0
    %3425 = vmatpush1.msra.mxu0 0.0
    %3426 = vmatprep.subr.mxu0 0.0
    %3427 = vmatpush1.msra.mxu0 0.0
    %3428 = vmatprep.subr.mxu0 0.0
    %3429 = vmatpush1.msra.mxu0 0.0
    %3430 = vmatprep.subr.mxu0 0.0
    %3431 = vmatpush1.msra.mxu0 0.0
    %3432 = vmatprep.subr.mxu0 0.0
    %3433 = vmatpush1.msra.mxu0 0.0
    %3434 = vmatprep.subr.mxu0 0.0
    %3435 = vmatpush1.msra.mxu0 0.0
    %3436 = vmatprep.subr.mxu0 0.0
    %3437 = vmatpush1.msra.mxu0 0.0
    %3438 = vmatprep.subr.mxu0 0.0
    %3439 = vmatpush1.msra.mxu0 0.0
    %3440 = vmatprep.subr.mxu0 0.0
    %3441 = vmatpush1.msra.mxu0 0.0
    %3442 = vmatprep.subr.mxu0 0.0
    %3443 = vmatpush1.msra.mxu0 0.0
    %3444 = vmatprep.subr.mxu0 0.0
    %3445 = vmatpush1.msra.mxu0 0.0
    %3446 = vmatprep.subr.mxu0 0.0
    %3447 = vmatpush1.msra.mxu0 0.0
    %3448 = vmatprep.subr.mxu0 0.0
    %3449 = vmatpush1.msra.mxu0 0.0
    %3450 = vmatprep.subr.mxu0 0.0
    %3451 = vmatpush1.msra.mxu0 0.0
    %3452 = vmatprep.subr.mxu0 0.0
    %3453 = vmatpush1.msra.mxu0 0.0
    %3454 = vmatprep.subr.mxu0 0.0
    %3455 = vmatpush1.msra.mxu0 0.0
    %3456 = vmatprep.subr.mxu0 0.0
    %3457 = vmatpush1.msra.mxu0 0.0
    %3458 = vmatprep.subr.mxu0 0.0
    %3459 = vmatpush1.msra.mxu0 0.0
    %3460 = vmatprep.subr.mxu0 0.0
    %3461 = vmatpush1.msra.mxu0 0.0
    %3462 = vmatprep.subr.mxu0 0.0
    %3463 = vmatpush1.msra.mxu0 0.0
    %3464 = vmatprep.subr.mxu0 0.0
    %3465 = vmatpush1.msra.mxu0 0.0
    %3466 = vmatprep.subr.mxu0 0.0
    %3467 = vmatpush1.msra.mxu0 0.0
    %3468 = vmatprep.subr.mxu0 0.0
    %3469 = vmatpush1.msra.mxu0 0.0
    %3470 = vmatprep.subr.mxu0 0.0
    %3471 = vmatpush1.msra.mxu0 0.0
    %3472 = vmatprep.subr.mxu0 0.0
    %3473 = vmatpush1.msra.mxu0 0.0
    %3474 = vmatprep.subr.mxu0 0.0
    %3475 = vmatpush1.msra.mxu0 0.0
    %3476 = vmatprep.mubr.f32.mxu0 0.0
    %3477 = vmatmul.mubr.f32.gmra.mrb[0].mxu0 %v834
    %v3478 = vpop.f32.mrb[0].mxu0
    %v3479 = vadd.f32 0.0, %v3478
    %v3480 = vpop.f32.mrb[0].mxu0
    %v3481 = vadd.f32 0.0, %v3480
    %3482 = vdwg.mxu0
    %v3483 = vadd.f32 %v3228, %v3337
    %v3484 = vadd.f32 %v3229, %v3339
    %v3485 = vadd.f32 %v3230, %v3408
    %v3486 = vadd.f32 %v3231, %v3410
    %v3487 = vadd.f32 %v3232, %v3479
    %v3488 = vadd.f32 %v3233, %v3481
    %v3490 = vsel %vm85, %v2475, 0
    %v3493 = vsel %vm85, %v2476, 0
    %v3496 = vsel %vm85, %v2477, 0
    %v3499 = vsel %vm85, %v2478, 0
    %v3502 = vsel %vm85, %v2479, 0
    %v3505 = vsel %vm85, %v2480, 0
    %3507 = vmatprep.subr.mxu0 %v3493
    %3508 = vmatpush1.msra.mxu0 %v3490
    %3509 = vmatprep.subr.mxu0 0.0
    %3510 = vmatpush1.msra.mxu0 0.0
    %3511 = vmatprep.subr.mxu0 0.0
    %3512 = vmatpush1.msra.mxu0 0.0
    %3513 = vmatprep.subr.mxu0 0.0
    %3514 = vmatpush1.msra.mxu0 0.0
    %3515 = vmatprep.subr.mxu0 0.0
    %3516 = vmatpush1.msra.mxu0 0.0
    %3517 = vmatprep.subr.mxu0 0.0
    %3518 = vmatpush1.msra.mxu0 0.0
    %3519 = vmatprep.subr.mxu0 0.0
    %3520 = vmatpush1.msra.mxu0 0.0
    %3521 = vmatprep.subr.mxu0 0.0
    %3522 = vmatpush1.msra.mxu0 0.0
    %3523 = vmatprep.subr.mxu0 0.0
    %3524 = vmatpush1.msra.mxu0 0.0
    %3525 = vmatprep.subr.mxu0 0.0
    %3526 = vmatpush1.msra.mxu0 0.0
    %3527 = vmatprep.subr.mxu0 0.0
    %3528 = vmatpush1.msra.mxu0 0.0
    %3529 = vmatprep.subr.mxu0 0.0
    %3530 = vmatpush1.msra.mxu0 0.0
    %3531 = vmatprep.subr.mxu0 0.0
    %3532 = vmatpush1.msra.mxu0 0.0
    %3533 = vmatprep.subr.mxu0 0.0
    %3534 = vmatpush1.msra.mxu0 0.0
    %3535 = vmatprep.subr.mxu0 0.0
    %3536 = vmatpush1.msra.mxu0 0.0
    %3537 = vmatprep.subr.mxu0 0.0
    %3538 = vmatpush1.msra.mxu0 0.0
    %3539 = vmatprep.subr.mxu0 0.0
    %3540 = vmatpush1.msra.mxu0 0.0
    %3541 = vmatprep.subr.mxu0 0.0
    %3542 = vmatpush1.msra.mxu0 0.0
    %3543 = vmatprep.subr.mxu0 0.0
    %3544 = vmatpush1.msra.mxu0 0.0
    %3545 = vmatprep.subr.mxu0 0.0
    %3546 = vmatpush1.msra.mxu0 0.0
    %3547 = vmatprep.subr.mxu0 0.0
    %3548 = vmatpush1.msra.mxu0 0.0
    %3549 = vmatprep.subr.mxu0 0.0
    %3550 = vmatpush1.msra.mxu0 0.0
    %3551 = vmatprep.subr.mxu0 0.0
    %3552 = vmatpush1.msra.mxu0 0.0
    %3553 = vmatprep.subr.mxu0 0.0
    %3554 = vmatpush1.msra.mxu0 0.0
    %3555 = vmatprep.subr.mxu0 0.0
    %3556 = vmatpush1.msra.mxu0 0.0
    %3557 = vmatprep.subr.mxu0 0.0
    %3558 = vmatpush1.msra.mxu0 0.0
    %3559 = vmatprep.subr.mxu0 0.0
    %3560 = vmatpush1.msra.mxu0 0.0
    %3561 = vmatprep.subr.mxu0 0.0
    %3562 = vmatpush1.msra.mxu0 0.0
    %3563 = vmatprep.subr.mxu0 0.0
    %3564 = vmatpush1.msra.mxu0 0.0
    %3565 = vmatprep.subr.mxu0 0.0
    %3566 = vmatpush1.msra.mxu0 0.0
    %3567 = vmatprep.subr.mxu0 0.0
    %3568 = vmatpush1.msra.mxu0 0.0
    %3569 = vmatprep.subr.mxu0 0.0
    %3570 = vmatpush1.msra.mxu0 0.0
    %3571 = vmatprep.mubr.f32.mxu0 0.0
    %3572 = vmatmul.mubr.f32.gmra.mrb[0].mxu0 %v1076
    %v3573 = vpop.f32.mrb[0].mxu0
    %v3574 = vadd.f32 0.0, %v3573
    %v3575 = vpop.f32.mrb[0].mxu0
    %v3576 = vadd.f32 0.0, %v3575
    %3577 = vdwg.mxu0
    %3578 = vmatprep.subr.mxu0 %v3499
    %3579 = vmatpush1.msra.mxu0 %v3496
    %3580 = vmatprep.subr.mxu0 0.0
    %3581 = vmatpush1.msra.mxu0 0.0
    %3582 = vmatprep.subr.mxu0 0.0
    %3583 = vmatpush1.msra.mxu0 0.0
    %3584 = vmatprep.subr.mxu0 0.0
    %3585 = vmatpush1.msra.mxu0 0.0
    %3586 = vmatprep.subr.mxu0 0.0
    %3587 = vmatpush1.msra.mxu0 0.0
    %3588 = vmatprep.subr.mxu0 0.0
    %3589 = vmatpush1.msra.mxu0 0.0
    %3590 = vmatprep.subr.mxu0 0.0
    %3591 = vmatpush1.msra.mxu0 0.0
    %3592 = vmatprep.subr.mxu0 0.0
    %3593 = vmatpush1.msra.mxu0 0.0
    %3594 = vmatprep.subr.mxu0 0.0
    %3595 = vmatpush1.msra.mxu0 0.0
    %3596 = vmatprep.subr.mxu0 0.0
    %3597 = vmatpush1.msra.mxu0 0.0
    %3598 = vmatprep.subr.mxu0 0.0
    %3599 = vmatpush1.msra.mxu0 0.0
    %3600 = vmatprep.subr.mxu0 0.0
    %3601 = vmatpush1.msra.mxu0 0.0
    %3602 = vmatprep.subr.mxu0 0.0
    %3603 = vmatpush1.msra.mxu0 0.0
    %3604 = vmatprep.subr.mxu0 0.0
    %3605 = vmatpush1.msra.mxu0 0.0
    %3606 = vmatprep.subr.mxu0 0.0
    %3607 = vmatpush1.msra.mxu0 0.0
    %3608 = vmatprep.subr.mxu0 0.0
    %3609 = vmatpush1.msra.mxu0 0.0
    %3610 = vmatprep.subr.mxu0 0.0
    %3611 = vmatpush1.msra.mxu0 0.0
    %3612 = vmatprep.subr.mxu0 0.0
    %3613 = vmatpush1.msra.mxu0 0.0
    %3614 = vmatprep.subr.mxu0 0.0
    %3615 = vmatpush1.msra.mxu0 0.0
    %3616 = vmatprep.subr.mxu0 0.0
    %3617 = vmatpush1.msra.mxu0 0.0
    %3618 = vmatprep.subr.mxu0 0.0
    %3619 = vmatpush1.msra.mxu0 0.0
    %3620 = vmatprep.subr.mxu0 0.0
    %3621 = vmatpush1.msra.mxu0 0.0
    %3622 = vmatprep.subr.mxu0 0.0
    %3623 = vmatpush1.msra.mxu0 0.0
    %3624 = vmatprep.subr.mxu0 0.0
    %3625 = vmatpush1.msra.mxu0 0.0
    %3626 = vmatprep.subr.mxu0 0.0
    %3627 = vmatpush1.msra.mxu0 0.0
    %3628 = vmatprep.subr.mxu0 0.0
    %3629 = vmatpush1.msra.mxu0 0.0
    %3630 = vmatprep.subr.mxu0 0.0
    %3631 = vmatpush1.msra.mxu0 0.0
    %3632 = vmatprep.subr.mxu0 0.0
    %3633 = vmatpush1.msra.mxu0 0.0
    %3634 = vmatprep.subr.mxu0 0.0
    %3635 = vmatpush1.msra.mxu0 0.0
    %3636 = vmatprep.subr.mxu0 0.0
    %3637 = vmatpush1.msra.mxu0 0.0
    %3638 = vmatprep.subr.mxu0 0.0
    %3639 = vmatpush1.msra.mxu0 0.0
    %3640 = vmatprep.subr.mxu0 0.0
    %3641 = vmatpush1.msra.mxu0 0.0
    %3642 = vmatprep.mubr.f32.mxu0 0.0
    %3643 = vmatmul.mubr.f32.gmra.mrb[0].mxu0 %v1076
    %v3644 = vpop.f32.mrb[0].mxu0
    %v3645 = vadd.f32 0.0, %v3644
    %v3646 = vpop.f32.mrb[0].mxu0
    %v3647 = vadd.f32 0.0, %v3646
    %3648 = vdwg.mxu0
    %3649 = vmatprep.subr.mxu0 %v3505
    %3650 = vmatpush1.msra.mxu0 %v3502
    %3651 = vmatprep.subr.mxu0 0.0
    %3652 = vmatpush1.msra.mxu0 0.0
    %3653 = vmatprep.subr.mxu0 0.0
    %3654 = vmatpush1.msra.mxu0 0.0
    %3655 = vmatprep.subr.mxu0 0.0
    %3656 = vmatpush1.msra.mxu0 0.0
    %3657 = vmatprep.subr.mxu0 0.0
    %3658 = vmatpush1.msra.mxu0 0.0
    %3659 = vmatprep.subr.mxu0 0.0
    %3660 = vmatpush1.msra.mxu0 0.0
    %3661 = vmatprep.subr.mxu0 0.0
    %3662 = vmatpush1.msra.mxu0 0.0
    %3663 = vmatprep.subr.mxu0 0.0
    %3664 = vmatpush1.msra.mxu0 0.0
    %3665 = vmatprep.subr.mxu0 0.0
    %3666 = vmatpush1.msra.mxu0 0.0
    %3667 = vmatprep.subr.mxu0 0.0
    %3668 = vmatpush1.msra.mxu0 0.0
    %3669 = vmatprep.subr.mxu0 0.0
    %3670 = vmatpush1.msra.mxu0 0.0
    %3671 = vmatprep.subr.mxu0 0.0
    %3672 = vmatpush1.msra.mxu0 0.0
    %3673 = vmatprep.subr.mxu0 0.0
    %3674 = vmatpush1.msra.mxu0 0.0
    %3675 = vmatprep.subr.mxu0 0.0
    %3676 = vmatpush1.msra.mxu0 0.0
    %3677 = vmatprep.subr.mxu0 0.0
    %3678 = vmatpush1.msra.mxu0 0.0
    %3679 = vmatprep.subr.mxu0 0.0
    %3680 = vmatpush1.msra.mxu0 0.0
    %3681 = vmatprep.subr.mxu0 0.0
    %3682 = vmatpush1.msra.mxu0 0.0
    %3683 = vmatprep.subr.mxu0 0.0
    %3684 = vmatpush1.msra.mxu0 0.0
    %3685 = vmatprep.subr.mxu0 0.0
    %3686 = vmatpush1.msra.mxu0 0.0
    %3687 = vmatprep.subr.mxu0 0.0
    %3688 = vmatpush1.msra.mxu0 0.0
    %3689 = vmatprep.subr.mxu0 0.0
    %3690 = vmatpush1.msra.mxu0 0.0
    %3691 = vmatprep.subr.mxu0 0.0
    %3692 = vmatpush1.msra.mxu0 0.0
    %3693 = vmatprep.subr.mxu0 0.0
    %3694 = vmatpush1.msra.mxu0 0.0
    %3695 = vmatprep.subr.mxu0 0.0
    %3696 = vmatpush1.msra.mxu0 0.0
    %3697 = vmatprep.subr.mxu0 0.0
    %3698 = vmatpush1.msra.mxu0 0.0
    %3699 = vmatprep.subr.mxu0 0.0
    %3700 = vmatpush1.msra.mxu0 0.0
    %3701 = vmatprep.subr.mxu0 0.0
    %3702 = vmatpush1.msra.mxu0 0.0
    %3703 = vmatprep.subr.mxu0 0.0
    %3704 = vmatpush1.msra.mxu0 0.0
    %3705 = vmatprep.subr.mxu0 0.0
    %3706 = vmatpush1.msra.mxu0 0.0
    %3707 = vmatprep.subr.mxu0 0.0
    %3708 = vmatpush1.msra.mxu0 0.0
    %3709 = vmatprep.subr.mxu0 0.0
    %3710 = vmatpush1.msra.mxu0 0.0
    %3711 = vmatprep.subr.mxu0 0.0
    %3712 = vmatpush1.msra.mxu0 0.0
    %3713 = vmatprep.mubr.f32.mxu0 0.0
    %3714 = vmatmul.mubr.f32.gmra.mrb[0].mxu0 %v1076
    %v3715 = vpop.f32.mrb[0].mxu0
    %v3716 = vadd.f32 0.0, %v3715
    %v3717 = vpop.f32.mrb[0].mxu0
    %v3718 = vadd.f32 0.0, %v3717
    %3719 = vdwg.mxu0
    %v3720 = vadd.f32 %v3483, %v3574
    %v3721 = vadd.f32 %v3484, %v3576
    %v3722 = vadd.f32 %v3485, %v3645
    %v3723 = vadd.f32 %v3486, %v3647
    %v3724 = vadd.f32 %v3487, %v3716
    %v3725 = vadd.f32 %v3488, %v3718
    %3726 = vrot.lane.b32.xlu0 %v2475, 127
    %v3727 = vpop.permute.xlu0 %3726
    %3728 = vrot.lane.b32.xlu0 %v2476, 127
    %v3729 = vpop.permute.xlu0 %3728
    %3730 = vrot.lane.b32.xlu0 %v2477, 127
    %v3731 = vpop.permute.xlu0 %3730
    %3732 = vrot.lane.b32.xlu0 %v2478, 127
    %v3733 = vpop.permute.xlu0 %3732
    %3734 = vrot.lane.b32.xlu0 %v2479, 127
    %v3735 = vpop.permute.xlu0 %3734
    %3736 = vrot.lane.b32.xlu0 %v2480, 127
    %v3737 = vpop.permute.xlu0 %3736
    %v3738 = vsel %vm1321, %v3735, %v3737
    %v3739 = vsel %vm1321, %v3733, %v3735
    %v3740 = vsel %vm1321, %v3731, %v3733
    %v3741 = vsel %vm1321, %v3729, %v3731
    %v3742 = vsel %vm1321, %v3727, %v3729
    %v3743 = vsel %vm1321, %v3737, %v3727
    %v3745 = vsel %vm85, %v3742, 0
    %v3748 = vsel %vm85, %v3741, 0
    %v3751 = vsel %vm85, %v3740, 0
    %v3754 = vsel %vm85, %v3739, 0
    %v3757 = vsel %vm85, %v3738, 0
    %v3760 = vsel %vm85, %v3743, 0
    %3762 = vmatprep.subr.mxu0 %v3748
    %3763 = vmatpush1.msra.mxu0 %v3745
    %3764 = vmatprep.subr.mxu0 0.0
    %3765 = vmatpush1.msra.mxu0 0.0
    %3766 = vmatprep.subr.mxu0 0.0
    %3767 = vmatpush1.msra.mxu0 0.0
    %3768 = vmatprep.subr.mxu0 0.0
    %3769 = vmatpush1.msra.mxu0 0.0
    %3770 = vmatprep.subr.mxu0 0.0
    %3771 = vmatpush1.msra.mxu0 0.0
    %3772 = vmatprep.subr.mxu0 0.0
    %3773 = vmatpush1.msra.mxu0 0.0
    %3774 = vmatprep.subr.mxu0 0.0
    %3775 = vmatpush1.msra.mxu0 0.0
    %3776 = vmatprep.subr.mxu0 0.0
    %3777 = vmatpush1.msra.mxu0 0.0
    %3778 = vmatprep.subr.mxu0 0.0
    %3779 = vmatpush1.msra.mxu0 0.0
    %3780 = vmatprep.subr.mxu0 0.0
    %3781 = vmatpush1.msra.mxu0 0.0
    %3782 = vmatprep.subr.mxu0 0.0
    %3783 = vmatpush1.msra.mxu0 0.0
    %3784 = vmatprep.subr.mxu0 0.0
    %3785 = vmatpush1.msra.mxu0 0.0
    %3786 = vmatprep.subr.mxu0 0.0
    %3787 = vmatpush1.msra.mxu0 0.0
    %3788 = vmatprep.subr.mxu0 0.0
    %3789 = vmatpush1.msra.mxu0 0.0
    %3790 = vmatprep.subr.mxu0 0.0
    %3791 = vmatpush1.msra.mxu0 0.0
    %3792 = vmatprep.subr.mxu0 0.0
    %3793 = vmatpush1.msra.mxu0 0.0
    %3794 = vmatprep.subr.mxu0 0.0
    %3795 = vmatpush1.msra.mxu0 0.0
    %3796 = vmatprep.subr.mxu0 0.0
    %3797 = vmatpush1.msra.mxu0 0.0
    %3798 = vmatprep.subr.mxu0 0.0
    %3799 = vmatpush1.msra.mxu0 0.0
    %3800 = vmatprep.subr.mxu0 0.0
    %3801 = vmatpush1.msra.mxu0 0.0
    %3802 = vmatprep.subr.mxu0 0.0
    %3803 = vmatpush1.msra.mxu0 0.0
    %3804 = vmatprep.subr.mxu0 0.0
    %3805 = vmatpush1.msra.mxu0 0.0
    %3806 = vmatprep.subr.mxu0 0.0
    %3807 = vmatpush1.msra.mxu0 0.0
    %3808 = vmatprep.subr.mxu0 0.0
    %3809 = vmatpush1.msra.mxu0 0.0
    %3810 = vmatprep.subr.mxu0 0.0
    %3811 = vmatpush1.msra.mxu0 0.0
    %3812 = vmatprep.subr.mxu0 0.0
    %3813 = vmatpush1.msra.mxu0 0.0
    %3814 = vmatprep.subr.mxu0 0.0
    %3815 = vmatpush1.msra.mxu0 0.0
    %3816 = vmatprep.subr.mxu0 0.0
    %3817 = vmatpush1.msra.mxu0 0.0
    %3818 = vmatprep.subr.mxu0 0.0
    %3819 = vmatpush1.msra.mxu0 0.0
    %3820 = vmatprep.subr.mxu0 0.0
    %3821 = vmatpush1.msra.mxu0 0.0
    %3822 = vmatprep.subr.mxu0 0.0
    %3823 = vmatpush1.msra.mxu0 0.0
    %3824 = vmatprep.subr.mxu0 0.0
    %3825 = vmatpush1.msra.mxu0 0.0
    %3826 = vmatprep.mubr.f32.mxu0 0.0
    %3827 = vmatmul.mubr.f32.gmra.mrb[0].mxu0 %v1331
    %v3828 = vpop.f32.mrb[0].mxu0
    %v3829 = vadd.f32 0.0, %v3828
    %v3830 = vpop.f32.mrb[0].mxu0
    %v3831 = vadd.f32 0.0, %v3830
    %3832 = vdwg.mxu0
    %3833 = vmatprep.subr.mxu0 %v3754
    %3834 = vmatpush1.msra.mxu0 %v3751
    %3835 = vmatprep.subr.mxu0 0.0
    %3836 = vmatpush1.msra.mxu0 0.0
    %3837 = vmatprep.subr.mxu0 0.0
    %3838 = vmatpush1.msra.mxu0 0.0
    %3839 = vmatprep.subr.mxu0 0.0
    %3840 = vmatpush1.msra.mxu0 0.0
    %3841 = vmatprep.subr.mxu0 0.0
    %3842 = vmatpush1.msra.mxu0 0.0
    %3843 = vmatprep.subr.mxu0 0.0
    %3844 = vmatpush1.msra.mxu0 0.0
    %3845 = vmatprep.subr.mxu0 0.0
    %3846 = vmatpush1.msra.mxu0 0.0
    %3847 = vmatprep.subr.mxu0 0.0
    %3848 = vmatpush1.msra.mxu0 0.0
    %3849 = vmatprep.subr.mxu0 0.0
    %3850 = vmatpush1.msra.mxu0 0.0
    %3851 = vmatprep.subr.mxu0 0.0
    %3852 = vmatpush1.msra.mxu0 0.0
    %3853 = vmatprep.subr.mxu0 0.0
    %3854 = vmatpush1.msra.mxu0 0.0
    %3855 = vmatprep.subr.mxu0 0.0
    %3856 = vmatpush1.msra.mxu0 0.0
    %3857 = vmatprep.subr.mxu0 0.0
    %3858 = vmatpush1.msra.mxu0 0.0
    %3859 = vmatprep.subr.mxu0 0.0
    %3860 = vmatpush1.msra.mxu0 0.0
    %3861 = vmatprep.subr.mxu0 0.0
    %3862 = vmatpush1.msra.mxu0 0.0
    %3863 = vmatprep.subr.mxu0 0.0
    %3864 = vmatpush1.msra.mxu0 0.0
    %3865 = vmatprep.subr.mxu0 0.0
    %3866 = vmatpush1.msra.mxu0 0.0
    %3867 = vmatprep.subr.mxu0 0.0
    %3868 = vmatpush1.msra.mxu0 0.0
    %3869 = vmatprep.subr.mxu0 0.0
    %3870 = vmatpush1.msra.mxu0 0.0
    %3871 = vmatprep.subr.mxu0 0.0
    %3872 = vmatpush1.msra.mxu0 0.0
    %3873 = vmatprep.subr.mxu0 0.0
    %3874 = vmatpush1.msra.mxu0 0.0
    %3875 = vmatprep.subr.mxu0 0.0
    %3876 = vmatpush1.msra.mxu0 0.0
    %3877 = vmatprep.subr.mxu0 0.0
    %3878 = vmatpush1.msra.mxu0 0.0
    %3879 = vmatprep.subr.mxu0 0.0
    %3880 = vmatpush1.msra.mxu0 0.0
    %3881 = vmatprep.subr.mxu0 0.0
    %3882 = vmatpush1.msra.mxu0 0.0
    %3883 = vmatprep.subr.mxu0 0.0
    %3884 = vmatpush1.msra.mxu0 0.0
    %3885 = vmatprep.subr.mxu0 0.0
    %3886 = vmatpush1.msra.mxu0 0.0
    %3887 = vmatprep.subr.mxu0 0.0
    %3888 = vmatpush1.msra.mxu0 0.0
    %3889 = vmatprep.subr.mxu0 0.0
    %3890 = vmatpush1.msra.mxu0 0.0
    %3891 = vmatprep.subr.mxu0 0.0
    %3892 = vmatpush1.msra.mxu0 0.0
    %3893 = vmatprep.subr.mxu0 0.0
    %3894 = vmatpush1.msra.mxu0 0.0
    %3895 = vmatprep.subr.mxu0 0.0
    %3896 = vmatpush1.msra.mxu0 0.0
    %3897 = vmatprep.mubr.f32.mxu0 0.0
    %3898 = vmatmul.mubr.f32.gmra.mrb[0].mxu0 %v1331
    %v3899 = vpop.f32.mrb[0].mxu0
    %v3900 = vadd.f32 0.0, %v3899
    %v3901 = vpop.f32.mrb[0].mxu0
    %v3902 = vadd.f32 0.0, %v3901
    %3903 = vdwg.mxu0
    %3904 = vmatprep.subr.mxu0 %v3760
    %3905 = vmatpush1.msra.mxu0 %v3757
    %3906 = vmatprep.subr.mxu0 0.0
    %3907 = vmatpush1.msra.mxu0 0.0
    %3908 = vmatprep.subr.mxu0 0.0
    %3909 = vmatpush1.msra.mxu0 0.0
    %3910 = vmatprep.subr.mxu0 0.0
    %3911 = vmatpush1.msra.mxu0 0.0
    %3912 = vmatprep.subr.mxu0 0.0
    %3913 = vmatpush1.msra.mxu0 0.0
    %3914 = vmatprep.subr.mxu0 0.0
    %3915 = vmatpush1.msra.mxu0 0.0
    %3916 = vmatprep.subr.mxu0 0.0
    %3917 = vmatpush1.msra.mxu0 0.0
    %3918 = vmatprep.subr.mxu0 0.0
    %3919 = vmatpush1.msra.mxu0 0.0
    %3920 = vmatprep.subr.mxu0 0.0
    %3921 = vmatpush1.msra.mxu0 0.0
    %3922 = vmatprep.subr.mxu0 0.0
    %3923 = vmatpush1.msra.mxu0 0.0
    %3924 = vmatprep.subr.mxu0 0.0
    %3925 = vmatpush1.msra.mxu0 0.0
    %3926 = vmatprep.subr.mxu0 0.0
    %3927 = vmatpush1.msra.mxu0 0.0
    %3928 = vmatprep.subr.mxu0 0.0
    %3929 = vmatpush1.msra.mxu0 0.0
    %3930 = vmatprep.subr.mxu0 0.0
    %3931 = vmatpush1.msra.mxu0 0.0
    %3932 = vmatprep.subr.mxu0 0.0
    %3933 = vmatpush1.msra.mxu0 0.0
    %3934 = vmatprep.subr.mxu0 0.0
    %3935 = vmatpush1.msra.mxu0 0.0
    %3936 = vmatprep.subr.mxu0 0.0
    %3937 = vmatpush1.msra.mxu0 0.0
    %3938 = vmatprep.subr.mxu0 0.0
    %3939 = vmatpush1.msra.mxu0 0.0
    %3940 = vmatprep.subr.mxu0 0.0
    %3941 = vmatpush1.msra.mxu0 0.0
    %3942 = vmatprep.subr.mxu0 0.0
    %3943 = vmatpush1.msra.mxu0 0.0
    %3944 = vmatprep.subr.mxu0 0.0
    %3945 = vmatpush1.msra.mxu0 0.0
    %3946 = vmatprep.subr.mxu0 0.0
    %3947 = vmatpush1.msra.mxu0 0.0
    %3948 = vmatprep.subr.mxu0 0.0
    %3949 = vmatpush1.msra.mxu0 0.0
    %3950 = vmatprep.subr.mxu0 0.0
    %3951 = vmatpush1.msra.mxu0 0.0
    %3952 = vmatprep.subr.mxu0 0.0
    %3953 = vmatpush1.msra.mxu0 0.0
    %3954 = vmatprep.subr.mxu0 0.0
    %3955 = vmatpush1.msra.mxu0 0.0
    %3956 = vmatprep.subr.mxu0 0.0
    %3957 = vmatpush1.msra.mxu0 0.0
    %3958 = vmatprep.subr.mxu0 0.0
    %3959 = vmatpush1.msra.mxu0 0.0
    %3960 = vmatprep.subr.mxu0 0.0
    %3961 = vmatpush1.msra.mxu0 0.0
    %3962 = vmatprep.subr.mxu0 0.0
    %3963 = vmatpush1.msra.mxu0 0.0
    %3964 = vmatprep.subr.mxu0 0.0
    %3965 = vmatpush1.msra.mxu0 0.0
    %3966 = vmatprep.subr.mxu0 0.0
    %3967 = vmatpush1.msra.mxu0 0.0
    %3968 = vmatprep.mubr.f32.mxu0 0.0
    %3969 = vmatmul.mubr.f32.gmra.mrb[0].mxu0 %v1331
    %v3970 = vpop.f32.mrb[0].mxu0
    %v3971 = vadd.f32 0.0, %v3970
    %v3972 = vpop.f32.mrb[0].mxu0
    %v3973 = vadd.f32 0.0, %v3972
    %3974 = vdwg.mxu0
    %v3975 = vadd.f32 %v3720, %v3829
    %v3976 = vadd.f32 %v3721, %v3831
    %v3977 = vadd.f32 %v3722, %v3900
    %v3978 = vadd.f32 %v3723, %v3902
    %v3979 = vadd.f32 %v3724, %v3971
    %v3980 = vadd.f32 %v3725, %v3973
    %3981 = vrot.lane.b32.xlu0 %v2475, 111
    %v3982 = vpop.permute.xlu0 %3981
    %3983 = vrot.lane.b32.xlu0 %v2476, 111
    %v3984 = vpop.permute.xlu0 %3983
    %3985 = vrot.lane.b32.xlu0 %v2477, 111
    %v3986 = vpop.permute.xlu0 %3985
    %3987 = vrot.lane.b32.xlu0 %v2478, 111
    %v3988 = vpop.permute.xlu0 %3987
    %3989 = vrot.lane.b32.xlu0 %v2479, 111
    %v3990 = vpop.permute.xlu0 %3989
    %3991 = vrot.lane.b32.xlu0 %v2480, 111
    %v3992 = vpop.permute.xlu0 %3991
    %v3993 = vsel %vm1582, %v3990, %v3992
    %v3994 = vsel %vm1582, %v3988, %v3990
    %v3995 = vsel %vm1582, %v3986, %v3988
    %v3996 = vsel %vm1582, %v3984, %v3986
    %v3997 = vsel %vm1582, %v3982, %v3984
    %v3998 = vsel %vm1582, %v3992, %v3982
    %v4000 = vsel %vm85, %v3997, 0
    %v4003 = vsel %vm85, %v3996, 0
    %v4006 = vsel %vm85, %v3995, 0
    %v4009 = vsel %vm85, %v3994, 0
    %v4012 = vsel %vm85, %v3993, 0
    %v4015 = vsel %vm85, %v3998, 0
    %4017 = vmatprep.subr.mxu0 %v4003
    %4018 = vmatpush1.msra.mxu0 %v4000
    %4019 = vmatprep.subr.mxu0 0.0
    %4020 = vmatpush1.msra.mxu0 0.0
    %4021 = vmatprep.subr.mxu0 0.0
    %4022 = vmatpush1.msra.mxu0 0.0
    %4023 = vmatprep.subr.mxu0 0.0
    %4024 = vmatpush1.msra.mxu0 0.0
    %4025 = vmatprep.subr.mxu0 0.0
    %4026 = vmatpush1.msra.mxu0 0.0
    %4027 = vmatprep.subr.mxu0 0.0
    %4028 = vmatpush1.msra.mxu0 0.0
    %4029 = vmatprep.subr.mxu0 0.0
    %4030 = vmatpush1.msra.mxu0 0.0
    %4031 = vmatprep.subr.mxu0 0.0
    %4032 = vmatpush1.msra.mxu0 0.0
    %4033 = vmatprep.subr.mxu0 0.0
    %4034 = vmatpush1.msra.mxu0 0.0
    %4035 = vmatprep.subr.mxu0 0.0
    %4036 = vmatpush1.msra.mxu0 0.0
    %4037 = vmatprep.subr.mxu0 0.0
    %4038 = vmatpush1.msra.mxu0 0.0
    %4039 = vmatprep.subr.mxu0 0.0
    %4040 = vmatpush1.msra.mxu0 0.0
    %4041 = vmatprep.subr.mxu0 0.0
    %4042 = vmatpush1.msra.mxu0 0.0
    %4043 = vmatprep.subr.mxu0 0.0
    %4044 = vmatpush1.msra.mxu0 0.0
    %4045 = vmatprep.subr.mxu0 0.0
    %4046 = vmatpush1.msra.mxu0 0.0
    %4047 = vmatprep.subr.mxu0 0.0
    %4048 = vmatpush1.msra.mxu0 0.0
    %4049 = vmatprep.subr.mxu0 0.0
    %4050 = vmatpush1.msra.mxu0 0.0
    %4051 = vmatprep.subr.mxu0 0.0
    %4052 = vmatpush1.msra.mxu0 0.0
    %4053 = vmatprep.subr.mxu0 0.0
    %4054 = vmatpush1.msra.mxu0 0.0
    %4055 = vmatprep.subr.mxu0 0.0
    %4056 = vmatpush1.msra.mxu0 0.0
    %4057 = vmatprep.subr.mxu0 0.0
    %4058 = vmatpush1.msra.mxu0 0.0
    %4059 = vmatprep.subr.mxu0 0.0
    %4060 = vmatpush1.msra.mxu0 0.0
    %4061 = vmatprep.subr.mxu0 0.0
    %4062 = vmatpush1.msra.mxu0 0.0
    %4063 = vmatprep.subr.mxu0 0.0
    %4064 = vmatpush1.msra.mxu0 0.0
    %4065 = vmatprep.subr.mxu0 0.0
    %4066 = vmatpush1.msra.mxu0 0.0
    %4067 = vmatprep.subr.mxu0 0.0
    %4068 = vmatpush1.msra.mxu0 0.0
    %4069 = vmatprep.subr.mxu0 0.0
    %4070 = vmatpush1.msra.mxu0 0.0
    %4071 = vmatprep.subr.mxu0 0.0
    %4072 = vmatpush1.msra.mxu0 0.0
    %4073 = vmatprep.subr.mxu0 0.0
    %4074 = vmatpush1.msra.mxu0 0.0
    %4075 = vmatprep.subr.mxu0 0.0
    %4076 = vmatpush1.msra.mxu0 0.0
    %4077 = vmatprep.subr.mxu0 0.0
    %4078 = vmatpush1.msra.mxu0 0.0
    %4079 = vmatprep.subr.mxu0 0.0
    %4080 = vmatpush1.msra.mxu0 0.0
    %4081 = vmatprep.mubr.f32.mxu0 0.0
    %4082 = vmatmul.mubr.f32.gmra.mrb[0].mxu0 %v1592
    %v4083 = vpop.f32.mrb[0].mxu0
    %v4084 = vadd.f32 0.0, %v4083
    %v4085 = vpop.f32.mrb[0].mxu0
    %v4086 = vadd.f32 0.0, %v4085
    %4087 = vdwg.mxu0
    %4088 = vmatprep.subr.mxu0 %v4009
    %4089 = vmatpush1.msra.mxu0 %v4006
    %4090 = vmatprep.subr.mxu0 0.0
    %4091 = vmatpush1.msra.mxu0 0.0
    %4092 = vmatprep.subr.mxu0 0.0
    %4093 = vmatpush1.msra.mxu0 0.0
    %4094 = vmatprep.subr.mxu0 0.0
    %4095 = vmatpush1.msra.mxu0 0.0
    %4096 = vmatprep.subr.mxu0 0.0
    %4097 = vmatpush1.msra.mxu0 0.0
    %4098 = vmatprep.subr.mxu0 0.0
    %4099 = vmatpush1.msra.mxu0 0.0
    %4100 = vmatprep.subr.mxu0 0.0
    %4101 = vmatpush1.msra.mxu0 0.0
    %4102 = vmatprep.subr.mxu0 0.0
    %4103 = vmatpush1.msra.mxu0 0.0
    %4104 = vmatprep.subr.mxu0 0.0
    %4105 = vmatpush1.msra.mxu0 0.0
    %4106 = vmatprep.subr.mxu0 0.0
    %4107 = vmatpush1.msra.mxu0 0.0
    %4108 = vmatprep.subr.mxu0 0.0
    %4109 = vmatpush1.msra.mxu0 0.0
    %4110 = vmatprep.subr.mxu0 0.0
    %4111 = vmatpush1.msra.mxu0 0.0
    %4112 = vmatprep.subr.mxu0 0.0
    %4113 = vmatpush1.msra.mxu0 0.0
    %4114 = vmatprep.subr.mxu0 0.0
    %4115 = vmatpush1.msra.mxu0 0.0
    %4116 = vmatprep.subr.mxu0 0.0
    %4117 = vmatpush1.msra.mxu0 0.0
    %4118 = vmatprep.subr.mxu0 0.0
    %4119 = vmatpush1.msra.mxu0 0.0
    %4120 = vmatprep.subr.mxu0 0.0
    %4121 = vmatpush1.msra.mxu0 0.0
    %4122 = vmatprep.subr.mxu0 0.0
    %4123 = vmatpush1.msra.mxu0 0.0
    %4124 = vmatprep.subr.mxu0 0.0
    %4125 = vmatpush1.msra.mxu0 0.0
    %4126 = vmatprep.subr.mxu0 0.0
    %4127 = vmatpush1.msra.mxu0 0.0
    %4128 = vmatprep.subr.mxu0 0.0
    %4129 = vmatpush1.msra.mxu0 0.0
    %4130 = vmatprep.subr.mxu0 0.0
    %4131 = vmatpush1.msra.mxu0 0.0
    %4132 = vmatprep.subr.mxu0 0.0
    %4133 = vmatpush1.msra.mxu0 0.0
    %4134 = vmatprep.subr.mxu0 0.0
    %4135 = vmatpush1.msra.mxu0 0.0
    %4136 = vmatprep.subr.mxu0 0.0
    %4137 = vmatpush1.msra.mxu0 0.0
    %4138 = vmatprep.subr.mxu0 0.0
    %4139 = vmatpush1.msra.mxu0 0.0
    %4140 = vmatprep.subr.mxu0 0.0
    %4141 = vmatpush1.msra.mxu0 0.0
    %4142 = vmatprep.subr.mxu0 0.0
    %4143 = vmatpush1.msra.mxu0 0.0
    %4144 = vmatprep.subr.mxu0 0.0
    %4145 = vmatpush1.msra.mxu0 0.0
    %4146 = vmatprep.subr.mxu0 0.0
    %4147 = vmatpush1.msra.mxu0 0.0
    %4148 = vmatprep.subr.mxu0 0.0
    %4149 = vmatpush1.msra.mxu0 0.0
    %4150 = vmatprep.subr.mxu0 0.0
    %4151 = vmatpush1.msra.mxu0 0.0
    %4152 = vmatprep.mubr.f32.mxu0 0.0
    %4153 = vmatmul.mubr.f32.gmra.mrb[0].mxu0 %v1592
    %v4154 = vpop.f32.mrb[0].mxu0
    %v4155 = vadd.f32 0.0, %v4154
    %v4156 = vpop.f32.mrb[0].mxu0
    %v4157 = vadd.f32 0.0, %v4156
    %4158 = vdwg.mxu0
    %4159 = vmatprep.subr.mxu0 %v4015
    %4160 = vmatpush1.msra.mxu0 %v4012
    %4161 = vmatprep.subr.mxu0 0.0
    %4162 = vmatpush1.msra.mxu0 0.0
    %4163 = vmatprep.subr.mxu0 0.0
    %4164 = vmatpush1.msra.mxu0 0.0
    %4165 = vmatprep.subr.mxu0 0.0
    %4166 = vmatpush1.msra.mxu0 0.0
    %4167 = vmatprep.subr.mxu0 0.0
    %4168 = vmatpush1.msra.mxu0 0.0
    %4169 = vmatprep.subr.mxu0 0.0
    %4170 = vmatpush1.msra.mxu0 0.0
    %4171 = vmatprep.subr.mxu0 0.0
    %4172 = vmatpush1.msra.mxu0 0.0
    %4173 = vmatprep.subr.mxu0 0.0
    %4174 = vmatpush1.msra.mxu0 0.0
    %4175 = vmatprep.subr.mxu0 0.0
    %4176 = vmatpush1.msra.mxu0 0.0
    %4177 = vmatprep.subr.mxu0 0.0
    %4178 = vmatpush1.msra.mxu0 0.0
    %4179 = vmatprep.subr.mxu0 0.0
    %4180 = vmatpush1.msra.mxu0 0.0
    %4181 = vmatprep.subr.mxu0 0.0
    %4182 = vmatpush1.msra.mxu0 0.0
    %4183 = vmatprep.subr.mxu0 0.0
    %4184 = vmatpush1.msra.mxu0 0.0
    %4185 = vmatprep.subr.mxu0 0.0
    %4186 = vmatpush1.msra.mxu0 0.0
    %4187 = vmatprep.subr.mxu0 0.0
    %4188 = vmatpush1.msra.mxu0 0.0
    %4189 = vmatprep.subr.mxu0 0.0
    %4190 = vmatpush1.msra.mxu0 0.0
    %4191 = vmatprep.subr.mxu0 0.0
    %4192 = vmatpush1.msra.mxu0 0.0
    %4193 = vmatprep.subr.mxu0 0.0
    %4194 = vmatpush1.msra.mxu0 0.0
    %4195 = vmatprep.subr.mxu0 0.0
    %4196 = vmatpush1.msra.mxu0 0.0
    %4197 = vmatprep.subr.mxu0 0.0
    %4198 = vmatpush1.msra.mxu0 0.0
    %4199 = vmatprep.subr.mxu0 0.0
    %4200 = vmatpush1.msra.mxu0 0.0
    %4201 = vmatprep.subr.mxu0 0.0
    %4202 = vmatpush1.msra.mxu0 0.0
    %4203 = vmatprep.subr.mxu0 0.0
    %4204 = vmatpush1.msra.mxu0 0.0
    %4205 = vmatprep.subr.mxu0 0.0
    %4206 = vmatpush1.msra.mxu0 0.0
    %4207 = vmatprep.subr.mxu0 0.0
    %4208 = vmatpush1.msra.mxu0 0.0
    %4209 = vmatprep.subr.mxu0 0.0
    %4210 = vmatpush1.msra.mxu0 0.0
    %4211 = vmatprep.subr.mxu0 0.0
    %4212 = vmatpush1.msra.mxu0 0.0
    %4213 = vmatprep.subr.mxu0 0.0
    %4214 = vmatpush1.msra.mxu0 0.0
    %4215 = vmatprep.subr.mxu0 0.0
    %4216 = vmatpush1.msra.mxu0 0.0
    %4217 = vmatprep.subr.mxu0 0.0
    %4218 = vmatpush1.msra.mxu0 0.0
    %4219 = vmatprep.subr.mxu0 0.0
    %4220 = vmatpush1.msra.mxu0 0.0
    %4221 = vmatprep.subr.mxu0 0.0
    %4222 = vmatpush1.msra.mxu0 0.0
    %4223 = vmatprep.mubr.f32.mxu0 0.0
    %4224 = vmatmul.mubr.f32.gmra.mrb[0].mxu0 %v1592
    %v4225 = vpop.f32.mrb[0].mxu0
    %v4226 = vadd.f32 0.0, %v4225
    %v4227 = vpop.f32.mrb[0].mxu0
    %v4228 = vadd.f32 0.0, %v4227
    %4229 = vdwg.mxu0
    %v4230 = vadd.f32 %v3975, %v4084
    %v4231 = vadd.f32 %v3976, %v4086
    %v4232 = vadd.f32 %v3977, %v4155
    %v4233 = vadd.f32 %v3978, %v4157
    %v4234 = vadd.f32 %v3979, %v4226
    %v4235 = vadd.f32 %v3980, %v4228
    %4236 = vrot.lane.b32.xlu0 %v2475, 110
    %v4237 = vpop.permute.xlu0 %4236
    %4238 = vrot.lane.b32.xlu0 %v2476, 110
    %v4239 = vpop.permute.xlu0 %4238
    %4240 = vrot.lane.b32.xlu0 %v2477, 110
    %v4241 = vpop.permute.xlu0 %4240
    %4242 = vrot.lane.b32.xlu0 %v2478, 110
    %v4243 = vpop.permute.xlu0 %4242
    %4244 = vrot.lane.b32.xlu0 %v2479, 110
    %v4245 = vpop.permute.xlu0 %4244
    %4246 = vrot.lane.b32.xlu0 %v2480, 110
    %v4247 = vpop.permute.xlu0 %4246
    %v4248 = vsel %vm1843, %v4245, %v4247
    %v4249 = vsel %vm1843, %v4243, %v4245
    %v4250 = vsel %vm1843, %v4241, %v4243
    %v4251 = vsel %vm1843, %v4239, %v4241
    %v4252 = vsel %vm1843, %v4237, %v4239
    %v4253 = vsel %vm1843, %v4247, %v4237
    %v4255 = vsel %vm85, %v4252, 0
    %v4258 = vsel %vm85, %v4251, 0
    %v4261 = vsel %vm85, %v4250, 0
    %v4264 = vsel %vm85, %v4249, 0
    %v4267 = vsel %vm85, %v4248, 0
    %v4270 = vsel %vm85, %v4253, 0
    %4272 = vmatprep.subr.mxu0 %v4258
    %4273 = vmatpush1.msra.mxu0 %v4255
    %4274 = vmatprep.subr.mxu0 0.0
    %4275 = vmatpush1.msra.mxu0 0.0
    %4276 = vmatprep.subr.mxu0 0.0
    %4277 = vmatpush1.msra.mxu0 0.0
    %4278 = vmatprep.subr.mxu0 0.0
    %4279 = vmatpush1.msra.mxu0 0.0
    %4280 = vmatprep.subr.mxu0 0.0
    %4281 = vmatpush1.msra.mxu0 0.0
    %4282 = vmatprep.subr.mxu0 0.0
    %4283 = vmatpush1.msra.mxu0 0.0
    %4284 = vmatprep.subr.mxu0 0.0
    %4285 = vmatpush1.msra.mxu0 0.0
    %4286 = vmatprep.subr.mxu0 0.0
    %4287 = vmatpush1.msra.mxu0 0.0
    %4288 = vmatprep.subr.mxu0 0.0
    %4289 = vmatpush1.msra.mxu0 0.0
    %4290 = vmatprep.subr.mxu0 0.0
    %4291 = vmatpush1.msra.mxu0 0.0
    %4292 = vmatprep.subr.mxu0 0.0
    %4293 = vmatpush1.msra.mxu0 0.0
    %4294 = vmatprep.subr.mxu0 0.0
    %4295 = vmatpush1.msra.mxu0 0.0
    %4296 = vmatprep.subr.mxu0 0.0
    %4297 = vmatpush1.msra.mxu0 0.0
    %4298 = vmatprep.subr.mxu0 0.0
    %4299 = vmatpush1.msra.mxu0 0.0
    %4300 = vmatprep.subr.mxu0 0.0
    %4301 = vmatpush1.msra.mxu0 0.0
    %4302 = vmatprep.subr.mxu0 0.0
    %4303 = vmatpush1.msra.mxu0 0.0
    %4304 = vmatprep.subr.mxu0 0.0
    %4305 = vmatpush1.msra.mxu0 0.0
    %4306 = vmatprep.subr.mxu0 0.0
    %4307 = vmatpush1.msra.mxu0 0.0
    %4308 = vmatprep.subr.mxu0 0.0
    %4309 = vmatpush1.msra.mxu0 0.0
    %4310 = vmatprep.subr.mxu0 0.0
    %4311 = vmatpush1.msra.mxu0 0.0
    %4312 = vmatprep.subr.mxu0 0.0
    %4313 = vmatpush1.msra.mxu0 0.0
    %4314 = vmatprep.subr.mxu0 0.0
    %4315 = vmatpush1.msra.mxu0 0.0
    %4316 = vmatprep.subr.mxu0 0.0
    %4317 = vmatpush1.msra.mxu0 0.0
    %4318 = vmatprep.subr.mxu0 0.0
    %4319 = vmatpush1.msra.mxu0 0.0
    %4320 = vmatprep.subr.mxu0 0.0
    %4321 = vmatpush1.msra.mxu0 0.0
    %4322 = vmatprep.subr.mxu0 0.0
    %4323 = vmatpush1.msra.mxu0 0.0
    %4324 = vmatprep.subr.mxu0 0.0
    %4325 = vmatpush1.msra.mxu0 0.0
    %4326 = vmatprep.subr.mxu0 0.0
    %4327 = vmatpush1.msra.mxu0 0.0
    %4328 = vmatprep.subr.mxu0 0.0
    %4329 = vmatpush1.msra.mxu0 0.0
    %4330 = vmatprep.subr.mxu0 0.0
    %4331 = vmatpush1.msra.mxu0 0.0
    %4332 = vmatprep.subr.mxu0 0.0
    %4333 = vmatpush1.msra.mxu0 0.0
    %4334 = vmatprep.subr.mxu0 0.0
    %4335 = vmatpush1.msra.mxu0 0.0
    %4336 = vmatprep.mubr.f32.mxu0 0.0
    %4337 = vmatmul.mubr.f32.gmra.mrb[0].mxu0 %v1853
    %v4338 = vpop.f32.mrb[0].mxu0
    %v4339 = vadd.f32 0.0, %v4338
    %v4340 = vpop.f32.mrb[0].mxu0
    %v4341 = vadd.f32 0.0, %v4340
    %4342 = vdwg.mxu0
    %4343 = vmatprep.subr.mxu0 %v4264
    %4344 = vmatpush1.msra.mxu0 %v4261
    %4345 = vmatprep.subr.mxu0 0.0
    %4346 = vmatpush1.msra.mxu0 0.0
    %4347 = vmatprep.subr.mxu0 0.0
    %4348 = vmatpush1.msra.mxu0 0.0
    %4349 = vmatprep.subr.mxu0 0.0
    %4350 = vmatpush1.msra.mxu0 0.0
    %4351 = vmatprep.subr.mxu0 0.0
    %4352 = vmatpush1.msra.mxu0 0.0
    %4353 = vmatprep.subr.mxu0 0.0
    %4354 = vmatpush1.msra.mxu0 0.0
    %4355 = vmatprep.subr.mxu0 0.0
    %4356 = vmatpush1.msra.mxu0 0.0
    %4357 = vmatprep.subr.mxu0 0.0
    %4358 = vmatpush1.msra.mxu0 0.0
    %4359 = vmatprep.subr.mxu0 0.0
    %4360 = vmatpush1.msra.mxu0 0.0
    %4361 = vmatprep.subr.mxu0 0.0
    %4362 = vmatpush1.msra.mxu0 0.0
    %4363 = vmatprep.subr.mxu0 0.0
    %4364 = vmatpush1.msra.mxu0 0.0
    %4365 = vmatprep.subr.mxu0 0.0
    %4366 = vmatpush1.msra.mxu0 0.0
    %4367 = vmatprep.subr.mxu0 0.0
    %4368 = vmatpush1.msra.mxu0 0.0
    %4369 = vmatprep.subr.mxu0 0.0
    %4370 = vmatpush1.msra.mxu0 0.0
    %4371 = vmatprep.subr.mxu0 0.0
    %4372 = vmatpush1.msra.mxu0 0.0
    %4373 = vmatprep.subr.mxu0 0.0
    %4374 = vmatpush1.msra.mxu0 0.0
    %4375 = vmatprep.subr.mxu0 0.0
    %4376 = vmatpush1.msra.mxu0 0.0
    %4377 = vmatprep.subr.mxu0 0.0
    %4378 = vmatpush1.msra.mxu0 0.0
    %4379 = vmatprep.subr.mxu0 0.0
    %4380 = vmatpush1.msra.mxu0 0.0
    %4381 = vmatprep.subr.mxu0 0.0
    %4382 = vmatpush1.msra.mxu0 0.0
    %4383 = vmatprep.subr.mxu0 0.0
    %4384 = vmatpush1.msra.mxu0 0.0
    %4385 = vmatprep.subr.mxu0 0.0
    %4386 = vmatpush1.msra.mxu0 0.0
    %4387 = vmatprep.subr.mxu0 0.0
    %4388 = vmatpush1.msra.mxu0 0.0
    %4389 = vmatprep.subr.mxu0 0.0
    %4390 = vmatpush1.msra.mxu0 0.0
    %4391 = vmatprep.subr.mxu0 0.0
    %4392 = vmatpush1.msra.mxu0 0.0
    %4393 = vmatprep.subr.mxu0 0.0
    %4394 = vmatpush1.msra.mxu0 0.0
    %4395 = vmatprep.subr.mxu0 0.0
    %4396 = vmatpush1.msra.mxu0 0.0
    %4397 = vmatprep.subr.mxu0 0.0
    %4398 = vmatpush1.msra.mxu0 0.0
    %4399 = vmatprep.subr.mxu0 0.0
    %4400 = vmatpush1.msra.mxu0 0.0
    %4401 = vmatprep.subr.mxu0 0.0
    %4402 = vmatpush1.msra.mxu0 0.0
    %4403 = vmatprep.subr.mxu0 0.0
    %4404 = vmatpush1.msra.mxu0 0.0
    %4405 = vmatprep.subr.mxu0 0.0
    %4406 = vmatpush1.msra.mxu0 0.0
    %4407 = vmatprep.mubr.f32.mxu0 0.0
    %4408 = vmatmul.mubr.f32.gmra.mrb[0].mxu0 %v1853
    %v4409 = vpop.f32.mrb[0].mxu0
    %v4410 = vadd.f32 0.0, %v4409
    %v4411 = vpop.f32.mrb[0].mxu0
    %v4412 = vadd.f32 0.0, %v4411
    %4413 = vdwg.mxu0
    %4414 = vmatprep.subr.mxu0 %v4270
    %4415 = vmatpush1.msra.mxu0 %v4267
    %4416 = vmatprep.subr.mxu0 0.0
    %4417 = vmatpush1.msra.mxu0 0.0
    %4418 = vmatprep.subr.mxu0 0.0
    %4419 = vmatpush1.msra.mxu0 0.0
    %4420 = vmatprep.subr.mxu0 0.0
    %4421 = vmatpush1.msra.mxu0 0.0
    %4422 = vmatprep.subr.mxu0 0.0
    %4423 = vmatpush1.msra.mxu0 0.0
    %4424 = vmatprep.subr.mxu0 0.0
    %4425 = vmatpush1.msra.mxu0 0.0
    %4426 = vmatprep.subr.mxu0 0.0
    %4427 = vmatpush1.msra.mxu0 0.0
    %4428 = vmatprep.subr.mxu0 0.0
    %4429 = vmatpush1.msra.mxu0 0.0
    %4430 = vmatprep.subr.mxu0 0.0
    %4431 = vmatpush1.msra.mxu0 0.0
    %4432 = vmatprep.subr.mxu0 0.0
    %4433 = vmatpush1.msra.mxu0 0.0
    %4434 = vmatprep.subr.mxu0 0.0
    %4435 = vmatpush1.msra.mxu0 0.0
    %4436 = vmatprep.subr.mxu0 0.0
    %4437 = vmatpush1.msra.mxu0 0.0
    %4438 = vmatprep.subr.mxu0 0.0
    %4439 = vmatpush1.msra.mxu0 0.0
    %4440 = vmatprep.subr.mxu0 0.0
    %4441 = vmatpush1.msra.mxu0 0.0
    %4442 = vmatprep.subr.mxu0 0.0
    %4443 = vmatpush1.msra.mxu0 0.0
    %4444 = vmatprep.subr.mxu0 0.0
    %4445 = vmatpush1.msra.mxu0 0.0
    %4446 = vmatprep.subr.mxu0 0.0
    %4447 = vmatpush1.msra.mxu0 0.0
    %4448 = vmatprep.subr.mxu0 0.0
    %4449 = vmatpush1.msra.mxu0 0.0
    %4450 = vmatprep.subr.mxu0 0.0
    %4451 = vmatpush1.msra.mxu0 0.0
    %4452 = vmatprep.subr.mxu0 0.0
    %4453 = vmatpush1.msra.mxu0 0.0
    %4454 = vmatprep.subr.mxu0 0.0
    %4455 = vmatpush1.msra.mxu0 0.0
    %4456 = vmatprep.subr.mxu0 0.0
    %4457 = vmatpush1.msra.mxu0 0.0
    %4458 = vmatprep.subr.mxu0 0.0
    %4459 = vmatpush1.msra.mxu0 0.0
    %4460 = vmatprep.subr.mxu0 0.0
    %4461 = vmatpush1.msra.mxu0 0.0
    %4462 = vmatprep.subr.mxu0 0.0
    %4463 = vmatpush1.msra.mxu0 0.0
    %4464 = vmatprep.subr.mxu0 0.0
    %4465 = vmatpush1.msra.mxu0 0.0
    %4466 = vmatprep.subr.mxu0 0.0
    %4467 = vmatpush1.msra.mxu0 0.0
    %4468 = vmatprep.subr.mxu0 0.0
    %4469 = vmatpush1.msra.mxu0 0.0
    %4470 = vmatprep.subr.mxu0 0.0
    %4471 = vmatpush1.msra.mxu0 0.0
    %4472 = vmatprep.subr.mxu0 0.0
    %4473 = vmatpush1.msra.mxu0 0.0
    %4474 = vmatprep.subr.mxu0 0.0
    %4475 = vmatpush1.msra.mxu0 0.0
    %4476 = vmatprep.subr.mxu0 0.0
    %4477 = vmatpush1.msra.mxu0 0.0
    %4478 = vmatprep.mubr.f32.mxu0 0.0
    %4479 = vmatmul.mubr.f32.gmra.mrb[0].mxu0 %v1853
    %v4480 = vpop.f32.mrb[0].mxu0
    %v4481 = vadd.f32 0.0, %v4480
    %v4482 = vpop.f32.mrb[0].mxu0
    %v4483 = vadd.f32 0.0, %v4482
    %4484 = vdwg.mxu0
    %v4485 = vadd.f32 %v4230, %v4339
    %v4486 = vadd.f32 %v4231, %v4341
    %v4487 = vadd.f32 %v4232, %v4410
    %v4488 = vadd.f32 %v4233, %v4412
    %v4489 = vadd.f32 %v4234, %v4481
    %v4490 = vadd.f32 %v4235, %v4483
    %4491 = vrot.lane.b32.xlu0 %v2475, 109
    %v4492 = vpop.permute.xlu0 %4491
    %4493 = vrot.lane.b32.xlu0 %v2476, 109
    %v4494 = vpop.permute.xlu0 %4493
    %4495 = vrot.lane.b32.xlu0 %v2477, 109
    %v4496 = vpop.permute.xlu0 %4495
    %4497 = vrot.lane.b32.xlu0 %v2478, 109
    %v4498 = vpop.permute.xlu0 %4497
    %4499 = vrot.lane.b32.xlu0 %v2479, 109
    %v4500 = vpop.permute.xlu0 %4499
    %4501 = vrot.lane.b32.xlu0 %v2480, 109
    %v4502 = vpop.permute.xlu0 %4501
    %v4503 = vsel %vm2104, %v4500, %v4502
    %v4504 = vsel %vm2104, %v4498, %v4500
    %v4505 = vsel %vm2104, %v4496, %v4498
    %v4506 = vsel %vm2104, %v4494, %v4496
    %v4507 = vsel %vm2104, %v4492, %v4494
    %v4508 = vsel %vm2104, %v4502, %v4492
    %v4510 = vsel %vm85, %v4507, 0
    %v4513 = vsel %vm85, %v4506, 0
    %v4516 = vsel %vm85, %v4505, 0
    %v4519 = vsel %vm85, %v4504, 0
    %v4522 = vsel %vm85, %v4503, 0
    %v4525 = vsel %vm85, %v4508, 0
    %4527 = vmatprep.subr.mxu0 %v4513
    %4528 = vmatpush1.msra.mxu0 %v4510
    %4529 = vmatprep.subr.mxu0 0.0
    %4530 = vmatpush1.msra.mxu0 0.0
    %4531 = vmatprep.subr.mxu0 0.0
    %4532 = vmatpush1.msra.mxu0 0.0
    %4533 = vmatprep.subr.mxu0 0.0
    %4534 = vmatpush1.msra.mxu0 0.0
    %4535 = vmatprep.subr.mxu0 0.0
    %4536 = vmatpush1.msra.mxu0 0.0
    %4537 = vmatprep.subr.mxu0 0.0
    %4538 = vmatpush1.msra.mxu0 0.0
    %4539 = vmatprep.subr.mxu0 0.0
    %4540 = vmatpush1.msra.mxu0 0.0
    %4541 = vmatprep.subr.mxu0 0.0
    %4542 = vmatpush1.msra.mxu0 0.0
    %4543 = vmatprep.subr.mxu0 0.0
    %4544 = vmatpush1.msra.mxu0 0.0
    %4545 = vmatprep.subr.mxu0 0.0
    %4546 = vmatpush1.msra.mxu0 0.0
    %4547 = vmatprep.subr.mxu0 0.0
    %4548 = vmatpush1.msra.mxu0 0.0
    %4549 = vmatprep.subr.mxu0 0.0
    %4550 = vmatpush1.msra.mxu0 0.0
    %4551 = vmatprep.subr.mxu0 0.0
    %4552 = vmatpush1.msra.mxu0 0.0
    %4553 = vmatprep.subr.mxu0 0.0
    %4554 = vmatpush1.msra.mxu0 0.0
    %4555 = vmatprep.subr.mxu0 0.0
    %4556 = vmatpush1.msra.mxu0 0.0
    %4557 = vmatprep.subr.mxu0 0.0
    %4558 = vmatpush1.msra.mxu0 0.0
    %4559 = vmatprep.subr.mxu0 0.0
    %4560 = vmatpush1.msra.mxu0 0.0
    %4561 = vmatprep.subr.mxu0 0.0
    %4562 = vmatpush1.msra.mxu0 0.0
    %4563 = vmatprep.subr.mxu0 0.0
    %4564 = vmatpush1.msra.mxu0 0.0
    %4565 = vmatprep.subr.mxu0 0.0
    %4566 = vmatpush1.msra.mxu0 0.0
    %4567 = vmatprep.subr.mxu0 0.0
    %4568 = vmatpush1.msra.mxu0 0.0
    %4569 = vmatprep.subr.mxu0 0.0
    %4570 = vmatpush1.msra.mxu0 0.0
    %4571 = vmatprep.subr.mxu0 0.0
    %4572 = vmatpush1.msra.mxu0 0.0
    %4573 = vmatprep.subr.mxu0 0.0
    %4574 = vmatpush1.msra.mxu0 0.0
    %4575 = vmatprep.subr.mxu0 0.0
    %4576 = vmatpush1.msra.mxu0 0.0
    %4577 = vmatprep.subr.mxu0 0.0
    %4578 = vmatpush1.msra.mxu0 0.0
    %4579 = vmatprep.subr.mxu0 0.0
    %4580 = vmatpush1.msra.mxu0 0.0
    %4581 = vmatprep.subr.mxu0 0.0
    %4582 = vmatpush1.msra.mxu0 0.0
    %4583 = vmatprep.subr.mxu0 0.0
    %4584 = vmatpush1.msra.mxu0 0.0
    %4585 = vmatprep.subr.mxu0 0.0
    %4586 = vmatpush1.msra.mxu0 0.0
    %4587 = vmatprep.subr.mxu0 0.0
    %4588 = vmatpush1.msra.mxu0 0.0
    %4589 = vmatprep.subr.mxu0 0.0
    %4590 = vmatpush1.msra.mxu0 0.0
    %4591 = vmatprep.mubr.f32.mxu0 0.0
    %4592 = vmatmul.mubr.f32.gmra.mrb[0].mxu0 %v2114
    %v4593 = vpop.f32.mrb[0].mxu0
    %v4594 = vadd.f32 0.0, %v4593
    %v4595 = vpop.f32.mrb[0].mxu0
    %v4596 = vadd.f32 0.0, %v4595
    %4597 = vdwg.mxu0
    %4598 = vmatprep.subr.mxu0 %v4519
    %4599 = vmatpush1.msra.mxu0 %v4516
    %4600 = vmatprep.subr.mxu0 0.0
    %4601 = vmatpush1.msra.mxu0 0.0
    %4602 = vmatprep.subr.mxu0 0.0
    %4603 = vmatpush1.msra.mxu0 0.0
    %4604 = vmatprep.subr.mxu0 0.0
    %4605 = vmatpush1.msra.mxu0 0.0
    %4606 = vmatprep.subr.mxu0 0.0
    %4607 = vmatpush1.msra.mxu0 0.0
    %4608 = vmatprep.subr.mxu0 0.0
    %4609 = vmatpush1.msra.mxu0 0.0
    %4610 = vmatprep.subr.mxu0 0.0
    %4611 = vmatpush1.msra.mxu0 0.0
    %4612 = vmatprep.subr.mxu0 0.0
    %4613 = vmatpush1.msra.mxu0 0.0
    %4614 = vmatprep.subr.mxu0 0.0
    %4615 = vmatpush1.msra.mxu0 0.0
    %4616 = vmatprep.subr.mxu0 0.0
    %4617 = vmatpush1.msra.mxu0 0.0
    %4618 = vmatprep.subr.mxu0 0.0
    %4619 = vmatpush1.msra.mxu0 0.0
    %4620 = vmatprep.subr.mxu0 0.0
    %4621 = vmatpush1.msra.mxu0 0.0
    %4622 = vmatprep.subr.mxu0 0.0
    %4623 = vmatpush1.msra.mxu0 0.0
    %4624 = vmatprep.subr.mxu0 0.0
    %4625 = vmatpush1.msra.mxu0 0.0
    %4626 = vmatprep.subr.mxu0 0.0
    %4627 = vmatpush1.msra.mxu0 0.0
    %4628 = vmatprep.subr.mxu0 0.0
    %4629 = vmatpush1.msra.mxu0 0.0
    %4630 = vmatprep.subr.mxu0 0.0
    %4631 = vmatpush1.msra.mxu0 0.0
    %4632 = vmatprep.subr.mxu0 0.0
    %4633 = vmatpush1.msra.mxu0 0.0
    %4634 = vmatprep.subr.mxu0 0.0
    %4635 = vmatpush1.msra.mxu0 0.0
    %4636 = vmatprep.subr.mxu0 0.0
    %4637 = vmatpush1.msra.mxu0 0.0
    %4638 = vmatprep.subr.mxu0 0.0
    %4639 = vmatpush1.msra.mxu0 0.0
    %4640 = vmatprep.subr.mxu0 0.0
    %4641 = vmatpush1.msra.mxu0 0.0
    %4642 = vmatprep.subr.mxu0 0.0
    %4643 = vmatpush1.msra.mxu0 0.0
    %4644 = vmatprep.subr.mxu0 0.0
    %4645 = vmatpush1.msra.mxu0 0.0
    %4646 = vmatprep.subr.mxu0 0.0
    %4647 = vmatpush1.msra.mxu0 0.0
    %4648 = vmatprep.subr.mxu0 0.0
    %4649 = vmatpush1.msra.mxu0 0.0
    %4650 = vmatprep.subr.mxu0 0.0
    %4651 = vmatpush1.msra.mxu0 0.0
    %4652 = vmatprep.subr.mxu0 0.0
    %4653 = vmatpush1.msra.mxu0 0.0
    %4654 = vmatprep.subr.mxu0 0.0
    %4655 = vmatpush1.msra.mxu0 0.0
    %4656 = vmatprep.subr.mxu0 0.0
    %4657 = vmatpush1.msra.mxu0 0.0
    %4658 = vmatprep.subr.mxu0 0.0
    %4659 = vmatpush1.msra.mxu0 0.0
    %4660 = vmatprep.subr.mxu0 0.0
    %4661 = vmatpush1.msra.mxu0 0.0
    %4662 = vmatprep.mubr.f32.mxu0 0.0
    %4663 = vmatmul.mubr.f32.gmra.mrb[0].mxu0 %v2114
    %v4664 = vpop.f32.mrb[0].mxu0
    %v4665 = vadd.f32 0.0, %v4664
    %v4666 = vpop.f32.mrb[0].mxu0
    %v4667 = vadd.f32 0.0, %v4666
    %4668 = vdwg.mxu0
    %4669 = vmatprep.subr.mxu0 %v4525
    %4670 = vmatpush1.msra.mxu0 %v4522
    %4671 = vmatprep.subr.mxu0 0.0
    %4672 = vmatpush1.msra.mxu0 0.0
    %4673 = vmatprep.subr.mxu0 0.0
    %4674 = vmatpush1.msra.mxu0 0.0
    %4675 = vmatprep.subr.mxu0 0.0
    %4676 = vmatpush1.msra.mxu0 0.0
    %4677 = vmatprep.subr.mxu0 0.0
    %4678 = vmatpush1.msra.mxu0 0.0
    %4679 = vmatprep.subr.mxu0 0.0
    %4680 = vmatpush1.msra.mxu0 0.0
    %4681 = vmatprep.subr.mxu0 0.0
    %4682 = vmatpush1.msra.mxu0 0.0
    %4683 = vmatprep.subr.mxu0 0.0
    %4684 = vmatpush1.msra.mxu0 0.0
    %4685 = vmatprep.subr.mxu0 0.0
    %4686 = vmatpush1.msra.mxu0 0.0
    %4687 = vmatprep.subr.mxu0 0.0
    %4688 = vmatpush1.msra.mxu0 0.0
    %4689 = vmatprep.subr.mxu0 0.0
    %4690 = vmatpush1.msra.mxu0 0.0
    %4691 = vmatprep.subr.mxu0 0.0
    %4692 = vmatpush1.msra.mxu0 0.0
    %4693 = vmatprep.subr.mxu0 0.0
    %4694 = vmatpush1.msra.mxu0 0.0
    %4695 = vmatprep.subr.mxu0 0.0
    %4696 = vmatpush1.msra.mxu0 0.0
    %4697 = vmatprep.subr.mxu0 0.0
    %4698 = vmatpush1.msra.mxu0 0.0
    %4699 = vmatprep.subr.mxu0 0.0
    %4700 = vmatpush1.msra.mxu0 0.0
    %4701 = vmatprep.subr.mxu0 0.0
    %4702 = vmatpush1.msra.mxu0 0.0
    %4703 = vmatprep.subr.mxu0 0.0
    %4704 = vmatpush1.msra.mxu0 0.0
    %4705 = vmatprep.subr.mxu0 0.0
    %4706 = vmatpush1.msra.mxu0 0.0
    %4707 = vmatprep.subr.mxu0 0.0
    %4708 = vmatpush1.msra.mxu0 0.0
    %4709 = vmatprep.subr.mxu0 0.0
    %4710 = vmatpush1.msra.mxu0 0.0
    %4711 = vmatprep.subr.mxu0 0.0
    %4712 = vmatpush1.msra.mxu0 0.0
    %4713 = vmatprep.subr.mxu0 0.0
    %4714 = vmatpush1.msra.mxu0 0.0
    %4715 = vmatprep.subr.mxu0 0.0
    %4716 = vmatpush1.msra.mxu0 0.0
    %4717 = vmatprep.subr.mxu0 0.0
    %4718 = vmatpush1.msra.mxu0 0.0
    %4719 = vmatprep.subr.mxu0 0.0
    %4720 = vmatpush1.msra.mxu0 0.0
    %4721 = vmatprep.subr.mxu0 0.0
    %4722 = vmatpush1.msra.mxu0 0.0
    %4723 = vmatprep.subr.mxu0 0.0
    %4724 = vmatpush1.msra.mxu0 0.0
    %4725 = vmatprep.subr.mxu0 0.0
    %4726 = vmatpush1.msra.mxu0 0.0
    %4727 = vmatprep.subr.mxu0 0.0
    %4728 = vmatpush1.msra.mxu0 0.0
    %4729 = vmatprep.subr.mxu0 0.0
    %4730 = vmatpush1.msra.mxu0 0.0
    %4731 = vmatprep.subr.mxu0 0.0
    %4732 = vmatpush1.msra.mxu0 0.0
    %4733 = vmatprep.mubr.f32.mxu0 0.0
    %4734 = vmatmul.mubr.f32.gmra.mrb[0].mxu0 %v2114
    %v4735 = vpop.f32.mrb[0].mxu0
    %v4736 = vadd.f32 0.0, %v4735
    %v4737 = vpop.f32.mrb[0].mxu0
    %v4738 = vadd.f32 0.0, %v4737
    %4739 = vdwg.mxu0
    %v4740 = vadd.f32 %v4485, %v4594
    %v4741 = vadd.f32 %v4486, %v4596
    %v4742 = vadd.f32 %v4487, %v4665
    %v4743 = vadd.f32 %v4488, %v4667
    %v4744 = vadd.f32 %v4489, %v4736
    %v4745 = vadd.f32 %v4490, %v4738
    %v4746 = vmul.f32 %v4740, %v2357
    %v4747 = vmul.f32 %v4741, %v2361
    %v4748 = vmul.f32 %v4742, %v2365
    %v4749 = vmul.f32 %v4743, %v2369
    %v4750 = vmul.f32 %v4744, %v2373
    %v4751 = vmul.f32 %v4745, %v2377
    %v4752 = vsel %vm85, %v4746, 0.0
    %v4753 = vsel %vm85, %v4747, 0.0
    %v4754 = vadd.f32 %v4752, %v4753
    %v4755 = vsel %vm85, %v4748, 0.0
    %v4756 = vadd.f32 %v4754, %v4755
    %v4757 = vsel %vm85, %v4749, 0.0
    %v4758 = vadd.f32 %v4756, %v4757
    %v4759 = vsel %vm85, %v4750, 0.0
    %v4760 = vadd.f32 %v4758, %v4759
    %v4761 = vsel %vm85, %v4751, 0.0
    %v4762 = vadd.f32 %v4760, %v4761
    %4763 = vadd.xlane.f32.xlu0 %v4762
    %v4764 = vpop.xlane.xlu0 %4763
    %v4765 = vmul.f32 %v4764, 0.001953125
    %v4766 = vmul.f32 %v4746, %v4746
    %v4767 = vmul.f32 %v4747, %v4747
    %v4768 = vmul.f32 %v4748, %v4748
    %v4769 = vmul.f32 %v4749, %v4749
    %v4770 = vmul.f32 %v4750, %v4750
    %v4771 = vmul.f32 %v4751, %v4751
    %v4772 = vsel %vm85, %v4766, 0.0
    %v4773 = vsel %vm85, %v4767, 0.0
    %v4774 = vadd.f32 %v4772, %v4773
    %v4775 = vsel %vm85, %v4768, 0.0
    %v4776 = vadd.f32 %v4774, %v4775
    %v4777 = vsel %vm85, %v4769, 0.0
    %v4778 = vadd.f32 %v4776, %v4777
    %v4779 = vsel %vm85, %v4770, 0.0
    %v4780 = vadd.f32 %v4778, %v4779
    %v4781 = vsel %vm85, %v4771, 0.0
    %v4782 = vadd.f32 %v4780, %v4781
    %4783 = vadd.xlane.f32.xlu0 %v4782
    %v4784 = vpop.xlane.xlu0 %4783
    %v4785 = vmul.f32 %v4784, 0.001953125
    %v4786 = vmul.f32 %v4765, %v4765
    %v4787 = vsub.f32 %v4785, %v4786
    %v4788 = vadd.f32 %v4787, 0.8
    %v4789 = vrsqrt.pop %v4788
    %v4790 = vmul.f32 %v4789, %v2428
    %v4791 = vmul.f32 %v4765, %v4790
    %v4792 = vsub.f32 %v2430, %v4791
    %4794 = vset.pattern.permute.xlu0 0
    %4795 = vperm.xlu0 %4794, %v4790
    %v4796 = vpop.permute.xlu0 %4795
    %v4798 = vmul.f32 %v4746, %v4796
    %v4799 = vmul.f32 %v4747, %v4796
    %v4800 = vmul.f32 %v4748, %v4796
    %v4801 = vmul.f32 %v4749, %v4796
    %v4802 = vmul.f32 %v4750, %v4796
    %v4803 = vmul.f32 %v4751, %v4796
    %4805 = vset.pattern.permute.xlu0 0
    %4806 = vperm.xlu0 %4805, %v4792
    %v4807 = vpop.permute.xlu0 %4806
    %v4809 = vadd.f32 %v4798, %v4807
    %v4810 = vadd.f32 %v4799, %v4807
    %v4811 = vadd.f32 %v4800, %v4807
    %v4812 = vadd.f32 %v4801, %v4807
    %v4813 = vadd.f32 %v4802, %v4807
    %v4814 = vadd.f32 %v4803, %v4807
    %v4821 = vcombine.low %v4809, %v4810
    %v4822 = vcombine.low %v4811, %v4812
    %v4823 = vcombine.low %v4813, %v4814
    %v4827 = vadd.f32 %v26, %v4821
    %v4828 = vadd.f32 %v27, %v4822
    %v4829 = vadd.f32 %v28, %v4823
    %4830 = vst [vmem:[#allocation3] sm:$0xff] %v4827
    %4831 = vst [vmem:[#allocation3 + $0x8] sm:$0xff] %v4828
    %4832 = vst [vmem:[#allocation3 + $0x10] sm:$0xff] %v4829
    // Predicated region
    $region26: #{tpu_custom_call.1} parent=1 // pred_check
      _
    $region27: #{tpu_custom_call.1} parent=1 // pred_check_branch
      %4834 = sbr.rel (0) target = $region29
    $region28: #{tpu_custom_call.1} parent=1 // pred_region
      %s4836 = ssub.s32 384, 384
      %4837 = vsyncadd [#allocation4], %s4836
      %s4839 = sshll.u32 [#allocation3], 4
      %s4840 = int_to_ptr.vmem [resolvable:$true] %s4839
      %4842 = dma.vmem_to_hbm [thread:$0]  %s4840, 384, %s6, [#allocation4]
    $region29: #{tpu_custom_call.1} parent=1 // pred_fallthru
      _
    // Predicated region
    $region30: #{tpu_custom_call.1} parent=1 // pred_check
      _
    $region31: #{tpu_custom_call.1} parent=1 // pred_check_branch
      %4844 = sbr.rel (0) target = $region33
    $region32: #{tpu_custom_call.1} parent=1 // pred_region
      %4845 = dma.done [#allocation4], 384
    $region33: #{tpu_custom_call.1} parent=1 // pred_fallthru
      _
    %4846 = vsyncpa [#allocation4], 1

</llo_original>
